<compile_context>
chip_gen: v6e
topology: v6e:2x2x1
jax: 0.10.0
libtpu: 0.0.40
codegen_flags: <defaults>
</compile_context>

<pallas_src>
import functools

import jax
import jax.numpy as jnp
from jax.experimental import pallas as pl
from jax.experimental.pallas import tpu as pltpu

# ----------------------------- config ---------------------------------------
NUM_BLOCKS   = 2
D_MODEL      = 32
NUM_HEADS    = 4
VOCAB_SIZE   = 50
VOCAB_PAD    = 64          # vocab rows zero-padded to a sublane-friendly size
MAX_SEQ_LEN  = 8
D_FF         = 4 * D_MODEL
PAD_IDX      = 0
BATCH        = 2
LN_EPS       = 1e-5


# ----------------------------- Pallas kernel --------------------------------
def transformer_encoder_kernel(ids_ref, mask_ref, embpe_ref, wslab_ref, w2_ref,
                               out_ref, *, num_heads, num_blocks, vocab_pad,
                               batch, seq):
    """Whole-encoder fused kernel (embedding gather + PE add + all blocks).

    ids_ref   : (B*S, 1)  int32 token ids (flattened)
    mask_ref  : (1, S)    int32 attention mask (1 keep / 0 masked)
    embpe_ref : (Vp+B*S, D) rows [0:Vp) = emb_table * sqrt(D), rows [Vp:) = PE tiled over batch
    wslab_ref : (NB, D+4, DF+4D) packed per-block weights/biases
                rows 0:D  -> [ w1 (D,DF) | wqkv (D,3D) | wo (D,D) ]
                row  D    -> bf1 (DF)
                row  D+1  -> [ bqkv (3D) | bo (D) ]
                row  D+2  -> [ g1 | be1 | g2 | be2 ]
                row  D+3  -> [ bf2 ]
    w2_ref    : (NB, DF, D) second FFN weight
    out_ref   : (B*S, D)
    """
    BS = ids_ref.shape[0]
    B, S = batch, seq
    DF, D = w2_ref.shape[1], w2_ref.shape[2]
    H = num_heads
    dh = D // H
    scale = 1.0 / (dh ** 0.5)

    # --- in-kernel embedding gather via one-hot matmul (MXU) -----------------
    ids = ids_ref[...]                                           # (BS, 1) int32
    iota_v = jax.lax.broadcasted_iota(jnp.int32, (BS, vocab_pad), 1)
    onehot = (iota_v == ids).astype(jnp.float32)                 # (BS, Vp)
    emb = embpe_ref[0:vocab_pad, :]                              # (Vp, D), pre-scaled by sqrt(D)
    pe  = embpe_ref[vocab_pad:vocab_pad + BS, :]                 # (BS, D), pre-tiled over batch
    xf = jnp.dot(onehot, emb, preferred_element_type=jnp.float32) + pe   # (BS, D)

    # --- in-kernel additive key-padding bias (used by block 0 only) ----------
    mask_bias = jnp.where(mask_ref[...] == 0, -1e9, 0.0).astype(jnp.float32)  # (1, S)

    for lb in range(num_blocks):                                 # static unroll over blocks
        # static views into the packed per-block parameter slab (cheap slice loads)
        w1   = wslab_ref[lb, 0:D, 0:DF]                          # (D, DF)
        wqkv = wslab_ref[lb, 0:D, DF:DF + 3 * D]                 # (D, 3D)
        wo   = wslab_ref[lb, 0:D, DF + 3 * D:DF + 4 * D]         # (D, D)
        bf1  = wslab_ref[lb, D:D + 1, 0:DF]                      # (1, DF)
        bqkv = wslab_ref[lb, D + 1:D + 2, 0:3 * D]               # (1, 3D)
        bo   = wslab_ref[lb, D + 1:D + 2, 3 * D:4 * D]           # (1, D)
        g1   = wslab_ref[lb, D + 2:D + 3, 0:D]
        be1  = wslab_ref[lb, D + 2:D + 3, D:2 * D]
        g2   = wslab_ref[lb, D + 2:D + 3, 2 * D:3 * D]
        be2  = wslab_ref[lb, D + 2:D + 3, 3 * D:4 * D]
        bf2  = wslab_ref[lb, D + 3:D + 4, 0:D]
        w2   = w2_ref[lb]                                        # (DF, D)

        # --- multi-head self-attention: fused QKV projection ------------------
        qkv = jnp.dot(xf, wqkv, preferred_element_type=jnp.float32) + bqkv
        q = qkv[:, 0 * D:1 * D].reshape(B, S, D)
        k = qkv[:, 1 * D:2 * D].reshape(B, S, D)
        v = qkv[:, 2 * D:3 * D].reshape(B, S, D)

        # per-head attention with per-head Wo accumulation (no concat relayout)
        attn = jnp.zeros((BS, D), jnp.float32)
        for h in range(H):                                       # static unrolled head loop
            qh = q[..., h * dh:(h + 1) * dh]                     # (B, S, dh)
            kh = k[..., h * dh:(h + 1) * dh]
            vh = v[..., h * dh:(h + 1) * dh]
            s = jnp.einsum('bqd,bkd->bqk', qh, kh,
                           preferred_element_type=jnp.float32) * scale
            if lb == 0:                                          # only block 0 gets the mask
                s = s + mask_bias                                # broadcast over queries
            s = s - jnp.max(s, axis=-1, keepdims=True)           # stable softmax
            p = jnp.exp(s)
            p = p * pl.reciprocal(jnp.sum(p, axis=-1, keepdims=True), approx=True)
            ctx = jnp.einsum('bqk,bkd->bqd', p, vh,
                             preferred_element_type=jnp.float32)  # (B, S, dh)
            attn = attn + jnp.dot(ctx.reshape(BS, dh),
                                  wo[h * dh:(h + 1) * dh, :],
                                  preferred_element_type=jnp.float32)
        attn = attn + bo

        # --- residual + LayerNorm 1 -------------------------------------------
        y = xf + attn
        mu = jnp.mean(y, axis=-1, keepdims=True)
        var = jnp.mean((y - mu) ** 2, axis=-1, keepdims=True)
        y = (y - mu) * jax.lax.rsqrt(var + LN_EPS) * g1 + be1

        # --- position-wise feed-forward (ReLU) ---------------------------------
        hmid = jnp.maximum(jnp.dot(y, w1, preferred_element_type=jnp.float32) + bf1, 0.0)
        f = jnp.dot(hmid, w2, preferred_element_type=jnp.float32) + bf2

        # --- residual + LayerNorm 2 ---------------------------------------------
        z = y + f
        mu2 = jnp.mean(z, axis=-1, keepdims=True)
        var2 = jnp.mean((z - mu2) ** 2, axis=-1, keepdims=True)
        xf = (z - mu2) * jax.lax.rsqrt(var2 + LN_EPS) * g2 + be2

    out_ref[...] = xf


def _vmem_spec():
    return pl.BlockSpec(memory_space=pltpu.MemorySpace.VMEM)


@jax.jit
def transformer_encoder(token_ids, mask, embpe, wslab, w2):
    """Everything (embedding gather, PE add, both encoder blocks) is ONE gridless
    pallas_call; wrapper only does free metadata reshapes."""
    B, S = token_ids.shape
    ids = token_ids.reshape(B * S, 1).astype(jnp.int32)
    mask2 = mask.reshape(1, S).astype(jnp.int32)
    out = pl.pallas_call(
        functools.partial(transformer_encoder_kernel,
                          num_heads=NUM_HEADS, num_blocks=NUM_BLOCKS,
                          vocab_pad=VOCAB_PAD, batch=B, seq=S),
        out_shape=jax.ShapeDtypeStruct((B * S, D_MODEL), jnp.float32),
        in_specs=[_vmem_spec()] * 5,
        out_specs=_vmem_spec(),
    )(ids, mask2, embpe, wslab, w2)
    return out.reshape(B, S, D_MODEL)


# ----------------------------- glue (one-time packing, plain JAX) ------------
def sinusoidal_pe(max_len, d_model):
    pos = jnp.arange(max_len, dtype=jnp.float32)[:, None]
    i = jnp.arange(0, d_model, 2, dtype=jnp.float32)
    angle = pos / jnp.power(10000.0, i / d_model)
    pe = jnp.zeros((max_len, d_model), jnp.float32)
    pe = pe.at[:, 0::2].set(jnp.sin(angle))
    pe = pe.at[:, 1::2].set(jnp.cos(angle))
    return pe


def init_block_params(key, d_model, d_ff):
    ks = jax.random.split(key, 6)
    std = 0.02
    return {
        "wq": jax.random.normal(ks[0], (d_model, d_model), jnp.float32) * std,
        "bq": jnp.zeros((1, d_model), jnp.float32),
        "wk": jax.random.normal(ks[1], (d_model, d_model), jnp.float32) * std,
        "bk": jnp.zeros((1, d_model), jnp.float32),
        "wv": jax.random.normal(ks[2], (d_model, d_model), jnp.float32) * std,
        "bv": jnp.zeros((1, d_model), jnp.float32),
        "wo": jax.random.normal(ks[3], (d_model, d_model), jnp.float32) * std,
        "bo": jnp.zeros((1, d_model), jnp.float32),
        "g1": jnp.ones((1, d_model), jnp.float32),
        "be1": jnp.zeros((1, d_model), jnp.float32),
        "w1": jax.random.normal(ks[4], (d_model, d_ff), jnp.float32) * std,
        "bf1": jnp.zeros((1, d_ff), jnp.float32),
        "w2": jax.random.normal(ks[5], (d_ff, d_model), jnp.float32) * std,
        "bf2": jnp.zeros((1, d_model), jnp.float32),
        "g2": jnp.ones((1, d_model), jnp.float32),
        "be2": jnp.zeros((1, d_model), jnp.float32),
    }


def pack_params(block_params, emb_table, pe, batch):
    """One-time packing (done at init, outside the per-call path)."""
    D, DF = D_MODEL, D_FF
    # [scaled+padded embedding table ; batch-tiled positional encoding]
    emb_scaled = emb_table * jnp.sqrt(jnp.float32(D))          # fold sqrt(d_model) into table
    emb_pad = jnp.zeros((VOCAB_PAD, D), jnp.float32).at[:VOCAB_SIZE].set(emb_scaled)
    pe_tiled = jnp.tile(pe, (batch, 1))                        # (B*S, D)
    embpe = jnp.concatenate([emb_pad, pe_tiled], axis=0)       # (VOCAB_PAD + B*S, D)

    slabs = []
    for p in block_params:
        wqkv = jnp.concatenate([p["wq"], p["wk"], p["wv"]], axis=1)   # (D, 3D)
        bqkv = jnp.concatenate([p["bq"], p["bk"], p["bv"]], axis=1)   # (1, 3D)
        slab = jnp.zeros((D + 4, DF + 4 * D), jnp.float32)
        slab = slab.at[0:D, 0:DF].set(p["w1"])
        slab = slab.at[0:D, DF:DF + 3 * D].set(wqkv)
        slab = slab.at[0:D, DF + 3 * D:DF + 4 * D].set(p["wo"])
        slab = slab.at[D, 0:DF].set(p["bf1"][0])
        slab = slab.at[D + 1, 0:3 * D].set(bqkv[0])
        slab = slab.at[D + 1, 3 * D:4 * D].set(p["bo"][0])
        slab = slab.at[D + 2, 0:D].set(p["g1"][0])
        slab = slab.at[D + 2, D:2 * D].set(p["be1"][0])
        slab = slab.at[D + 2, 2 * D:3 * D].set(p["g2"][0])
        slab = slab.at[D + 2, 3 * D:4 * D].set(p["be2"][0])
        slab = slab.at[D + 3, 0:D].set(p["bf2"][0])
        slabs.append(slab)
    wslab = jnp.stack(slabs, axis=0)                           # (NB, D+4, DF+4D)
    w2 = jnp.stack([p["w2"] for p in block_params], axis=0)    # (NB, DF, D)
    return embpe, wslab, w2


# ----------------------------- main ------------------------------------------
if __name__ == "__main__":
    root = jax.random.PRNGKey(0)
    k_emb, k_tok, *k_blocks = jax.random.split(root, 2 + NUM_BLOCKS)

    # embedding table; pad_idx row is zeroed (nn.Embedding padding_idx semantics)
    emb_table = jax.random.normal(k_emb, (VOCAB_SIZE, D_MODEL), jnp.float32) * 0.02
    emb_table = emb_table.at[PAD_IDX].set(0.0)

    block_params = [init_block_params(k, D_MODEL, D_FF) for k in k_blocks]
    pe = sinusoidal_pe(MAX_SEQ_LEN, D_MODEL)
    embpe, wslab, w2 = pack_params(block_params, emb_table, pe, BATCH)

    token_ids = jax.random.randint(k_tok, (BATCH, MAX_SEQ_LEN), 1, VOCAB_SIZE)
    token_ids = token_ids.at[:, -2:].set(PAD_IDX)              # pad the tail
    mask = jnp.array([1, 1, 1, 1, 1, 1, 0, 0], jnp.int32)      # attention mask, size S

    out = transformer_encoder(token_ids, mask, embpe, wslab, w2)
    out = jax.block_until_ready(out)

    assert out.shape == (BATCH, MAX_SEQ_LEN, D_MODEL)
    assert bool(jnp.all(jnp.isfinite(out)))
    # TODO(synk): original EncoderBlock/InputEmbedding source not provided; standard
    # post-LN paper block assumed (d_ff=4*d_model, ReLU, sqrt(d_model) embed scale),
    # dropout omitted (eval mode). Mask is applied only in block 0, exactly as the
    # provided TransformerEncoder.forward does.
    print("KERNEL_OK")
</pallas_src>

<mosaic_0001>
module attributes {stable_mosaic.version = 11 : i64} {
  func.func @transformer_encoder_kernel(%arg0: memref<16x1xi32, #tpu.memory_space<vmem>>, %arg1: memref<1x8xi32, #tpu.memory_space<vmem>>, %arg2: memref<80x32xf32, #tpu.memory_space<vmem>>, %arg3: memref<2x36x256xf32, #tpu.memory_space<vmem>>, %arg4: memref<2x128x32xf32, #tpu.memory_space<vmem>>, %arg5: memref<16x32xf32, #tpu.memory_space<vmem>>) attributes {dimension_semantics = [], scalar_prefetch = 0 : i64, scratch_operands = 0 : i64, tpu.core_type = #tpu.core_type<tc>} {
    %c0 = arith.constant 0 : index
    %c0_0 = arith.constant 0 : index
    %0 = vector.load %arg0[%c0, %c0_0] : memref<16x1xi32, #tpu.memory_space<vmem>>, vector<16x1xi32>
    %1 = tpu.iota {dimensions = array<i32: 1>} : vector<16x64xi32>
    %2 = vector.broadcast %0 : vector<16x1xi32> to vector<16x64xi32>
    %3 = arith.cmpi eq, %1, %2 : vector<16x64xi32>
    %4 = arith.extui %3 : vector<16x64xi1> to vector<16x64xi32>
    %5 = arith.sitofp %4 : vector<16x64xi32> to vector<16x64xf32>
    %c0_1 = arith.constant 0 : index
    %c0_2 = arith.constant 0 : index
    %6 = vector.load %arg2[%c0_1, %c0_2] : memref<80x32xf32, #tpu.memory_space<vmem>>, vector<64x32xf32>
    %c64 = arith.constant 64 : index
    %c0_3 = arith.constant 0 : index
    %7 = vector.load %arg2[%c64, %c0_3] : memref<80x32xf32, #tpu.memory_space<vmem>>, vector<16x32xf32>
    %cst = arith.constant dense<0.000000e+00> : vector<16x32xf32>
    %8 = tpu.matmul %5, %6, %cst {dimension_numbers = #tpu.dot_dimension_numbers<[1], [0], [0], [1], [0, 0, 1, 1], [], []>} : vector<16x64xf32>, vector<64x32xf32>, vector<16x32xf32> -> vector<16x32xf32>
    %9 = arith.addf %8, %7 : vector<16x32xf32>
    %c0_4 = arith.constant 0 : index
    %c0_5 = arith.constant 0 : index
    %10 = vector.load %arg1[%c0_4, %c0_5] : memref<1x8xi32, #tpu.memory_space<vmem>>, vector<1x8xi32>
    %c0_i32 = arith.constant 0 : i32
    %11 = vector.broadcast %c0_i32 : i32 to vector<1x8xi32>
    %12 = arith.cmpi eq, %10, %11 : vector<1x8xi32>
    %cst_6 = arith.constant -1.000000e+09 : f32
    %cst_7 = arith.constant 0.000000e+00 : f32
    %13 = vector.broadcast %cst_6 : f32 to vector<1x8xf32>
    %14 = vector.broadcast %cst_7 : f32 to vector<1x8xf32>
    %15 = arith.select %12, %13, %14 : vector<1x8xi1>, vector<1x8xf32>
    %c0_8 = arith.constant 0 : index
    %c0_9 = arith.constant 0 : index
    %c0_10 = arith.constant 0 : index
    %16 = vector.load %arg3[%c0_8, %c0_9, %c0_10] : memref<2x36x256xf32, #tpu.memory_space<vmem>>, vector<1x32x128xf32>
    %17 = vector.shape_cast %16 : vector<1x32x128xf32> to vector<32x128xf32>
    %c0_11 = arith.constant 0 : index
    %c0_12 = arith.constant 0 : index
    %c128 = arith.constant 128 : index
    %18 = vector.load %arg3[%c0_11, %c0_12, %c128] : memref<2x36x256xf32, #tpu.memory_space<vmem>>, vector<1x32x96xf32>
    %19 = vector.shape_cast %18 : vector<1x32x96xf32> to vector<32x96xf32>
    %c0_13 = arith.constant 0 : index
    %c0_14 = arith.constant 0 : index
    %c224 = arith.constant 224 : index
    %20 = vector.load %arg3[%c0_13, %c0_14, %c224] : memref<2x36x256xf32, #tpu.memory_space<vmem>>, vector<1x32x32xf32>
    %21 = vector.shape_cast %20 : vector<1x32x32xf32> to vector<32x32xf32>
    %c0_15 = arith.constant 0 : index
    %c32 = arith.constant 32 : index
    %c0_16 = arith.constant 0 : index
    %22 = vector.load %arg3[%c0_15, %c32, %c0_16] : memref<2x36x256xf32, #tpu.memory_space<vmem>>, vector<1x1x128xf32>
    %23 = vector.shape_cast %22 : vector<1x1x128xf32> to vector<1x128xf32>
    %c0_17 = arith.constant 0 : index
    %c33 = arith.constant 33 : index
    %c0_18 = arith.constant 0 : index
    %24 = vector.load %arg3[%c0_17, %c33, %c0_18] : memref<2x36x256xf32, #tpu.memory_space<vmem>>, vector<1x1x96xf32>
    %25 = vector.shape_cast %24 : vector<1x1x96xf32> to vector<1x96xf32>
    %c0_19 = arith.constant 0 : index
    %c33_20 = arith.constant 33 : index
    %c96 = arith.constant 96 : index
    %26 = vector.load %arg3[%c0_19, %c33_20, %c96] : memref<2x36x256xf32, #tpu.memory_space<vmem>>, vector<1x1x32xf32>
    %27 = vector.shape_cast %26 : vector<1x1x32xf32> to vector<1x32xf32>
    %c0_21 = arith.constant 0 : index
    %c34 = arith.constant 34 : index
    %c0_22 = arith.constant 0 : index
    %28 = vector.load %arg3[%c0_21, %c34, %c0_22] : memref<2x36x256xf32, #tpu.memory_space<vmem>>, vector<1x1x32xf32>
    %29 = vector.shape_cast %28 : vector<1x1x32xf32> to vector<1x32xf32>
    %c0_23 = arith.constant 0 : index
    %c34_24 = arith.constant 34 : index
    %c32_25 = arith.constant 32 : index
    %30 = vector.load %arg3[%c0_23, %c34_24, %c32_25] : memref<2x36x256xf32, #tpu.memory_space<vmem>>, vector<1x1x32xf32>
    %31 = vector.shape_cast %30 : vector<1x1x32xf32> to vector<1x32xf32>
    %c0_26 = arith.constant 0 : index
    %c34_27 = arith.constant 34 : index
    %c64_28 = arith.constant 64 : index
    %32 = vector.load %arg3[%c0_26, %c34_27, %c64_28] : memref<2x36x256xf32, #tpu.memory_space<vmem>>, vector<1x1x32xf32>
    %33 = vector.shape_cast %32 : vector<1x1x32xf32> to vector<1x32xf32>
    %c0_29 = arith.constant 0 : index
    %c34_30 = arith.constant 34 : index
    %c96_31 = arith.constant 96 : index
    %34 = vector.load %arg3[%c0_29, %c34_30, %c96_31] : memref<2x36x256xf32, #tpu.memory_space<vmem>>, vector<1x1x32xf32>
    %35 = vector.shape_cast %34 : vector<1x1x32xf32> to vector<1x32xf32>
    %c0_32 = arith.constant 0 : index
    %c35 = arith.constant 35 : index
    %c0_33 = arith.constant 0 : index
    %36 = vector.load %arg3[%c0_32, %c35, %c0_33] : memref<2x36x256xf32, #tpu.memory_space<vmem>>, vector<1x1x32xf32>
    %37 = vector.shape_cast %36 : vector<1x1x32xf32> to vector<1x32xf32>
    %c0_34 = arith.constant 0 : index
    %c0_35 = arith.constant 0 : index
    %c0_36 = arith.constant 0 : index
    %38 = vector.load %arg4[%c0_34, %c0_35, %c0_36] : memref<2x128x32xf32, #tpu.memory_space<vmem>>, vector<1x128x32xf32>
    %39 = vector.shape_cast %38 : vector<1x128x32xf32> to vector<128x32xf32>
    %cst_37 = arith.constant dense<0.000000e+00> : vector<16x96xf32>
    %40 = tpu.matmul %9, %19, %cst_37 {dimension_numbers = #tpu.dot_dimension_numbers<[1], [0], [0], [1], [0, 0, 1, 1], [], []>} : vector<16x32xf32>, vector<32x96xf32>, vector<16x96xf32> -> vector<16x96xf32>
    %41 = vector.broadcast %25 : vector<1x96xf32> to vector<16x96xf32>
    %42 = arith.addf %40, %41 : vector<16x96xf32>
    %43 = vector.extract_strided_slice %42 {offsets = [0, 0], sizes = [16, 32], strides = [1, 1]} : vector<16x96xf32> to vector<16x32xf32>
    %44 = vector.shape_cast %43 : vector<16x32xf32> to vector<2x8x32xf32>
    %45 = vector.extract_strided_slice %42 {offsets = [0, 32], sizes = [16, 32], strides = [1, 1]} : vector<16x96xf32> to vector<16x32xf32>
    %46 = vector.shape_cast %45 : vector<16x32xf32> to vector<2x8x32xf32>
    %47 = vector.extract_strided_slice %42 {offsets = [0, 64], sizes = [16, 32], strides = [1, 1]} : vector<16x96xf32> to vector<16x32xf32>
    %48 = vector.shape_cast %47 : vector<16x32xf32> to vector<2x8x32xf32>
    %cst_38 = arith.constant 0.000000e+00 : f32
    %49 = vector.broadcast %cst_38 : f32 to vector<16x32xf32>
    %50 = vector.extract_strided_slice %44 {offsets = [0, 0, 0], sizes = [2, 8, 8], strides = [1, 1, 1]} : vector<2x8x32xf32> to vector<2x8x8xf32>
    %51 = vector.extract_strided_slice %46 {offsets = [0, 0, 0], sizes = [2, 8, 8], strides = [1, 1, 1]} : vector<2x8x32xf32> to vector<2x8x8xf32>
    %52 = vector.extract_strided_slice %48 {offsets = [0, 0, 0], sizes = [2, 8, 8], strides = [1, 1, 1]} : vector<2x8x32xf32> to vector<2x8x8xf32>
    "tpu.trace_start"() <{level = 10 : i32, message = "bqd,bkd->bqk"}> : () -> ()
    %cst_39 = arith.constant dense<0.000000e+00> : vector<2x8x8xf32>
    %53 = tpu.matmul %50, %51, %cst_39 {dimension_numbers = #tpu.dot_dimension_numbers<[2], [2], [1], [1], [0, 0, 0, 1, 1, 1], [0], [0]>} : vector<2x8x8xf32>, vector<2x8x8xf32>, vector<2x8x8xf32> -> vector<2x8x8xf32>
    "tpu.trace_stop"() : () -> ()
    %cst_40 = arith.constant 0.353553385 : f32
    %54 = vector.broadcast %cst_40 : f32 to vector<2x8x8xf32>
    %55 = arith.mulf %53, %54 : vector<2x8x8xf32>
    %56 = vector.shape_cast %15 : vector<1x8xf32> to vector<1x1x8xf32>
    %57 = vector.broadcast %56 : vector<1x1x8xf32> to vector<2x8x8xf32>
    %58 = arith.addf %55, %57 : vector<2x8x8xf32>
    %cst_41 = arith.constant dense<0xFF800000> : vector<2x8xf32>
    %59 = vector.multi_reduction <maximumf>, %58, %cst_41 [2] : vector<2x8x8xf32> to vector<2x8xf32>
    %60 = vector.shape_cast %59 : vector<2x8xf32> to vector<2x8x1xf32>
    %61 = vector.broadcast %60 : vector<2x8x1xf32> to vector<2x8x8xf32>
    %62 = arith.subf %58, %61 : vector<2x8x8xf32>
    %63 = math.exp %62 : vector<2x8x8xf32>
    %cst_42 = arith.constant dense<0.000000e+00> : vector<2x8xf32>
    %64 = vector.multi_reduction <add>, %63, %cst_42 [2] : vector<2x8x8xf32> to vector<2x8xf32>
    %65 = vector.shape_cast %64 : vector<2x8xf32> to vector<2x8x1xf32>
    %66 = tpu.reciprocal %65 {approx = true} : vector<2x8x1xf32> -> vector<2x8x1xf32>
    %67 = vector.broadcast %66 : vector<2x8x1xf32> to vector<2x8x8xf32>
    %68 = arith.mulf %63, %67 : vector<2x8x8xf32>
    "tpu.trace_start"() <{level = 10 : i32, message = "bqk,bkd->bqd"}> : () -> ()
    %cst_43 = arith.constant dense<0.000000e+00> : vector<2x8x8xf32>
    %69 = tpu.matmul %68, %52, %cst_43 {dimension_numbers = #tpu.dot_dimension_numbers<[2], [1], [1], [2], [0, 0, 0, 1, 1, 2], [0], [0]>} : vector<2x8x8xf32>, vector<2x8x8xf32>, vector<2x8x8xf32> -> vector<2x8x8xf32>
    "tpu.trace_stop"() : () -> ()
    %70 = vector.shape_cast %69 : vector<2x8x8xf32> to vector<16x8xf32>
    %71 = vector.extract_strided_slice %21 {offsets = [0, 0], sizes = [8, 32], strides = [1, 1]} : vector<32x32xf32> to vector<8x32xf32>
    %cst_44 = arith.constant dense<0.000000e+00> : vector<16x32xf32>
    %72 = tpu.matmul %70, %71, %cst_44 {dimension_numbers = #tpu.dot_dimension_numbers<[1], [0], [0], [1], [0, 0, 1, 1], [], []>} : vector<16x8xf32>, vector<8x32xf32>, vector<16x32xf32> -> vector<16x32xf32>
    %73 = arith.addf %49, %72 : vector<16x32xf32>
    %74 = vector.extract_strided_slice %44 {offsets = [0, 0, 8], sizes = [2, 8, 8], strides = [1, 1, 1]} : vector<2x8x32xf32> to vector<2x8x8xf32>
    %75 = vector.extract_strided_slice %46 {offsets = [0, 0, 8], sizes = [2, 8, 8], strides = [1, 1, 1]} : vector<2x8x32xf32> to vector<2x8x8xf32>
    %76 = vector.extract_strided_slice %48 {offsets = [0, 0, 8], sizes = [2, 8, 8], strides = [1, 1, 1]} : vector<2x8x32xf32> to vector<2x8x8xf32>
    "tpu.trace_start"() <{level = 10 : i32, message = "bqd,bkd->bqk"}> : () -> ()
    %cst_45 = arith.constant dense<0.000000e+00> : vector<2x8x8xf32>
    %77 = tpu.matmul %74, %75, %cst_45 {dimension_numbers = #tpu.dot_dimension_numbers<[2], [2], [1], [1], [0, 0, 0, 1, 1, 1], [0], [0]>} : vector<2x8x8xf32>, vector<2x8x8xf32>, vector<2x8x8xf32> -> vector<2x8x8xf32>
    "tpu.trace_stop"() : () -> ()
    %cst_46 = arith.constant 0.353553385 : f32
    %78 = vector.broadcast %cst_46 : f32 to vector<2x8x8xf32>
    %79 = arith.mulf %77, %78 : vector<2x8x8xf32>
    %80 = vector.shape_cast %15 : vector<1x8xf32> to vector<1x1x8xf32>
    %81 = vector.broadcast %80 : vector<1x1x8xf32> to vector<2x8x8xf32>
    %82 = arith.addf %79, %81 : vector<2x8x8xf32>
    %cst_47 = arith.constant dense<0xFF800000> : vector<2x8xf32>
    %83 = vector.multi_reduction <maximumf>, %82, %cst_47 [2] : vector<2x8x8xf32> to vector<2x8xf32>
    %84 = vector.shape_cast %83 : vector<2x8xf32> to vector<2x8x1xf32>
    %85 = vector.broadcast %84 : vector<2x8x1xf32> to vector<2x8x8xf32>
    %86 = arith.subf %82, %85 : vector<2x8x8xf32>
    %87 = math.exp %86 : vector<2x8x8xf32>
    %cst_48 = arith.constant dense<0.000000e+00> : vector<2x8xf32>
    %88 = vector.multi_reduction <add>, %87, %cst_48 [2] : vector<2x8x8xf32> to vector<2x8xf32>
    %89 = vector.shape_cast %88 : vector<2x8xf32> to vector<2x8x1xf32>
    %90 = tpu.reciprocal %89 {approx = true} : vector<2x8x1xf32> -> vector<2x8x1xf32>
    %91 = vector.broadcast %90 : vector<2x8x1xf32> to vector<2x8x8xf32>
    %92 = arith.mulf %87, %91 : vector<2x8x8xf32>
    "tpu.trace_start"() <{level = 10 : i32, message = "bqk,bkd->bqd"}> : () -> ()
    %cst_49 = arith.constant dense<0.000000e+00> : vector<2x8x8xf32>
    %93 = tpu.matmul %92, %76, %cst_49 {dimension_numbers = #tpu.dot_dimension_numbers<[2], [1], [1], [2], [0, 0, 0, 1, 1, 2], [0], [0]>} : vector<2x8x8xf32>, vector<2x8x8xf32>, vector<2x8x8xf32> -> vector<2x8x8xf32>
    "tpu.trace_stop"() : () -> ()
    %94 = vector.shape_cast %93 : vector<2x8x8xf32> to vector<16x8xf32>
    %95 = vector.extract_strided_slice %21 {offsets = [8, 0], sizes = [8, 32], strides = [1, 1]} : vector<32x32xf32> to vector<8x32xf32>
    %cst_50 = arith.constant dense<0.000000e+00> : vector<16x32xf32>
    %96 = tpu.matmul %94, %95, %cst_50 {dimension_numbers = #tpu.dot_dimension_numbers<[1], [0], [0], [1], [0, 0, 1, 1], [], []>} : vector<16x8xf32>, vector<8x32xf32>, vector<16x32xf32> -> vector<16x32xf32>
    %97 = arith.addf %73, %96 : vector<16x32xf32>
    %98 = vector.extract_strided_slice %44 {offsets = [0, 0, 16], sizes = [2, 8, 8], strides = [1, 1, 1]} : vector<2x8x32xf32> to vector<2x8x8xf32>
    %99 = vector.extract_strided_slice %46 {offsets = [0, 0, 16], sizes = [2, 8, 8], strides = [1, 1, 1]} : vector<2x8x32xf32> to vector<2x8x8xf32>
    %100 = vector.extract_strided_slice %48 {offsets = [0, 0, 16], sizes = [2, 8, 8], strides = [1, 1, 1]} : vector<2x8x32xf32> to vector<2x8x8xf32>
    "tpu.trace_start"() <{level = 10 : i32, message = "bqd,bkd->bqk"}> : () -> ()
    %cst_51 = arith.constant dense<0.000000e+00> : vector<2x8x8xf32>
    %101 = tpu.matmul %98, %99, %cst_51 {dimension_numbers = #tpu.dot_dimension_numbers<[2], [2], [1], [1], [0, 0, 0, 1, 1, 1], [0], [0]>} : vector<2x8x8xf32>, vector<2x8x8xf32>, vector<2x8x8xf32> -> vector<2x8x8xf32>
    "tpu.trace_stop"() : () -> ()
    %cst_52 = arith.constant 0.353553385 : f32
    %102 = vector.broadcast %cst_52 : f32 to vector<2x8x8xf32>
    %103 = arith.mulf %101, %102 : vector<2x8x8xf32>
    %104 = vector.shape_cast %15 : vector<1x8xf32> to vector<1x1x8xf32>
    %105 = vector.broadcast %104 : vector<1x1x8xf32> to vector<2x8x8xf32>
    %106 = arith.addf %103, %105 : vector<2x8x8xf32>
    %cst_53 = arith.constant dense<0xFF800000> : vector<2x8xf32>
    %107 = vector.multi_reduction <maximumf>, %106, %cst_53 [2] : vector<2x8x8xf32> to vector<2x8xf32>
    %108 = vector.shape_cast %107 : vector<2x8xf32> to vector<2x8x1xf32>
    %109 = vector.broadcast %108 : vector<2x8x1xf32> to vector<2x8x8xf32>
    %110 = arith.subf %106, %109 : vector<2x8x8xf32>
    %111 = math.exp %110 : vector<2x8x8xf32>
    %cst_54 = arith.constant dense<0.000000e+00> : vector<2x8xf32>
    %112 = vector.multi_reduction <add>, %111, %cst_54 [2] : vector<2x8x8xf32> to vector<2x8xf32>
    %113 = vector.shape_cast %112 : vector<2x8xf32> to vector<2x8x1xf32>
    %114 = tpu.reciprocal %113 {approx = true} : vector<2x8x1xf32> -> vector<2x8x1xf32>
    %115 = vector.broadcast %114 : vector<2x8x1xf32> to vector<2x8x8xf32>
    %116 = arith.mulf %111, %115 : vector<2x8x8xf32>
    "tpu.trace_start"() <{level = 10 : i32, message = "bqk,bkd->bqd"}> : () -> ()
    %cst_55 = arith.constant dense<0.000000e+00> : vector<2x8x8xf32>
    %117 = tpu.matmul %116, %100, %cst_55 {dimension_numbers = #tpu.dot_dimension_numbers<[2], [1], [1], [2], [0, 0, 0, 1, 1, 2], [0], [0]>} : vector<2x8x8xf32>, vector<2x8x8xf32>, vector<2x8x8xf32> -> vector<2x8x8xf32>
    "tpu.trace_stop"() : () -> ()
    %118 = vector.shape_cast %117 : vector<2x8x8xf32> to vector<16x8xf32>
    %119 = vector.extract_strided_slice %21 {offsets = [16, 0], sizes = [8, 32], strides = [1, 1]} : vector<32x32xf32> to vector<8x32xf32>
    %cst_56 = arith.constant dense<0.000000e+00> : vector<16x32xf32>
    %120 = tpu.matmul %118, %119, %cst_56 {dimension_numbers = #tpu.dot_dimension_numbers<[1], [0], [0], [1], [0, 0, 1, 1], [], []>} : vector<16x8xf32>, vector<8x32xf32>, vector<16x32xf32> -> vector<16x32xf32>
    %121 = arith.addf %97, %120 : vector<16x32xf32>
    %122 = vector.extract_strided_slice %44 {offsets = [0, 0, 24], sizes = [2, 8, 8], strides = [1, 1, 1]} : vector<2x8x32xf32> to vector<2x8x8xf32>
    %123 = vector.extract_strided_slice %46 {offsets = [0, 0, 24], sizes = [2, 8, 8], strides = [1, 1, 1]} : vector<2x8x32xf32> to vector<2x8x8xf32>
    %124 = vector.extract_strided_slice %48 {offsets = [0, 0, 24], sizes = [2, 8, 8], strides = [1, 1, 1]} : vector<2x8x32xf32> to vector<2x8x8xf32>
    "tpu.trace_start"() <{level = 10 : i32, message = "bqd,bkd->bqk"}> : () -> ()
    %cst_57 = arith.constant dense<0.000000e+00> : vector<2x8x8xf32>
    %125 = tpu.matmul %122, %123, %cst_57 {dimension_numbers = #tpu.dot_dimension_numbers<[2], [2], [1], [1], [0, 0, 0, 1, 1, 1], [0], [0]>} : vector<2x8x8xf32>, vector<2x8x8xf32>, vector<2x8x8xf32> -> vector<2x8x8xf32>
    "tpu.trace_stop"() : () -> ()
    %cst_58 = arith.constant 0.353553385 : f32
    %126 = vector.broadcast %cst_58 : f32 to vector<2x8x8xf32>
    %127 = arith.mulf %125, %126 : vector<2x8x8xf32>
    %128 = vector.shape_cast %15 : vector<1x8xf32> to vector<1x1x8xf32>
    %129 = vector.broadcast %128 : vector<1x1x8xf32> to vector<2x8x8xf32>
    %130 = arith.addf %127, %129 : vector<2x8x8xf32>
    %cst_59 = arith.constant dense<0xFF800000> : vector<2x8xf32>
    %131 = vector.multi_reduction <maximumf>, %130, %cst_59 [2] : vector<2x8x8xf32> to vector<2x8xf32>
    %132 = vector.shape_cast %131 : vector<2x8xf32> to vector<2x8x1xf32>
    %133 = vector.broadcast %132 : vector<2x8x1xf32> to vector<2x8x8xf32>
    %134 = arith.subf %130, %133 : vector<2x8x8xf32>
    %135 = math.exp %134 : vector<2x8x8xf32>
    %cst_60 = arith.constant dense<0.000000e+00> : vector<2x8xf32>
    %136 = vector.multi_reduction <add>, %135, %cst_60 [2] : vector<2x8x8xf32> to vector<2x8xf32>
    %137 = vector.shape_cast %136 : vector<2x8xf32> to vector<2x8x1xf32>
    %138 = tpu.reciprocal %137 {approx = true} : vector<2x8x1xf32> -> vector<2x8x1xf32>
    %139 = vector.broadcast %138 : vector<2x8x1xf32> to vector<2x8x8xf32>
    %140 = arith.mulf %135, %139 : vector<2x8x8xf32>
    "tpu.trace_start"() <{level = 10 : i32, message = "bqk,bkd->bqd"}> : () -> ()
    %cst_61 = arith.constant dense<0.000000e+00> : vector<2x8x8xf32>
    %141 = tpu.matmul %140, %124, %cst_61 {dimension_numbers = #tpu.dot_dimension_numbers<[2], [1], [1], [2], [0, 0, 0, 1, 1, 2], [0], [0]>} : vector<2x8x8xf32>, vector<2x8x8xf32>, vector<2x8x8xf32> -> vector<2x8x8xf32>
    "tpu.trace_stop"() : () -> ()
    %142 = vector.shape_cast %141 : vector<2x8x8xf32> to vector<16x8xf32>
    %143 = vector.extract_strided_slice %21 {offsets = [24, 0], sizes = [8, 32], strides = [1, 1]} : vector<32x32xf32> to vector<8x32xf32>
    %cst_62 = arith.constant dense<0.000000e+00> : vector<16x32xf32>
    %144 = tpu.matmul %142, %143, %cst_62 {dimension_numbers = #tpu.dot_dimension_numbers<[1], [0], [0], [1], [0, 0, 1, 1], [], []>} : vector<16x8xf32>, vector<8x32xf32>, vector<16x32xf32> -> vector<16x32xf32>
    %145 = arith.addf %121, %144 : vector<16x32xf32>
    %146 = vector.broadcast %27 : vector<1x32xf32> to vector<16x32xf32>
    %147 = arith.addf %145, %146 : vector<16x32xf32>
    %148 = arith.addf %9, %147 : vector<16x32xf32>
    %cst_63 = arith.constant dense<0.000000e+00> : vector<16xf32>
    %149 = vector.multi_reduction <add>, %148, %cst_63 [1] : vector<16x32xf32> to vector<16xf32>
    %150 = vector.shape_cast %149 : vector<16xf32> to vector<16x1xf32>
    %cst_64 = arith.constant 3.200000e+01 : f32
    %151 = vector.broadcast %cst_64 : f32 to vector<16x1xf32>
    %152 = arith.divf %150, %151 : vector<16x1xf32>
    %153 = vector.broadcast %152 : vector<16x1xf32> to vector<16x32xf32>
    %154 = arith.subf %148, %153 : vector<16x32xf32>
    %155 = arith.mulf %154, %154 : vector<16x32xf32>
    %cst_65 = arith.constant dense<0.000000e+00> : vector<16xf32>
    %156 = vector.multi_reduction <add>, %155, %cst_65 [1] : vector<16x32xf32> to vector<16xf32>
    %157 = vector.shape_cast %156 : vector<16xf32> to vector<16x1xf32>
    %cst_66 = arith.constant 3.200000e+01 : f32
    %158 = vector.broadcast %cst_66 : f32 to vector<16x1xf32>
    %159 = arith.divf %157, %158 : vector<16x1xf32>
    %160 = vector.broadcast %152 : vector<16x1xf32> to vector<16x32xf32>
    %161 = arith.subf %148, %160 : vector<16x32xf32>
    %cst_67 = arith.constant 9.99999974E-6 : f32
    %162 = vector.broadcast %cst_67 : f32 to vector<16x1xf32>
    %163 = arith.addf %159, %162 : vector<16x1xf32>
    %164 = math.rsqrt %163 : vector<16x1xf32>
    %165 = vector.broadcast %164 : vector<16x1xf32> to vector<16x32xf32>
    %166 = arith.mulf %161, %165 : vector<16x32xf32>
    %167 = vector.broadcast %29 : vector<1x32xf32> to vector<16x32xf32>
    %168 = arith.mulf %166, %167 : vector<16x32xf32>
    %169 = vector.broadcast %31 : vector<1x32xf32> to vector<16x32xf32>
    %170 = arith.addf %168, %169 : vector<16x32xf32>
    %cst_68 = arith.constant dense<0.000000e+00> : vector<16x128xf32>
    %171 = tpu.matmul %170, %17, %cst_68 {dimension_numbers = #tpu.dot_dimension_numbers<[1], [0], [0], [1], [0, 0, 1, 1], [], []>} : vector<16x32xf32>, vector<32x128xf32>, vector<16x128xf32> -> vector<16x128xf32>
    %172 = vector.broadcast %23 : vector<1x128xf32> to vector<16x128xf32>
    %173 = arith.addf %171, %172 : vector<16x128xf32>
    %cst_69 = arith.constant 0.000000e+00 : f32
    %174 = vector.broadcast %cst_69 : f32 to vector<16x128xf32>
    %175 = arith.maximumf %173, %174 : vector<16x128xf32>
    %cst_70 = arith.constant dense<0.000000e+00> : vector<16x32xf32>
    %176 = tpu.matmul %175, %39, %cst_70 {dimension_numbers = #tpu.dot_dimension_numbers<[1], [0], [0], [1], [0, 0, 1, 1], [], []>} : vector<16x128xf32>, vector<128x32xf32>, vector<16x32xf32> -> vector<16x32xf32>
    %177 = vector.broadcast %37 : vector<1x32xf32> to vector<16x32xf32>
    %178 = arith.addf %176, %177 : vector<16x32xf32>
    %179 = arith.addf %170, %178 : vector<16x32xf32>
    %cst_71 = arith.constant dense<0.000000e+00> : vector<16xf32>
    %180 = vector.multi_reduction <add>, %179, %cst_71 [1] : vector<16x32xf32> to vector<16xf32>
    %181 = vector.shape_cast %180 : vector<16xf32> to vector<16x1xf32>
    %cst_72 = arith.constant 3.200000e+01 : f32
    %182 = vector.broadcast %cst_72 : f32 to vector<16x1xf32>
    %183 = arith.divf %181, %182 : vector<16x1xf32>
    %184 = vector.broadcast %183 : vector<16x1xf32> to vector<16x32xf32>
    %185 = arith.subf %179, %184 : vector<16x32xf32>
    %186 = arith.mulf %185, %185 : vector<16x32xf32>
    %cst_73 = arith.constant dense<0.000000e+00> : vector<16xf32>
    %187 = vector.multi_reduction <add>, %186, %cst_73 [1] : vector<16x32xf32> to vector<16xf32>
    %188 = vector.shape_cast %187 : vector<16xf32> to vector<16x1xf32>
    %cst_74 = arith.constant 3.200000e+01 : f32
    %189 = vector.broadcast %cst_74 : f32 to vector<16x1xf32>
    %190 = arith.divf %188, %189 : vector<16x1xf32>
    %191 = vector.broadcast %183 : vector<16x1xf32> to vector<16x32xf32>
    %192 = arith.subf %179, %191 : vector<16x32xf32>
    %cst_75 = arith.constant 9.99999974E-6 : f32
    %193 = vector.broadcast %cst_75 : f32 to vector<16x1xf32>
    %194 = arith.addf %190, %193 : vector<16x1xf32>
    %195 = math.rsqrt %194 : vector<16x1xf32>
    %196 = vector.broadcast %195 : vector<16x1xf32> to vector<16x32xf32>
    %197 = arith.mulf %192, %196 : vector<16x32xf32>
    %198 = vector.broadcast %33 : vector<1x32xf32> to vector<16x32xf32>
    %199 = arith.mulf %197, %198 : vector<16x32xf32>
    %200 = vector.broadcast %35 : vector<1x32xf32> to vector<16x32xf32>
    %201 = arith.addf %199, %200 : vector<16x32xf32>
    %c1 = arith.constant 1 : index
    %c0_76 = arith.constant 0 : index
    %c0_77 = arith.constant 0 : index
    %202 = vector.load %arg3[%c1, %c0_76, %c0_77] : memref<2x36x256xf32, #tpu.memory_space<vmem>>, vector<1x32x128xf32>
    %203 = vector.shape_cast %202 : vector<1x32x128xf32> to vector<32x128xf32>
    %c1_78 = arith.constant 1 : index
    %c0_79 = arith.constant 0 : index
    %c128_80 = arith.constant 128 : index
    %204 = vector.load %arg3[%c1_78, %c0_79, %c128_80] : memref<2x36x256xf32, #tpu.memory_space<vmem>>, vector<1x32x96xf32>
    %205 = vector.shape_cast %204 : vector<1x32x96xf32> to vector<32x96xf32>
    %c1_81 = arith.constant 1 : index
    %c0_82 = arith.constant 0 : index
    %c224_83 = arith.constant 224 : index
    %206 = vector.load %arg3[%c1_81, %c0_82, %c224_83] : memref<2x36x256xf32, #tpu.memory_space<vmem>>, vector<1x32x32xf32>
    %207 = vector.shape_cast %206 : vector<1x32x32xf32> to vector<32x32xf32>
    %c1_84 = arith.constant 1 : index
    %c32_85 = arith.constant 32 : index
    %c0_86 = arith.constant 0 : index
    %208 = vector.load %arg3[%c1_84, %c32_85, %c0_86] : memref<2x36x256xf32, #tpu.memory_space<vmem>>, vector<1x1x128xf32>
    %209 = vector.shape_cast %208 : vector<1x1x128xf32> to vector<1x128xf32>
    %c1_87 = arith.constant 1 : index
    %c33_88 = arith.constant 33 : index
    %c0_89 = arith.constant 0 : index
    %210 = vector.load %arg3[%c1_87, %c33_88, %c0_89] : memref<2x36x256xf32, #tpu.memory_space<vmem>>, vector<1x1x96xf32>
    %211 = vector.shape_cast %210 : vector<1x1x96xf32> to vector<1x96xf32>
    %c1_90 = arith.constant 1 : index
    %c33_91 = arith.constant 33 : index
    %c96_92 = arith.constant 96 : index
    %212 = vector.load %arg3[%c1_90, %c33_91, %c96_92] : memref<2x36x256xf32, #tpu.memory_space<vmem>>, vector<1x1x32xf32>
    %213 = vector.shape_cast %212 : vector<1x1x32xf32> to vector<1x32xf32>
    %c1_93 = arith.constant 1 : index
    %c34_94 = arith.constant 34 : index
    %c0_95 = arith.constant 0 : index
    %214 = vector.load %arg3[%c1_93, %c34_94, %c0_95] : memref<2x36x256xf32, #tpu.memory_space<vmem>>, vector<1x1x32xf32>
    %215 = vector.shape_cast %214 : vector<1x1x32xf32> to vector<1x32xf32>
    %c1_96 = arith.constant 1 : index
    %c34_97 = arith.constant 34 : index
    %c32_98 = arith.constant 32 : index
    %216 = vector.load %arg3[%c1_96, %c34_97, %c32_98] : memref<2x36x256xf32, #tpu.memory_space<vmem>>, vector<1x1x32xf32>
    %217 = vector.shape_cast %216 : vector<1x1x32xf32> to vector<1x32xf32>
    %c1_99 = arith.constant 1 : index
    %c34_100 = arith.constant 34 : index
    %c64_101 = arith.constant 64 : index
    %218 = vector.load %arg3[%c1_99, %c34_100, %c64_101] : memref<2x36x256xf32, #tpu.memory_space<vmem>>, vector<1x1x32xf32>
    %219 = vector.shape_cast %218 : vector<1x1x32xf32> to vector<1x32xf32>
    %c1_102 = arith.constant 1 : index
    %c34_103 = arith.constant 34 : index
    %c96_104 = arith.constant 96 : index
    %220 = vector.load %arg3[%c1_102, %c34_103, %c96_104] : memref<2x36x256xf32, #tpu.memory_space<vmem>>, vector<1x1x32xf32>
    %221 = vector.shape_cast %220 : vector<1x1x32xf32> to vector<1x32xf32>
    %c1_105 = arith.constant 1 : index
    %c35_106 = arith.constant 35 : index
    %c0_107 = arith.constant 0 : index
    %222 = vector.load %arg3[%c1_105, %c35_106, %c0_107] : memref<2x36x256xf32, #tpu.memory_space<vmem>>, vector<1x1x32xf32>
    %223 = vector.shape_cast %222 : vector<1x1x32xf32> to vector<1x32xf32>
    %c1_108 = arith.constant 1 : index
    %c0_109 = arith.constant 0 : index
    %c0_110 = arith.constant 0 : index
    %224 = vector.load %arg4[%c1_108, %c0_109, %c0_110] : memref<2x128x32xf32, #tpu.memory_space<vmem>>, vector<1x128x32xf32>
    %225 = vector.shape_cast %224 : vector<1x128x32xf32> to vector<128x32xf32>
    %cst_111 = arith.constant dense<0.000000e+00> : vector<16x96xf32>
    %226 = tpu.matmul %201, %205, %cst_111 {dimension_numbers = #tpu.dot_dimension_numbers<[1], [0], [0], [1], [0, 0, 1, 1], [], []>} : vector<16x32xf32>, vector<32x96xf32>, vector<16x96xf32> -> vector<16x96xf32>
    %227 = vector.broadcast %211 : vector<1x96xf32> to vector<16x96xf32>
    %228 = arith.addf %226, %227 : vector<16x96xf32>
    %229 = vector.extract_strided_slice %228 {offsets = [0, 0], sizes = [16, 32], strides = [1, 1]} : vector<16x96xf32> to vector<16x32xf32>
    %230 = vector.shape_cast %229 : vector<16x32xf32> to vector<2x8x32xf32>
    %231 = vector.extract_strided_slice %228 {offsets = [0, 32], sizes = [16, 32], strides = [1, 1]} : vector<16x96xf32> to vector<16x32xf32>
    %232 = vector.shape_cast %231 : vector<16x32xf32> to vector<2x8x32xf32>
    %233 = vector.extract_strided_slice %228 {offsets = [0, 64], sizes = [16, 32], strides = [1, 1]} : vector<16x96xf32> to vector<16x32xf32>
    %234 = vector.shape_cast %233 : vector<16x32xf32> to vector<2x8x32xf32>
    %cst_112 = arith.constant 0.000000e+00 : f32
    %235 = vector.broadcast %cst_112 : f32 to vector<16x32xf32>
    %236 = vector.extract_strided_slice %230 {offsets = [0, 0, 0], sizes = [2, 8, 8], strides = [1, 1, 1]} : vector<2x8x32xf32> to vector<2x8x8xf32>
    %237 = vector.extract_strided_slice %232 {offsets = [0, 0, 0], sizes = [2, 8, 8], strides = [1, 1, 1]} : vector<2x8x32xf32> to vector<2x8x8xf32>
    %238 = vector.extract_strided_slice %234 {offsets = [0, 0, 0], sizes = [2, 8, 8], strides = [1, 1, 1]} : vector<2x8x32xf32> to vector<2x8x8xf32>
    "tpu.trace_start"() <{level = 10 : i32, message = "bqd,bkd->bqk"}> : () -> ()
    %cst_113 = arith.constant dense<0.000000e+00> : vector<2x8x8xf32>
    %239 = tpu.matmul %236, %237, %cst_113 {dimension_numbers = #tpu.dot_dimension_numbers<[2], [2], [1], [1], [0, 0, 0, 1, 1, 1], [0], [0]>} : vector<2x8x8xf32>, vector<2x8x8xf32>, vector<2x8x8xf32> -> vector<2x8x8xf32>
    "tpu.trace_stop"() : () -> ()
    %cst_114 = arith.constant 0.353553385 : f32
    %240 = vector.broadcast %cst_114 : f32 to vector<2x8x8xf32>
    %241 = arith.mulf %239, %240 : vector<2x8x8xf32>
    %cst_115 = arith.constant dense<0xFF800000> : vector<2x8xf32>
    %242 = vector.multi_reduction <maximumf>, %241, %cst_115 [2] : vector<2x8x8xf32> to vector<2x8xf32>
    %243 = vector.shape_cast %242 : vector<2x8xf32> to vector<2x8x1xf32>
    %244 = vector.broadcast %243 : vector<2x8x1xf32> to vector<2x8x8xf32>
    %245 = arith.subf %241, %244 : vector<2x8x8xf32>
    %246 = math.exp %245 : vector<2x8x8xf32>
    %cst_116 = arith.constant dense<0.000000e+00> : vector<2x8xf32>
    %247 = vector.multi_reduction <add>, %246, %cst_116 [2] : vector<2x8x8xf32> to vector<2x8xf32>
    %248 = vector.shape_cast %247 : vector<2x8xf32> to vector<2x8x1xf32>
    %249 = tpu.reciprocal %248 {approx = true} : vector<2x8x1xf32> -> vector<2x8x1xf32>
    %250 = vector.broadcast %249 : vector<2x8x1xf32> to vector<2x8x8xf32>
    %251 = arith.mulf %246, %250 : vector<2x8x8xf32>
    "tpu.trace_start"() <{level = 10 : i32, message = "bqk,bkd->bqd"}> : () -> ()
    %cst_117 = arith.constant dense<0.000000e+00> : vector<2x8x8xf32>
    %252 = tpu.matmul %251, %238, %cst_117 {dimension_numbers = #tpu.dot_dimension_numbers<[2], [1], [1], [2], [0, 0, 0, 1, 1, 2], [0], [0]>} : vector<2x8x8xf32>, vector<2x8x8xf32>, vector<2x8x8xf32> -> vector<2x8x8xf32>
    "tpu.trace_stop"() : () -> ()
    %253 = vector.shape_cast %252 : vector<2x8x8xf32> to vector<16x8xf32>
    %254 = vector.extract_strided_slice %207 {offsets = [0, 0], sizes = [8, 32], strides = [1, 1]} : vector<32x32xf32> to vector<8x32xf32>
    %cst_118 = arith.constant dense<0.000000e+00> : vector<16x32xf32>
    %255 = tpu.matmul %253, %254, %cst_118 {dimension_numbers = #tpu.dot_dimension_numbers<[1], [0], [0], [1], [0, 0, 1, 1], [], []>} : vector<16x8xf32>, vector<8x32xf32>, vector<16x32xf32> -> vector<16x32xf32>
    %256 = arith.addf %235, %255 : vector<16x32xf32>
    %257 = vector.extract_strided_slice %230 {offsets = [0, 0, 8], sizes = [2, 8, 8], strides = [1, 1, 1]} : vector<2x8x32xf32> to vector<2x8x8xf32>
    %258 = vector.extract_strided_slice %232 {offsets = [0, 0, 8], sizes = [2, 8, 8], strides = [1, 1, 1]} : vector<2x8x32xf32> to vector<2x8x8xf32>
    %259 = vector.extract_strided_slice %234 {offsets = [0, 0, 8], sizes = [2, 8, 8], strides = [1, 1, 1]} : vector<2x8x32xf32> to vector<2x8x8xf32>
    "tpu.trace_start"() <{level = 10 : i32, message = "bqd,bkd->bqk"}> : () -> ()
    %cst_119 = arith.constant dense<0.000000e+00> : vector<2x8x8xf32>
    %260 = tpu.matmul %257, %258, %cst_119 {dimension_numbers = #tpu.dot_dimension_numbers<[2], [2], [1], [1], [0, 0, 0, 1, 1, 1], [0], [0]>} : vector<2x8x8xf32>, vector<2x8x8xf32>, vector<2x8x8xf32> -> vector<2x8x8xf32>
    "tpu.trace_stop"() : () -> ()
    %cst_120 = arith.constant 0.353553385 : f32
    %261 = vector.broadcast %cst_120 : f32 to vector<2x8x8xf32>
    %262 = arith.mulf %260, %261 : vector<2x8x8xf32>
    %cst_121 = arith.constant dense<0xFF800000> : vector<2x8xf32>
    %263 = vector.multi_reduction <maximumf>, %262, %cst_121 [2] : vector<2x8x8xf32> to vector<2x8xf32>
    %264 = vector.shape_cast %263 : vector<2x8xf32> to vector<2x8x1xf32>
    %265 = vector.broadcast %264 : vector<2x8x1xf32> to vector<2x8x8xf32>
    %266 = arith.subf %262, %265 : vector<2x8x8xf32>
    %267 = math.exp %266 : vector<2x8x8xf32>
    %cst_122 = arith.constant dense<0.000000e+00> : vector<2x8xf32>
    %268 = vector.multi_reduction <add>, %267, %cst_122 [2] : vector<2x8x8xf32> to vector<2x8xf32>
    %269 = vector.shape_cast %268 : vector<2x8xf32> to vector<2x8x1xf32>
    %270 = tpu.reciprocal %269 {approx = true} : vector<2x8x1xf32> -> vector<2x8x1xf32>
    %271 = vector.broadcast %270 : vector<2x8x1xf32> to vector<2x8x8xf32>
    %272 = arith.mulf %267, %271 : vector<2x8x8xf32>
    "tpu.trace_start"() <{level = 10 : i32, message = "bqk,bkd->bqd"}> : () -> ()
    %cst_123 = arith.constant dense<0.000000e+00> : vector<2x8x8xf32>
    %273 = tpu.matmul %272, %259, %cst_123 {dimension_numbers = #tpu.dot_dimension_numbers<[2], [1], [1], [2], [0, 0, 0, 1, 1, 2], [0], [0]>} : vector<2x8x8xf32>, vector<2x8x8xf32>, vector<2x8x8xf32> -> vector<2x8x8xf32>
    "tpu.trace_stop"() : () -> ()
    %274 = vector.shape_cast %273 : vector<2x8x8xf32> to vector<16x8xf32>
    %275 = vector.extract_strided_slice %207 {offsets = [8, 0], sizes = [8, 32], strides = [1, 1]} : vector<32x32xf32> to vector<8x32xf32>
    %cst_124 = arith.constant dense<0.000000e+00> : vector<16x32xf32>
    %276 = tpu.matmul %274, %275, %cst_124 {dimension_numbers = #tpu.dot_dimension_numbers<[1], [0], [0], [1], [0, 0, 1, 1], [], []>} : vector<16x8xf32>, vector<8x32xf32>, vector<16x32xf32> -> vector<16x32xf32>
    %277 = arith.addf %256, %276 : vector<16x32xf32>
    %278 = vector.extract_strided_slice %230 {offsets = [0, 0, 16], sizes = [2, 8, 8], strides = [1, 1, 1]} : vector<2x8x32xf32> to vector<2x8x8xf32>
    %279 = vector.extract_strided_slice %232 {offsets = [0, 0, 16], sizes = [2, 8, 8], strides = [1, 1, 1]} : vector<2x8x32xf32> to vector<2x8x8xf32>
    %280 = vector.extract_strided_slice %234 {offsets = [0, 0, 16], sizes = [2, 8, 8], strides = [1, 1, 1]} : vector<2x8x32xf32> to vector<2x8x8xf32>
    "tpu.trace_start"() <{level = 10 : i32, message = "bqd,bkd->bqk"}> : () -> ()
    %cst_125 = arith.constant dense<0.000000e+00> : vector<2x8x8xf32>
    %281 = tpu.matmul %278, %279, %cst_125 {dimension_numbers = #tpu.dot_dimension_numbers<[2], [2], [1], [1], [0, 0, 0, 1, 1, 1], [0], [0]>} : vector<2x8x8xf32>, vector<2x8x8xf32>, vector<2x8x8xf32> -> vector<2x8x8xf32>
    "tpu.trace_stop"() : () -> ()
    %cst_126 = arith.constant 0.353553385 : f32
    %282 = vector.broadcast %cst_126 : f32 to vector<2x8x8xf32>
    %283 = arith.mulf %281, %282 : vector<2x8x8xf32>
    %cst_127 = arith.constant dense<0xFF800000> : vector<2x8xf32>
    %284 = vector.multi_reduction <maximumf>, %283, %cst_127 [2] : vector<2x8x8xf32> to vector<2x8xf32>
    %285 = vector.shape_cast %284 : vector<2x8xf32> to vector<2x8x1xf32>
    %286 = vector.broadcast %285 : vector<2x8x1xf32> to vector<2x8x8xf32>
    %287 = arith.subf %283, %286 : vector<2x8x8xf32>
    %288 = math.exp %287 : vector<2x8x8xf32>
    %cst_128 = arith.constant dense<0.000000e+00> : vector<2x8xf32>
    %289 = vector.multi_reduction <add>, %288, %cst_128 [2] : vector<2x8x8xf32> to vector<2x8xf32>
    %290 = vector.shape_cast %289 : vector<2x8xf32> to vector<2x8x1xf32>
    %291 = tpu.reciprocal %290 {approx = true} : vector<2x8x1xf32> -> vector<2x8x1xf32>
    %292 = vector.broadcast %291 : vector<2x8x1xf32> to vector<2x8x8xf32>
    %293 = arith.mulf %288, %292 : vector<2x8x8xf32>
    "tpu.trace_start"() <{level = 10 : i32, message = "bqk,bkd->bqd"}> : () -> ()
    %cst_129 = arith.constant dense<0.000000e+00> : vector<2x8x8xf32>
    %294 = tpu.matmul %293, %280, %cst_129 {dimension_numbers = #tpu.dot_dimension_numbers<[2], [1], [1], [2], [0, 0, 0, 1, 1, 2], [0], [0]>} : vector<2x8x8xf32>, vector<2x8x8xf32>, vector<2x8x8xf32> -> vector<2x8x8xf32>
    "tpu.trace_stop"() : () -> ()
    %295 = vector.shape_cast %294 : vector<2x8x8xf32> to vector<16x8xf32>
    %296 = vector.extract_strided_slice %207 {offsets = [16, 0], sizes = [8, 32], strides = [1, 1]} : vector<32x32xf32> to vector<8x32xf32>
    %cst_130 = arith.constant dense<0.000000e+00> : vector<16x32xf32>
    %297 = tpu.matmul %295, %296, %cst_130 {dimension_numbers = #tpu.dot_dimension_numbers<[1], [0], [0], [1], [0, 0, 1, 1], [], []>} : vector<16x8xf32>, vector<8x32xf32>, vector<16x32xf32> -> vector<16x32xf32>
    %298 = arith.addf %277, %297 : vector<16x32xf32>
    %299 = vector.extract_strided_slice %230 {offsets = [0, 0, 24], sizes = [2, 8, 8], strides = [1, 1, 1]} : vector<2x8x32xf32> to vector<2x8x8xf32>
    %300 = vector.extract_strided_slice %232 {offsets = [0, 0, 24], sizes = [2, 8, 8], strides = [1, 1, 1]} : vector<2x8x32xf32> to vector<2x8x8xf32>
    %301 = vector.extract_strided_slice %234 {offsets = [0, 0, 24], sizes = [2, 8, 8], strides = [1, 1, 1]} : vector<2x8x32xf32> to vector<2x8x8xf32>
    "tpu.trace_start"() <{level = 10 : i32, message = "bqd,bkd->bqk"}> : () -> ()
    %cst_131 = arith.constant dense<0.000000e+00> : vector<2x8x8xf32>
    %302 = tpu.matmul %299, %300, %cst_131 {dimension_numbers = #tpu.dot_dimension_numbers<[2], [2], [1], [1], [0, 0, 0, 1, 1, 1], [0], [0]>} : vector<2x8x8xf32>, vector<2x8x8xf32>, vector<2x8x8xf32> -> vector<2x8x8xf32>
    "tpu.trace_stop"() : () -> ()
    %cst_132 = arith.constant 0.353553385 : f32
    %303 = vector.broadcast %cst_132 : f32 to vector<2x8x8xf32>
    %304 = arith.mulf %302, %303 : vector<2x8x8xf32>
    %cst_133 = arith.constant dense<0xFF800000> : vector<2x8xf32>
    %305 = vector.multi_reduction <maximumf>, %304, %cst_133 [2] : vector<2x8x8xf32> to vector<2x8xf32>
    %306 = vector.shape_cast %305 : vector<2x8xf32> to vector<2x8x1xf32>
    %307 = vector.broadcast %306 : vector<2x8x1xf32> to vector<2x8x8xf32>
    %308 = arith.subf %304, %307 : vector<2x8x8xf32>
    %309 = math.exp %308 : vector<2x8x8xf32>
    %cst_134 = arith.constant dense<0.000000e+00> : vector<2x8xf32>
    %310 = vector.multi_reduction <add>, %309, %cst_134 [2] : vector<2x8x8xf32> to vector<2x8xf32>
    %311 = vector.shape_cast %310 : vector<2x8xf32> to vector<2x8x1xf32>
    %312 = tpu.reciprocal %311 {approx = true} : vector<2x8x1xf32> -> vector<2x8x1xf32>
    %313 = vector.broadcast %312 : vector<2x8x1xf32> to vector<2x8x8xf32>
    %314 = arith.mulf %309, %313 : vector<2x8x8xf32>
    "tpu.trace_start"() <{level = 10 : i32, message = "bqk,bkd->bqd"}> : () -> ()
    %cst_135 = arith.constant dense<0.000000e+00> : vector<2x8x8xf32>
    %315 = tpu.matmul %314, %301, %cst_135 {dimension_numbers = #tpu.dot_dimension_numbers<[2], [1], [1], [2], [0, 0, 0, 1, 1, 2], [0], [0]>} : vector<2x8x8xf32>, vector<2x8x8xf32>, vector<2x8x8xf32> -> vector<2x8x8xf32>
    "tpu.trace_stop"() : () -> ()
    %316 = vector.shape_cast %315 : vector<2x8x8xf32> to vector<16x8xf32>
    %317 = vector.extract_strided_slice %207 {offsets = [24, 0], sizes = [8, 32], strides = [1, 1]} : vector<32x32xf32> to vector<8x32xf32>
    %cst_136 = arith.constant dense<0.000000e+00> : vector<16x32xf32>
    %318 = tpu.matmul %316, %317, %cst_136 {dimension_numbers = #tpu.dot_dimension_numbers<[1], [0], [0], [1], [0, 0, 1, 1], [], []>} : vector<16x8xf32>, vector<8x32xf32>, vector<16x32xf32> -> vector<16x32xf32>
    %319 = arith.addf %298, %318 : vector<16x32xf32>
    %320 = vector.broadcast %213 : vector<1x32xf32> to vector<16x32xf32>
    %321 = arith.addf %319, %320 : vector<16x32xf32>
    %322 = arith.addf %201, %321 : vector<16x32xf32>
    %cst_137 = arith.constant dense<0.000000e+00> : vector<16xf32>
    %323 = vector.multi_reduction <add>, %322, %cst_137 [1] : vector<16x32xf32> to vector<16xf32>
    %324 = vector.shape_cast %323 : vector<16xf32> to vector<16x1xf32>
    %cst_138 = arith.constant 3.200000e+01 : f32
    %325 = vector.broadcast %cst_138 : f32 to vector<16x1xf32>
    %326 = arith.divf %324, %325 : vector<16x1xf32>
    %327 = vector.broadcast %326 : vector<16x1xf32> to vector<16x32xf32>
    %328 = arith.subf %322, %327 : vector<16x32xf32>
    %329 = arith.mulf %328, %328 : vector<16x32xf32>
    %cst_139 = arith.constant dense<0.000000e+00> : vector<16xf32>
    %330 = vector.multi_reduction <add>, %329, %cst_139 [1] : vector<16x32xf32> to vector<16xf32>
    %331 = vector.shape_cast %330 : vector<16xf32> to vector<16x1xf32>
    %cst_140 = arith.constant 3.200000e+01 : f32
    %332 = vector.broadcast %cst_140 : f32 to vector<16x1xf32>
    %333 = arith.divf %331, %332 : vector<16x1xf32>
    %334 = vector.broadcast %326 : vector<16x1xf32> to vector<16x32xf32>
    %335 = arith.subf %322, %334 : vector<16x32xf32>
    %cst_141 = arith.constant 9.99999974E-6 : f32
    %336 = vector.broadcast %cst_141 : f32 to vector<16x1xf32>
    %337 = arith.addf %333, %336 : vector<16x1xf32>
    %338 = math.rsqrt %337 : vector<16x1xf32>
    %339 = vector.broadcast %338 : vector<16x1xf32> to vector<16x32xf32>
    %340 = arith.mulf %335, %339 : vector<16x32xf32>
    %341 = vector.broadcast %215 : vector<1x32xf32> to vector<16x32xf32>
    %342 = arith.mulf %340, %341 : vector<16x32xf32>
    %343 = vector.broadcast %217 : vector<1x32xf32> to vector<16x32xf32>
    %344 = arith.addf %342, %343 : vector<16x32xf32>
    %cst_142 = arith.constant dense<0.000000e+00> : vector<16x128xf32>
    %345 = tpu.matmul %344, %203, %cst_142 {dimension_numbers = #tpu.dot_dimension_numbers<[1], [0], [0], [1], [0, 0, 1, 1], [], []>} : vector<16x32xf32>, vector<32x128xf32>, vector<16x128xf32> -> vector<16x128xf32>
    %346 = vector.broadcast %209 : vector<1x128xf32> to vector<16x128xf32>
    %347 = arith.addf %345, %346 : vector<16x128xf32>
    %cst_143 = arith.constant 0.000000e+00 : f32
    %348 = vector.broadcast %cst_143 : f32 to vector<16x128xf32>
    %349 = arith.maximumf %347, %348 : vector<16x128xf32>
    %cst_144 = arith.constant dense<0.000000e+00> : vector<16x32xf32>
    %350 = tpu.matmul %349, %225, %cst_144 {dimension_numbers = #tpu.dot_dimension_numbers<[1], [0], [0], [1], [0, 0, 1, 1], [], []>} : vector<16x128xf32>, vector<128x32xf32>, vector<16x32xf32> -> vector<16x32xf32>
    %351 = vector.broadcast %223 : vector<1x32xf32> to vector<16x32xf32>
    %352 = arith.addf %350, %351 : vector<16x32xf32>
    %353 = arith.addf %344, %352 : vector<16x32xf32>
    %cst_145 = arith.constant dense<0.000000e+00> : vector<16xf32>
    %354 = vector.multi_reduction <add>, %353, %cst_145 [1] : vector<16x32xf32> to vector<16xf32>
    %355 = vector.shape_cast %354 : vector<16xf32> to vector<16x1xf32>
    %cst_146 = arith.constant 3.200000e+01 : f32
    %356 = vector.broadcast %cst_146 : f32 to vector<16x1xf32>
    %357 = arith.divf %355, %356 : vector<16x1xf32>
    %358 = vector.broadcast %357 : vector<16x1xf32> to vector<16x32xf32>
    %359 = arith.subf %353, %358 : vector<16x32xf32>
    %360 = arith.mulf %359, %359 : vector<16x32xf32>
    %cst_147 = arith.constant dense<0.000000e+00> : vector<16xf32>
    %361 = vector.multi_reduction <add>, %360, %cst_147 [1] : vector<16x32xf32> to vector<16xf32>
    %362 = vector.shape_cast %361 : vector<16xf32> to vector<16x1xf32>
    %cst_148 = arith.constant 3.200000e+01 : f32
    %363 = vector.broadcast %cst_148 : f32 to vector<16x1xf32>
    %364 = arith.divf %362, %363 : vector<16x1xf32>
    %365 = vector.broadcast %357 : vector<16x1xf32> to vector<16x32xf32>
    %366 = arith.subf %353, %365 : vector<16x32xf32>
    %cst_149 = arith.constant 9.99999974E-6 : f32
    %367 = vector.broadcast %cst_149 : f32 to vector<16x1xf32>
    %368 = arith.addf %364, %367 : vector<16x1xf32>
    %369 = math.rsqrt %368 : vector<16x1xf32>
    %370 = vector.broadcast %369 : vector<16x1xf32> to vector<16x32xf32>
    %371 = arith.mulf %366, %370 : vector<16x32xf32>
    %372 = vector.broadcast %219 : vector<1x32xf32> to vector<16x32xf32>
    %373 = arith.mulf %371, %372 : vector<16x32xf32>
    %374 = vector.broadcast %221 : vector<1x32xf32> to vector<16x32xf32>
    %375 = arith.addf %373, %374 : vector<16x32xf32>
    %c0_150 = arith.constant 0 : index
    %c0_151 = arith.constant 0 : index
    %376 = vector.load %arg5[%c0_150, %c0_151] : memref<16x32xf32, #tpu.memory_space<vmem>>, vector<16x32xf32>
    tpu.vector_store %arg5[%c0_150, %c0_151], %375 {strides = array<i32>} : memref<16x32xf32, #tpu.memory_space<vmem>>, vector<16x32xf32>,
    return
  }
}

</mosaic_0001>

<llo_original>
// kernel: transformer_encoder.1
$region0: #{transformer_encoder.1}
  #allocation0 [shape = 'u32[]', space=smem, size = 0x4, offset = 0x4, fixed_abs, tag = 'smem constant byte address 0x4 - core index']
  #allocation1 [shape = 'u32[144,128]{1,0:T(1,128)}', space=vmem, size = 0x12000, scoped, tag = 'internal scratch']
  %s0 = inlined_call_operand.vmem [shape: s32[16,1], index: 0, kind: input, shape index: {}]
  %s1 = inlined_call_operand.vmem [shape: s32[1,8], index: 1, kind: input, shape index: {}]
  %s2 = inlined_call_operand.vmem [shape: f32[80,32], index: 2, kind: input, shape index: {}]
  %s3 = inlined_call_operand.vmem [shape: f32[2,36,256], index: 3, kind: input, shape index: {}]
  %s4 = inlined_call_operand.vmem [shape: f32[2,128,32], index: 4, kind: input, shape index: {}]
  %s5 = inlined_call_operand.hbm [shape: f32[16,32], index: 5, kind: output, shape index: {}]
  %s6 = sld [smem:[#allocation0]]
  $region30: #{transformer_encoder.1} parent=0
    _
  %s8 = ssub.s32 1, %s6
  %s9 = scalar_select 0, %s8, %s6
  $region1: #{transformer_encoder.1} parent=0
    #allocation2 [shape = 'u8[8192]{0}', space=vmem, size = 0x2000, scoped, tag = 'output window, operand 0, single buffered']
    #allocation3 [shape = 's32[1]{0}', space=sflag, size = 0x4, scoped, tag = 'scoped memory for transformer_encoder.1']
    %10 = vsyncpa [#allocation3], 0
    // Predicated region
    $region2: #{transformer_encoder.1} parent=1 // pred_check
      _
    $region3: #{transformer_encoder.1} parent=1 // pred_check_branch
      %12 = sbr.rel (0) target = $region5
    $region4: #{transformer_encoder.1} parent=1 // pred_region
      _
    $region5: #{transformer_encoder.1} parent=1 // pred_fallthru
      _
    // Predicated region
    $region6: #{transformer_encoder.1} parent=1 // pred_check
      _
    $region7: #{transformer_encoder.1} parent=1 // pred_check_branch
      %14 = sbr.rel (0) target = $region9
    $region8: #{transformer_encoder.1} parent=1 // pred_region
      _
    $region9: #{transformer_encoder.1} parent=1 // pred_fallthru
      _
    // Predicated region
    $region10: #{transformer_encoder.1} parent=1 // pred_check
      _
    $region11: #{transformer_encoder.1} parent=1 // pred_check_branch
      %16 = sbr.rel (0) target = $region13
    $region12: #{transformer_encoder.1} parent=1 // pred_region
      _
    $region13: #{transformer_encoder.1} parent=1 // pred_fallthru
      _
    // Predicated region
    $region14: #{transformer_encoder.1} parent=1 // pred_check
      _
    $region15: #{transformer_encoder.1} parent=1 // pred_check_branch
      %18 = sbr.rel (0) target = $region17
    $region16: #{transformer_encoder.1} parent=1 // pred_region
      _
    $region17: #{transformer_encoder.1} parent=1 // pred_fallthru
      _
    // Predicated region
    $region18: #{transformer_encoder.1} parent=1 // pred_check
      _
    $region19: #{transformer_encoder.1} parent=1 // pred_check_branch
      %20 = sbr.rel (0) target = $region21
    $region20: #{transformer_encoder.1} parent=1 // pred_region
      _
    $region21: #{transformer_encoder.1} parent=1 // pred_fallthru
      _
    %v21 = vld [vmem:[%s0] sm:$0xff]
    %v22 = vld [vmem:[%s0 + $0x8] sm:$0xff]
    %v23 = vlaneseq
    %v24 = vand.u32 %v23, 127
    %25 = vset.pattern.permute.xlu0 0
    %26 = vperm.xlu0 %25, %v21
    %v27 = vpop.permute.xlu0 %26
    %28 = vset.pattern.permute.xlu0 0
    %29 = vperm.xlu0 %28, %v22
    %v30 = vpop.permute.xlu0 %29
    %vm31 = vcmp.eq.s32.totalorder %v24, %v27
    %vm32 = vcmp.eq.s32.totalorder %v24, %v30
    %v33 = vsel %vm31, 1, 0
    %v34 = vsel %vm32, 1, 0
    %v35 = vcvt.s32.f32 %v33
    %v36 = vcvt.s32.f32 %v34
    %v37 = vld [vmem:[%s2] sm:$0xff]
    %v38 = vld [vmem:[%s2 + $0x8] sm:$0xff]
    %v39 = vld [vmem:[%s2 + $0x10] sm:$0xff]
    %v40 = vld [vmem:[%s2 + $0x18] sm:$0xff]
    %v41 = vld [vmem:[%s2 + $0x20] sm:$0xff]
    %v42 = vld [vmem:[%s2 + $0x28] sm:$0xff]
    %v43 = vld [vmem:[%s2 + $0x30] sm:$0xff]
    %v44 = vld [vmem:[%s2 + $0x38] sm:$0xff]
    %v45 = vld [vmem:[%s2 + $0x40] sm:$0xff]
    %v46 = vld [vmem:[%s2 + $0x48] sm:$0xff]
    %vm47 = vcmask 523264
    %v49 = vsel %vm47, %v35, 0
    %v52 = vsel %vm47, %v36, 0
    %54 = vmatprep.subr.mxu0 0.0
    %55 = vmatpush1.msra.mxu0 0.0
    %56 = vmatprep.subr.mxu0 0.0
    %57 = vmatpush1.msra.mxu0 0.0
    %58 = vmatprep.subr.mxu0 0.0
    %59 = vmatpush1.msra.mxu0 0.0
    %60 = vmatprep.subr.mxu0 0.0
    %61 = vmatpush1.msra.mxu0 0.0
    %62 = vmatprep.subr.mxu0 0.0
    %63 = vmatpush1.msra.mxu0 0.0
    %64 = vmatprep.subr.mxu0 0.0
    %65 = vmatpush1.msra.mxu0 0.0
    %66 = vmatprep.subr.mxu0 0.0
    %67 = vmatpush1.msra.mxu0 0.0
    %68 = vmatprep.subr.mxu0 0.0
    %69 = vmatpush1.msra.mxu0 0.0
    %70 = vmatprep.subr.mxu0 0.0
    %71 = vmatpush1.msra.mxu0 %v44
    %72 = vmatprep.subr.mxu0 0.0
    %73 = vmatpush1.msra.mxu0 %v43
    %74 = vmatprep.subr.mxu0 0.0
    %75 = vmatpush1.msra.mxu0 %v42
    %76 = vmatprep.subr.mxu0 0.0
    %77 = vmatpush1.msra.mxu0 %v41
    %78 = vmatprep.subr.mxu0 0.0
    %79 = vmatpush1.msra.mxu0 %v40
    %80 = vmatprep.subr.mxu0 0.0
    %81 = vmatpush1.msra.mxu0 %v39
    %82 = vmatprep.subr.mxu0 0.0
    %83 = vmatpush1.msra.mxu0 %v38
    %84 = vmatprep.subr.mxu0 0.0
    %85 = vmatpush1.msra.mxu0 %v37
    %86 = vmatprep.subr.mxu0 0.0
    %87 = vmatpush2.msra.mxu0 0.0
    %88 = vmatprep.subr.mxu0 0.0
    %89 = vmatpush2.msra.mxu0 0.0
    %90 = vmatprep.subr.mxu0 0.0
    %91 = vmatpush2.msra.mxu0 0.0
    %92 = vmatprep.subr.mxu0 0.0
    %93 = vmatpush2.msra.mxu0 0.0
    %94 = vmatprep.subr.mxu0 0.0
    %95 = vmatpush2.msra.mxu0 0.0
    %96 = vmatprep.subr.mxu0 0.0
    %97 = vmatpush2.msra.mxu0 0.0
    %98 = vmatprep.subr.mxu0 0.0
    %99 = vmatpush2.msra.mxu0 0.0
    %100 = vmatprep.subr.mxu0 0.0
    %101 = vmatpush2.msra.mxu0 0.0
    %102 = vmatprep.subr.mxu0 0.0
    %103 = vmatpush2.msra.mxu0 0.0
    %104 = vmatprep.subr.mxu0 0.0
    %105 = vmatpush2.msra.mxu0 0.0
    %106 = vmatprep.subr.mxu0 0.0
    %107 = vmatpush2.msra.mxu0 0.0
    %108 = vmatprep.subr.mxu0 0.0
    %109 = vmatpush2.msra.mxu0 0.0
    %110 = vmatprep.subr.mxu0 0.0
    %111 = vmatpush2.msra.mxu0 0.0
    %112 = vmatprep.subr.mxu0 0.0
    %113 = vmatpush2.msra.mxu0 0.0
    %114 = vmatprep.subr.mxu0 0.0
    %115 = vmatpush2.msra.mxu0 0.0
    %116 = vmatprep.subr.mxu0 0.0
    %117 = vmatpush2.msra.mxu0 0.0
    %118 = vmatprep.mubr.f32.mxu0 0.0
    %119 = vmatmul.mubr.f32.gmra.mxu0 %v49
    %v120 = vpop.f32.mrf.mxu0
    %v121 = vadd.f32 %v45, %v120
    %v122 = vpop.f32.mrf.mxu0
    %123 = vmatprep.mubr.f32.mxu0 0.0
    %124 = vmatmul.mubr.f32.gmra.mxu0 %v52
    %v125 = vpop.f32.mrf.mxu0
    %v126 = vadd.f32 %v46, %v125
    %v127 = vpop.f32.mrf.mxu0
    %128 = vdwg.mxu0
    %v129 = vld [vmem:[%s1] sm:$0x1]
    %vm130 = vcmp.eq.s32.totalorder %v129, 0
    %v131 = vsel %vm130, -1e+09, 0.0
    %v132 = vld [vmem:[%s3] sm:$0xff]
    %v133 = vld [vmem:[%s3 + $0x10] sm:$0xff]
    %v134 = vld [vmem:[%s3 + $0x20] sm:$0xff]
    %v135 = vld [vmem:[%s3 + $0x30] sm:$0xff]
    %v136 = vld [vmem:[%s3 + $0x8] sm:$0xff]
    %v137 = vld [vmem:[%s3 + $0x18] sm:$0xff]
    %v138 = vld [vmem:[%s3 + $0x28] sm:$0xff]
    %v139 = vld [vmem:[%s3 + $0x38] sm:$0xff]
    %v140 = vld [vmem:[%s3 + $0x40] ss:$0 sm:$0xff]
    %v141 = vld [vmem:[%s3 + $0x41] ss:$0 sm:$0xff]
    %v142 = vld [vmem:[%s3 + $0x42] ss:$0 sm:$0xff]
    %v143 = vld [vmem:[%s3 + $0x43] ss:$0 sm:$0xff]
    %v144 = vld [vmem:[%s4] sm:$0xff]
    %v145 = vld [vmem:[%s4 + $0x8] sm:$0xff]
    %v146 = vld [vmem:[%s4 + $0x10] sm:$0xff]
    %v147 = vld [vmem:[%s4 + $0x18] sm:$0xff]
    %v148 = vld [vmem:[%s4 + $0x20] sm:$0xff]
    %v149 = vld [vmem:[%s4 + $0x28] sm:$0xff]
    %v150 = vld [vmem:[%s4 + $0x30] sm:$0xff]
    %v151 = vld [vmem:[%s4 + $0x38] sm:$0xff]
    %v152 = vld [vmem:[%s4 + $0x40] sm:$0xff]
    %v153 = vld [vmem:[%s4 + $0x48] sm:$0xff]
    %v154 = vld [vmem:[%s4 + $0x50] sm:$0xff]
    %v155 = vld [vmem:[%s4 + $0x58] sm:$0xff]
    %v156 = vld [vmem:[%s4 + $0x60] sm:$0xff]
    %v157 = vld [vmem:[%s4 + $0x68] sm:$0xff]
    %v158 = vld [vmem:[%s4 + $0x70] sm:$0xff]
    %v159 = vld [vmem:[%s4 + $0x78] sm:$0xff]
    %vm160 = vcmask 261120
    %v162 = vsel %vm160, %v121, 0
    %v165 = vsel %vm160, %v126, 0
    %167 = vmatprep.subr.mxu0 0.0
    %168 = vmatpush1.msra.mxu0 0.0
    %169 = vmatprep.subr.mxu0 0.0
    %170 = vmatpush1.msra.mxu0 0.0
    %171 = vmatprep.subr.mxu0 0.0
    %172 = vmatpush1.msra.mxu0 0.0
    %173 = vmatprep.subr.mxu0 0.0
    %174 = vmatpush1.msra.mxu0 0.0
    %175 = vmatprep.subr.mxu0 0.0
    %176 = vmatpush1.msra.mxu0 0.0
    %177 = vmatprep.subr.mxu0 0.0
    %178 = vmatpush1.msra.mxu0 0.0
    %179 = vmatprep.subr.mxu0 0.0
    %180 = vmatpush1.msra.mxu0 0.0
    %181 = vmatprep.subr.mxu0 0.0
    %182 = vmatpush1.msra.mxu0 0.0
    %183 = vmatprep.subr.mxu0 0.0
    %184 = vmatpush1.msra.mxu0 0.0
    %185 = vmatprep.subr.mxu0 0.0
    %186 = vmatpush1.msra.mxu0 0.0
    %187 = vmatprep.subr.mxu0 0.0
    %188 = vmatpush1.msra.mxu0 0.0
    %189 = vmatprep.subr.mxu0 0.0
    %190 = vmatpush1.msra.mxu0 0.0
    %191 = vmatprep.subr.mxu0 0.0
    %192 = vmatpush1.msra.mxu0 %v139
    %193 = vmatprep.subr.mxu0 0.0
    %194 = vmatpush1.msra.mxu0 %v138
    %195 = vmatprep.subr.mxu0 0.0
    %196 = vmatpush1.msra.mxu0 %v137
    %197 = vmatprep.subr.mxu0 0.0
    %198 = vmatpush1.msra.mxu0 %v136
    %199 = vmatprep.subr.mxu0 0.0
    %200 = vmatpush2.msra.mxu0 0.0
    %201 = vmatprep.subr.mxu0 0.0
    %202 = vmatpush2.msra.mxu0 0.0
    %203 = vmatprep.subr.mxu0 0.0
    %204 = vmatpush2.msra.mxu0 0.0
    %205 = vmatprep.subr.mxu0 0.0
    %206 = vmatpush2.msra.mxu0 0.0
    %207 = vmatprep.subr.mxu0 0.0
    %208 = vmatpush2.msra.mxu0 0.0
    %209 = vmatprep.subr.mxu0 0.0
    %210 = vmatpush2.msra.mxu0 0.0
    %211 = vmatprep.subr.mxu0 0.0
    %212 = vmatpush2.msra.mxu0 0.0
    %213 = vmatprep.subr.mxu0 0.0
    %214 = vmatpush2.msra.mxu0 0.0
    %215 = vmatprep.subr.mxu0 0.0
    %216 = vmatpush2.msra.mxu0 0.0
    %217 = vmatprep.subr.mxu0 0.0
    %218 = vmatpush2.msra.mxu0 0.0
    %219 = vmatprep.subr.mxu0 0.0
    %220 = vmatpush2.msra.mxu0 0.0
    %221 = vmatprep.subr.mxu0 0.0
    %222 = vmatpush2.msra.mxu0 0.0
    %223 = vmatprep.subr.mxu0 0.0
    %224 = vmatpush2.msra.mxu0 0.0
    %225 = vmatprep.subr.mxu0 0.0
    %226 = vmatpush2.msra.mxu0 0.0
    %227 = vmatprep.subr.mxu0 0.0
    %228 = vmatpush2.msra.mxu0 0.0
    %229 = vmatprep.subr.mxu0 0.0
    %230 = vmatpush2.msra.mxu0 0.0
    %231 = vmatprep.mubr.f32.mxu0 0.0
    %232 = vmatmul.mubr.f32.gmra.mxu0 %v162
    %v233 = vpop.f32.mrf.mxu0
    %v234 = vadd.f32 %v141, %v233
    %v235 = vpop.f32.mrf.mxu0
    %236 = vmatprep.mubr.f32.mxu0 0.0
    %237 = vmatmul.mubr.f32.gmra.mxu0 %v165
    %v238 = vpop.f32.mrf.mxu0
    %v239 = vadd.f32 %v141, %v238
    %v240 = vpop.f32.mrf.mxu0
    %241 = vdwg.mxu0
    %243 = vrot.lane.b32.xlu0 %v234, 96
    %v244 = vpop.permute.xlu0 %243
    %vm245 = vcmask 64512
    %v246 = vsel %vm245, %v234, 0
    %v248 = vsel %vm245, %v244, 0
    %250 = vmatprep.subr.mxu0 0.0
    %251 = vmatpush1.xpose.msra.mxu0 0.0
    %252 = vmatprep.subr.mxu0 0.0
    %253 = vmatpush1.xpose.msra.mxu0 0.0
    %254 = vmatprep.subr.mxu0 0.0
    %255 = vmatpush1.xpose.msra.mxu0 0.0
    %256 = vmatprep.subr.mxu0 0.0
    %257 = vmatpush1.xpose.msra.mxu0 0.0
    %258 = vmatprep.subr.mxu0 0.0
    %259 = vmatpush1.xpose.msra.mxu0 0.0
    %260 = vmatprep.subr.mxu0 0.0
    %261 = vmatpush1.xpose.msra.mxu0 0.0
    %262 = vmatprep.subr.mxu0 0.0
    %263 = vmatpush1.xpose.msra.mxu0 0.0
    %264 = vmatprep.subr.mxu0 0.0
    %265 = vmatpush1.xpose.msra.mxu0 0.0
    %266 = vmatprep.subr.mxu0 0.0
    %267 = vmatpush1.xpose.msra.mxu0 0.0
    %268 = vmatprep.subr.mxu0 0.0
    %269 = vmatpush1.xpose.msra.mxu0 0.0
    %270 = vmatprep.subr.mxu0 0.0
    %271 = vmatpush1.xpose.msra.mxu0 0.0
    %272 = vmatprep.subr.mxu0 0.0
    %273 = vmatpush1.xpose.msra.mxu0 0.0
    %274 = vmatprep.subr.mxu0 0.0
    %275 = vmatpush1.xpose.msra.mxu0 0.0
    %276 = vmatprep.subr.mxu0 0.0
    %277 = vmatpush1.xpose.msra.mxu0 0.0
    %278 = vmatprep.subr.mxu0 0.0
    %279 = vmatpush1.xpose.msra.mxu0 0.0
    %280 = vmatprep.subr.mxu0 0.0
    %281 = vmatpush1.xpose.msra.mxu0 %v248
    %282 = vmatprep.subr.mxu0 0.0
    %283 = vmatpush2.xpose.msra.mxu0 0.0
    %284 = vmatprep.subr.mxu0 0.0
    %285 = vmatpush2.xpose.msra.mxu0 0.0
    %286 = vmatprep.subr.mxu0 0.0
    %287 = vmatpush2.xpose.msra.mxu0 0.0
    %288 = vmatprep.subr.mxu0 0.0
    %289 = vmatpush2.xpose.msra.mxu0 0.0
    %290 = vmatprep.subr.mxu0 0.0
    %291 = vmatpush2.xpose.msra.mxu0 0.0
    %292 = vmatprep.subr.mxu0 0.0
    %293 = vmatpush2.xpose.msra.mxu0 0.0
    %294 = vmatprep.subr.mxu0 0.0
    %295 = vmatpush2.xpose.msra.mxu0 0.0
    %296 = vmatprep.subr.mxu0 0.0
    %297 = vmatpush2.xpose.msra.mxu0 0.0
    %298 = vmatprep.subr.mxu0 0.0
    %299 = vmatpush2.xpose.msra.mxu0 0.0
    %300 = vmatprep.subr.mxu0 0.0
    %301 = vmatpush2.xpose.msra.mxu0 0.0
    %302 = vmatprep.subr.mxu0 0.0
    %303 = vmatpush2.xpose.msra.mxu0 0.0
    %304 = vmatprep.subr.mxu0 0.0
    %305 = vmatpush2.xpose.msra.mxu0 0.0
    %306 = vmatprep.subr.mxu0 0.0
    %307 = vmatpush2.xpose.msra.mxu0 0.0
    %308 = vmatprep.subr.mxu0 0.0
    %309 = vmatpush2.xpose.msra.mxu0 0.0
    %310 = vmatprep.subr.mxu0 0.0
    %311 = vmatpush2.xpose.msra.mxu0 0.0
    %312 = vmatprep.subr.mxu0 0.0
    %313 = vmatpush2.xpose.msra.mxu0 0.0
    %314 = vmatprep.mubr.f32.mxu0 0.0
    %315 = vmatmul.mubr.f32.gmra.mxu0 %v246
    %v316 = vpop.f32.mrf.mxu0
    %v317 = vadd.f32 0.0, %v316
    %v318 = vpop.f32.mrf.mxu0
    %319 = vdwg.mxu0
    %321 = vrot.lane.b32.xlu0 %v239, 96
    %v322 = vpop.permute.xlu0 %321
    %v323 = vsel %vm245, %v239, 0
    %v325 = vsel %vm245, %v322, 0
    %327 = vmatprep.subr.mxu0 0.0
    %328 = vmatpush1.xpose.msra.mxu0 0.0
    %329 = vmatprep.subr.mxu0 0.0
    %330 = vmatpush1.xpose.msra.mxu0 0.0
    %331 = vmatprep.subr.mxu0 0.0
    %332 = vmatpush1.xpose.msra.mxu0 0.0
    %333 = vmatprep.subr.mxu0 0.0
    %334 = vmatpush1.xpose.msra.mxu0 0.0
    %335 = vmatprep.subr.mxu0 0.0
    %336 = vmatpush1.xpose.msra.mxu0 0.0
    %337 = vmatprep.subr.mxu0 0.0
    %338 = vmatpush1.xpose.msra.mxu0 0.0
    %339 = vmatprep.subr.mxu0 0.0
    %340 = vmatpush1.xpose.msra.mxu0 0.0
    %341 = vmatprep.subr.mxu0 0.0
    %342 = vmatpush1.xpose.msra.mxu0 0.0
    %343 = vmatprep.subr.mxu0 0.0
    %344 = vmatpush1.xpose.msra.mxu0 0.0
    %345 = vmatprep.subr.mxu0 0.0
    %346 = vmatpush1.xpose.msra.mxu0 0.0
    %347 = vmatprep.subr.mxu0 0.0
    %348 = vmatpush1.xpose.msra.mxu0 0.0
    %349 = vmatprep.subr.mxu0 0.0
    %350 = vmatpush1.xpose.msra.mxu0 0.0
    %351 = vmatprep.subr.mxu0 0.0
    %352 = vmatpush1.xpose.msra.mxu0 0.0
    %353 = vmatprep.subr.mxu0 0.0
    %354 = vmatpush1.xpose.msra.mxu0 0.0
    %355 = vmatprep.subr.mxu0 0.0
    %356 = vmatpush1.xpose.msra.mxu0 0.0
    %357 = vmatprep.subr.mxu0 0.0
    %358 = vmatpush1.xpose.msra.mxu0 %v325
    %359 = vmatprep.subr.mxu0 0.0
    %360 = vmatpush2.xpose.msra.mxu0 0.0
    %361 = vmatprep.subr.mxu0 0.0
    %362 = vmatpush2.xpose.msra.mxu0 0.0
    %363 = vmatprep.subr.mxu0 0.0
    %364 = vmatpush2.xpose.msra.mxu0 0.0
    %365 = vmatprep.subr.mxu0 0.0
    %366 = vmatpush2.xpose.msra.mxu0 0.0
    %367 = vmatprep.subr.mxu0 0.0
    %368 = vmatpush2.xpose.msra.mxu0 0.0
    %369 = vmatprep.subr.mxu0 0.0
    %370 = vmatpush2.xpose.msra.mxu0 0.0
    %371 = vmatprep.subr.mxu0 0.0
    %372 = vmatpush2.xpose.msra.mxu0 0.0
    %373 = vmatprep.subr.mxu0 0.0
    %374 = vmatpush2.xpose.msra.mxu0 0.0
    %375 = vmatprep.subr.mxu0 0.0
    %376 = vmatpush2.xpose.msra.mxu0 0.0
    %377 = vmatprep.subr.mxu0 0.0
    %378 = vmatpush2.xpose.msra.mxu0 0.0
    %379 = vmatprep.subr.mxu0 0.0
    %380 = vmatpush2.xpose.msra.mxu0 0.0
    %381 = vmatprep.subr.mxu0 0.0
    %382 = vmatpush2.xpose.msra.mxu0 0.0
    %383 = vmatprep.subr.mxu0 0.0
    %384 = vmatpush2.xpose.msra.mxu0 0.0
    %385 = vmatprep.subr.mxu0 0.0
    %386 = vmatpush2.xpose.msra.mxu0 0.0
    %387 = vmatprep.subr.mxu0 0.0
    %388 = vmatpush2.xpose.msra.mxu0 0.0
    %389 = vmatprep.subr.mxu0 0.0
    %390 = vmatpush2.xpose.msra.mxu0 0.0
    %391 = vmatprep.mubr.f32.mxu0 0.0
    %392 = vmatmul.mubr.f32.gmra.mxu0 %v323
    %v393 = vpop.f32.mrf.mxu0
    %v394 = vadd.f32 0.0, %v393
    %v395 = vpop.f32.mrf.mxu0
    %396 = vdwg.mxu0
    %v397 = vmul.f32 %v317, 0.35355338
    %v398 = vmul.f32 %v394, 0.35355338
    %v400 = vlaneseq
    %v401 = vshrl.u32 %v400, 7
    %v402 = vsub.s32 0, %v401
    %v403 = vrot.slane %v131, %v402
    %v405 = vadd.f32 %v397, %v403
    %v406 = vadd.f32 %v398, %v403
    %v407 = vsel %vm245, %v405, -inf
    %408 = vmax.xlane.f32.xlu0 %v407
    %v409 = vpop.xlane.xlu0 %408
    %v410 = vsel %vm245, %v406, -inf
    %411 = vmax.xlane.f32.xlu0 %v410
    %v412 = vpop.xlane.xlu0 %411
    %v413 = vsub.f32 %v405, %v409
    %v414 = vsub.f32 %v406, %v412
    %v415 = vmul.f32 %v413, 1.442695
    %v416 = vpow.pop %v415
    %v417 = vmul.f32 %v414, 1.442695
    %v418 = vpow.pop %v417
    %v419 = vsel %vm245, %v416, 0.0
    %420 = vadd.xlane.f32.xlu0 %v419
    %v421 = vpop.xlane.xlu0 %420
    %v422 = vsel %vm245, %v418, 0.0
    %423 = vadd.xlane.f32.xlu0 %v422
    %v424 = vpop.xlane.xlu0 %423
    %v425 = vrcp.pop %v421
    %v426 = vrcp.pop %v424
    %v427 = vmul.f32 %v416, %v425
    %v428 = vmul.f32 %v418, %v426
    %429 = vrot.lane.b32.xlu0 %v234, 64
    %v430 = vpop.permute.xlu0 %429
    %v433 = vsel %vm245, %v427, 0
    %435 = vmatprep.subr.mxu0 0.0
    %436 = vmatpush1.msra.mxu0 0.0
    %437 = vmatprep.subr.mxu0 0.0
    %438 = vmatpush1.msra.mxu0 0.0
    %439 = vmatprep.subr.mxu0 0.0
    %440 = vmatpush1.msra.mxu0 0.0
    %441 = vmatprep.subr.mxu0 0.0
    %442 = vmatpush1.msra.mxu0 0.0
    %443 = vmatprep.subr.mxu0 0.0
    %444 = vmatpush1.msra.mxu0 0.0
    %445 = vmatprep.subr.mxu0 0.0
    %446 = vmatpush1.msra.mxu0 0.0
    %447 = vmatprep.subr.mxu0 0.0
    %448 = vmatpush1.msra.mxu0 0.0
    %449 = vmatprep.subr.mxu0 0.0
    %450 = vmatpush1.msra.mxu0 0.0
    %451 = vmatprep.subr.mxu0 0.0
    %452 = vmatpush1.msra.mxu0 0.0
    %453 = vmatprep.subr.mxu0 0.0
    %454 = vmatpush1.msra.mxu0 0.0
    %455 = vmatprep.subr.mxu0 0.0
    %456 = vmatpush1.msra.mxu0 0.0
    %457 = vmatprep.subr.mxu0 0.0
    %458 = vmatpush1.msra.mxu0 0.0
    %459 = vmatprep.subr.mxu0 0.0
    %460 = vmatpush1.msra.mxu0 0.0
    %461 = vmatprep.subr.mxu0 0.0
    %462 = vmatpush1.msra.mxu0 0.0
    %463 = vmatprep.subr.mxu0 0.0
    %464 = vmatpush1.msra.mxu0 0.0
    %465 = vmatprep.subr.mxu0 0.0
    %466 = vmatpush1.msra.mxu0 %v430
    %467 = vmatprep.subr.mxu0 0.0
    %468 = vmatpush2.msra.mxu0 0.0
    %469 = vmatprep.subr.mxu0 0.0
    %470 = vmatpush2.msra.mxu0 0.0
    %471 = vmatprep.subr.mxu0 0.0
    %472 = vmatpush2.msra.mxu0 0.0
    %473 = vmatprep.subr.mxu0 0.0
    %474 = vmatpush2.msra.mxu0 0.0
    %475 = vmatprep.subr.mxu0 0.0
    %476 = vmatpush2.msra.mxu0 0.0
    %477 = vmatprep.subr.mxu0 0.0
    %478 = vmatpush2.msra.mxu0 0.0
    %479 = vmatprep.subr.mxu0 0.0
    %480 = vmatpush2.msra.mxu0 0.0
    %481 = vmatprep.subr.mxu0 0.0
    %482 = vmatpush2.msra.mxu0 0.0
    %483 = vmatprep.subr.mxu0 0.0
    %484 = vmatpush2.msra.mxu0 0.0
    %485 = vmatprep.subr.mxu0 0.0
    %486 = vmatpush2.msra.mxu0 0.0
    %487 = vmatprep.subr.mxu0 0.0
    %488 = vmatpush2.msra.mxu0 0.0
    %489 = vmatprep.subr.mxu0 0.0
    %490 = vmatpush2.msra.mxu0 0.0
    %491 = vmatprep.subr.mxu0 0.0
    %492 = vmatpush2.msra.mxu0 0.0
    %493 = vmatprep.subr.mxu0 0.0
    %494 = vmatpush2.msra.mxu0 0.0
    %495 = vmatprep.subr.mxu0 0.0
    %496 = vmatpush2.msra.mxu0 0.0
    %497 = vmatprep.subr.mxu0 0.0
    %498 = vmatpush2.msra.mxu0 0.0
    %499 = vmatprep.mubr.f32.mxu0 0.0
    %500 = vmatmul.mubr.f32.gmra.mxu0 %v433
    %v501 = vpop.f32.mrf.mxu0
    %v502 = vadd.f32 0.0, %v501
    %v503 = vpop.f32.mrf.mxu0
    %504 = vdwg.mxu0
    %505 = vrot.lane.b32.xlu0 %v239, 64
    %v506 = vpop.permute.xlu0 %505
    %v509 = vsel %vm245, %v428, 0
    %511 = vmatprep.subr.mxu0 0.0
    %512 = vmatpush1.msra.mxu0 0.0
    %513 = vmatprep.subr.mxu0 0.0
    %514 = vmatpush1.msra.mxu0 0.0
    %515 = vmatprep.subr.mxu0 0.0
    %516 = vmatpush1.msra.mxu0 0.0
    %517 = vmatprep.subr.mxu0 0.0
    %518 = vmatpush1.msra.mxu0 0.0
    %519 = vmatprep.subr.mxu0 0.0
    %520 = vmatpush1.msra.mxu0 0.0
    %521 = vmatprep.subr.mxu0 0.0
    %522 = vmatpush1.msra.mxu0 0.0
    %523 = vmatprep.subr.mxu0 0.0
    %524 = vmatpush1.msra.mxu0 0.0
    %525 = vmatprep.subr.mxu0 0.0
    %526 = vmatpush1.msra.mxu0 0.0
    %527 = vmatprep.subr.mxu0 0.0
    %528 = vmatpush1.msra.mxu0 0.0
    %529 = vmatprep.subr.mxu0 0.0
    %530 = vmatpush1.msra.mxu0 0.0
    %531 = vmatprep.subr.mxu0 0.0
    %532 = vmatpush1.msra.mxu0 0.0
    %533 = vmatprep.subr.mxu0 0.0
    %534 = vmatpush1.msra.mxu0 0.0
    %535 = vmatprep.subr.mxu0 0.0
    %536 = vmatpush1.msra.mxu0 0.0
    %537 = vmatprep.subr.mxu0 0.0
    %538 = vmatpush1.msra.mxu0 0.0
    %539 = vmatprep.subr.mxu0 0.0
    %540 = vmatpush1.msra.mxu0 0.0
    %541 = vmatprep.subr.mxu0 0.0
    %542 = vmatpush1.msra.mxu0 %v506
    %543 = vmatprep.subr.mxu0 0.0
    %544 = vmatpush2.msra.mxu0 0.0
    %545 = vmatprep.subr.mxu0 0.0
    %546 = vmatpush2.msra.mxu0 0.0
    %547 = vmatprep.subr.mxu0 0.0
    %548 = vmatpush2.msra.mxu0 0.0
    %549 = vmatprep.subr.mxu0 0.0
    %550 = vmatpush2.msra.mxu0 0.0
    %551 = vmatprep.subr.mxu0 0.0
    %552 = vmatpush2.msra.mxu0 0.0
    %553 = vmatprep.subr.mxu0 0.0
    %554 = vmatpush2.msra.mxu0 0.0
    %555 = vmatprep.subr.mxu0 0.0
    %556 = vmatpush2.msra.mxu0 0.0
    %557 = vmatprep.subr.mxu0 0.0
    %558 = vmatpush2.msra.mxu0 0.0
    %559 = vmatprep.subr.mxu0 0.0
    %560 = vmatpush2.msra.mxu0 0.0
    %561 = vmatprep.subr.mxu0 0.0
    %562 = vmatpush2.msra.mxu0 0.0
    %563 = vmatprep.subr.mxu0 0.0
    %564 = vmatpush2.msra.mxu0 0.0
    %565 = vmatprep.subr.mxu0 0.0
    %566 = vmatpush2.msra.mxu0 0.0
    %567 = vmatprep.subr.mxu0 0.0
    %568 = vmatpush2.msra.mxu0 0.0
    %569 = vmatprep.subr.mxu0 0.0
    %570 = vmatpush2.msra.mxu0 0.0
    %571 = vmatprep.subr.mxu0 0.0
    %572 = vmatpush2.msra.mxu0 0.0
    %573 = vmatprep.subr.mxu0 0.0
    %574 = vmatpush2.msra.mxu0 0.0
    %575 = vmatprep.mubr.f32.mxu0 0.0
    %576 = vmatmul.mubr.f32.gmra.mxu0 %v509
    %v577 = vpop.f32.mrf.mxu0
    %v578 = vadd.f32 0.0, %v577
    %v579 = vpop.f32.mrf.mxu0
    %580 = vdwg.mxu0
    %581 = vrot.lane.b32.xlu0 %v234, 120
    %v582 = vpop.permute.xlu0 %581
    %583 = vrot.lane.b32.xlu0 %v234, 88
    %v584 = vpop.permute.xlu0 %583
    %v585 = vsel %vm245, %v582, 0
    %v587 = vsel %vm245, %v584, 0
    %589 = vmatprep.subr.mxu0 0.0
    %590 = vmatpush1.xpose.msra.mxu0 0.0
    %591 = vmatprep.subr.mxu0 0.0
    %592 = vmatpush1.xpose.msra.mxu0 0.0
    %593 = vmatprep.subr.mxu0 0.0
    %594 = vmatpush1.xpose.msra.mxu0 0.0
    %595 = vmatprep.subr.mxu0 0.0
    %596 = vmatpush1.xpose.msra.mxu0 0.0
    %597 = vmatprep.subr.mxu0 0.0
    %598 = vmatpush1.xpose.msra.mxu0 0.0
    %599 = vmatprep.subr.mxu0 0.0
    %600 = vmatpush1.xpose.msra.mxu0 0.0
    %601 = vmatprep.subr.mxu0 0.0
    %602 = vmatpush1.xpose.msra.mxu0 0.0
    %603 = vmatprep.subr.mxu0 0.0
    %604 = vmatpush1.xpose.msra.mxu0 0.0
    %605 = vmatprep.subr.mxu0 0.0
    %606 = vmatpush1.xpose.msra.mxu0 0.0
    %607 = vmatprep.subr.mxu0 0.0
    %608 = vmatpush1.xpose.msra.mxu0 0.0
    %609 = vmatprep.subr.mxu0 0.0
    %610 = vmatpush1.xpose.msra.mxu0 0.0
    %611 = vmatprep.subr.mxu0 0.0
    %612 = vmatpush1.xpose.msra.mxu0 0.0
    %613 = vmatprep.subr.mxu0 0.0
    %614 = vmatpush1.xpose.msra.mxu0 0.0
    %615 = vmatprep.subr.mxu0 0.0
    %616 = vmatpush1.xpose.msra.mxu0 0.0
    %617 = vmatprep.subr.mxu0 0.0
    %618 = vmatpush1.xpose.msra.mxu0 0.0
    %619 = vmatprep.subr.mxu0 0.0
    %620 = vmatpush1.xpose.msra.mxu0 %v587
    %621 = vmatprep.subr.mxu0 0.0
    %622 = vmatpush2.xpose.msra.mxu0 0.0
    %623 = vmatprep.subr.mxu0 0.0
    %624 = vmatpush2.xpose.msra.mxu0 0.0
    %625 = vmatprep.subr.mxu0 0.0
    %626 = vmatpush2.xpose.msra.mxu0 0.0
    %627 = vmatprep.subr.mxu0 0.0
    %628 = vmatpush2.xpose.msra.mxu0 0.0
    %629 = vmatprep.subr.mxu0 0.0
    %630 = vmatpush2.xpose.msra.mxu0 0.0
    %631 = vmatprep.subr.mxu0 0.0
    %632 = vmatpush2.xpose.msra.mxu0 0.0
    %633 = vmatprep.subr.mxu0 0.0
    %634 = vmatpush2.xpose.msra.mxu0 0.0
    %635 = vmatprep.subr.mxu0 0.0
    %636 = vmatpush2.xpose.msra.mxu0 0.0
    %637 = vmatprep.subr.mxu0 0.0
    %638 = vmatpush2.xpose.msra.mxu0 0.0
    %639 = vmatprep.subr.mxu0 0.0
    %640 = vmatpush2.xpose.msra.mxu0 0.0
    %641 = vmatprep.subr.mxu0 0.0
    %642 = vmatpush2.xpose.msra.mxu0 0.0
    %643 = vmatprep.subr.mxu0 0.0
    %644 = vmatpush2.xpose.msra.mxu0 0.0
    %645 = vmatprep.subr.mxu0 0.0
    %646 = vmatpush2.xpose.msra.mxu0 0.0
    %647 = vmatprep.subr.mxu0 0.0
    %648 = vmatpush2.xpose.msra.mxu0 0.0
    %649 = vmatprep.subr.mxu0 0.0
    %650 = vmatpush2.xpose.msra.mxu0 0.0
    %651 = vmatprep.subr.mxu0 0.0
    %652 = vmatpush2.xpose.msra.mxu0 0.0
    %653 = vmatprep.mubr.f32.mxu0 0.0
    %654 = vmatmul.mubr.f32.gmra.mxu0 %v585
    %v655 = vpop.f32.mrf.mxu0
    %v656 = vadd.f32 0.0, %v655
    %v657 = vpop.f32.mrf.mxu0
    %658 = vdwg.mxu0
    %659 = vrot.lane.b32.xlu0 %v239, 120
    %v660 = vpop.permute.xlu0 %659
    %661 = vrot.lane.b32.xlu0 %v239, 88
    %v662 = vpop.permute.xlu0 %661
    %v663 = vsel %vm245, %v660, 0
    %v665 = vsel %vm245, %v662, 0
    %667 = vmatprep.subr.mxu0 0.0
    %668 = vmatpush1.xpose.msra.mxu0 0.0
    %669 = vmatprep.subr.mxu0 0.0
    %670 = vmatpush1.xpose.msra.mxu0 0.0
    %671 = vmatprep.subr.mxu0 0.0
    %672 = vmatpush1.xpose.msra.mxu0 0.0
    %673 = vmatprep.subr.mxu0 0.0
    %674 = vmatpush1.xpose.msra.mxu0 0.0
    %675 = vmatprep.subr.mxu0 0.0
    %676 = vmatpush1.xpose.msra.mxu0 0.0
    %677 = vmatprep.subr.mxu0 0.0
    %678 = vmatpush1.xpose.msra.mxu0 0.0
    %679 = vmatprep.subr.mxu0 0.0
    %680 = vmatpush1.xpose.msra.mxu0 0.0
    %681 = vmatprep.subr.mxu0 0.0
    %682 = vmatpush1.xpose.msra.mxu0 0.0
    %683 = vmatprep.subr.mxu0 0.0
    %684 = vmatpush1.xpose.msra.mxu0 0.0
    %685 = vmatprep.subr.mxu0 0.0
    %686 = vmatpush1.xpose.msra.mxu0 0.0
    %687 = vmatprep.subr.mxu0 0.0
    %688 = vmatpush1.xpose.msra.mxu0 0.0
    %689 = vmatprep.subr.mxu0 0.0
    %690 = vmatpush1.xpose.msra.mxu0 0.0
    %691 = vmatprep.subr.mxu0 0.0
    %692 = vmatpush1.xpose.msra.mxu0 0.0
    %693 = vmatprep.subr.mxu0 0.0
    %694 = vmatpush1.xpose.msra.mxu0 0.0
    %695 = vmatprep.subr.mxu0 0.0
    %696 = vmatpush1.xpose.msra.mxu0 0.0
    %697 = vmatprep.subr.mxu0 0.0
    %698 = vmatpush1.xpose.msra.mxu0 %v665
    %699 = vmatprep.subr.mxu0 0.0
    %700 = vmatpush2.xpose.msra.mxu0 0.0
    %701 = vmatprep.subr.mxu0 0.0
    %702 = vmatpush2.xpose.msra.mxu0 0.0
    %703 = vmatprep.subr.mxu0 0.0
    %704 = vmatpush2.xpose.msra.mxu0 0.0
    %705 = vmatprep.subr.mxu0 0.0
    %706 = vmatpush2.xpose.msra.mxu0 0.0
    %707 = vmatprep.subr.mxu0 0.0
    %708 = vmatpush2.xpose.msra.mxu0 0.0
    %709 = vmatprep.subr.mxu0 0.0
    %710 = vmatpush2.xpose.msra.mxu0 0.0
    %711 = vmatprep.subr.mxu0 0.0
    %712 = vmatpush2.xpose.msra.mxu0 0.0
    %713 = vmatprep.subr.mxu0 0.0
    %714 = vmatpush2.xpose.msra.mxu0 0.0
    %715 = vmatprep.subr.mxu0 0.0
    %716 = vmatpush2.xpose.msra.mxu0 0.0
    %717 = vmatprep.subr.mxu0 0.0
    %718 = vmatpush2.xpose.msra.mxu0 0.0
    %719 = vmatprep.subr.mxu0 0.0
    %720 = vmatpush2.xpose.msra.mxu0 0.0
    %721 = vmatprep.subr.mxu0 0.0
    %722 = vmatpush2.xpose.msra.mxu0 0.0
    %723 = vmatprep.subr.mxu0 0.0
    %724 = vmatpush2.xpose.msra.mxu0 0.0
    %725 = vmatprep.subr.mxu0 0.0
    %726 = vmatpush2.xpose.msra.mxu0 0.0
    %727 = vmatprep.subr.mxu0 0.0
    %728 = vmatpush2.xpose.msra.mxu0 0.0
    %729 = vmatprep.subr.mxu0 0.0
    %730 = vmatpush2.xpose.msra.mxu0 0.0
    %731 = vmatprep.mubr.f32.mxu0 0.0
    %732 = vmatmul.mubr.f32.gmra.mxu0 %v663
    %v733 = vpop.f32.mrf.mxu0
    %v734 = vadd.f32 0.0, %v733
    %v735 = vpop.f32.mrf.mxu0
    %736 = vdwg.mxu0
    %v737 = vmul.f32 %v656, 0.35355338
    %v738 = vmul.f32 %v734, 0.35355338
    %v739 = vadd.f32 %v737, %v403
    %v740 = vadd.f32 %v738, %v403
    %v741 = vsel %vm245, %v739, -inf
    %742 = vmax.xlane.f32.xlu0 %v741
    %v743 = vpop.xlane.xlu0 %742
    %v744 = vsel %vm245, %v740, -inf
    %745 = vmax.xlane.f32.xlu0 %v744
    %v746 = vpop.xlane.xlu0 %745
    %v747 = vsub.f32 %v739, %v743
    %v748 = vsub.f32 %v740, %v746
    %v749 = vmul.f32 %v747, 1.442695
    %v750 = vpow.pop %v749
    %v751 = vmul.f32 %v748, 1.442695
    %v752 = vpow.pop %v751
    %v753 = vsel %vm245, %v750, 0.0
    %754 = vadd.xlane.f32.xlu0 %v753
    %v755 = vpop.xlane.xlu0 %754
    %v756 = vsel %vm245, %v752, 0.0
    %757 = vadd.xlane.f32.xlu0 %v756
    %v758 = vpop.xlane.xlu0 %757
    %v759 = vrcp.pop %v755
    %v760 = vrcp.pop %v758
    %v761 = vmul.f32 %v750, %v759
    %v762 = vmul.f32 %v752, %v760
    %763 = vrot.lane.b32.xlu0 %v234, 56
    %v764 = vpop.permute.xlu0 %763
    %v767 = vsel %vm245, %v761, 0
    %769 = vmatprep.subr.mxu0 0.0
    %770 = vmatpush1.msra.mxu0 0.0
    %771 = vmatprep.subr.mxu0 0.0
    %772 = vmatpush1.msra.mxu0 0.0
    %773 = vmatprep.subr.mxu0 0.0
    %774 = vmatpush1.msra.mxu0 0.0
    %775 = vmatprep.subr.mxu0 0.0
    %776 = vmatpush1.msra.mxu0 0.0
    %777 = vmatprep.subr.mxu0 0.0
    %778 = vmatpush1.msra.mxu0 0.0
    %779 = vmatprep.subr.mxu0 0.0
    %780 = vmatpush1.msra.mxu0 0.0
    %781 = vmatprep.subr.mxu0 0.0
    %782 = vmatpush1.msra.mxu0 0.0
    %783 = vmatprep.subr.mxu0 0.0
    %784 = vmatpush1.msra.mxu0 0.0
    %785 = vmatprep.subr.mxu0 0.0
    %786 = vmatpush1.msra.mxu0 0.0
    %787 = vmatprep.subr.mxu0 0.0
    %788 = vmatpush1.msra.mxu0 0.0
    %789 = vmatprep.subr.mxu0 0.0
    %790 = vmatpush1.msra.mxu0 0.0
    %791 = vmatprep.subr.mxu0 0.0
    %792 = vmatpush1.msra.mxu0 0.0
    %793 = vmatprep.subr.mxu0 0.0
    %794 = vmatpush1.msra.mxu0 0.0
    %795 = vmatprep.subr.mxu0 0.0
    %796 = vmatpush1.msra.mxu0 0.0
    %797 = vmatprep.subr.mxu0 0.0
    %798 = vmatpush1.msra.mxu0 0.0
    %799 = vmatprep.subr.mxu0 0.0
    %800 = vmatpush1.msra.mxu0 %v764
    %801 = vmatprep.subr.mxu0 0.0
    %802 = vmatpush2.msra.mxu0 0.0
    %803 = vmatprep.subr.mxu0 0.0
    %804 = vmatpush2.msra.mxu0 0.0
    %805 = vmatprep.subr.mxu0 0.0
    %806 = vmatpush2.msra.mxu0 0.0
    %807 = vmatprep.subr.mxu0 0.0
    %808 = vmatpush2.msra.mxu0 0.0
    %809 = vmatprep.subr.mxu0 0.0
    %810 = vmatpush2.msra.mxu0 0.0
    %811 = vmatprep.subr.mxu0 0.0
    %812 = vmatpush2.msra.mxu0 0.0
    %813 = vmatprep.subr.mxu0 0.0
    %814 = vmatpush2.msra.mxu0 0.0
    %815 = vmatprep.subr.mxu0 0.0
    %816 = vmatpush2.msra.mxu0 0.0
    %817 = vmatprep.subr.mxu0 0.0
    %818 = vmatpush2.msra.mxu0 0.0
    %819 = vmatprep.subr.mxu0 0.0
    %820 = vmatpush2.msra.mxu0 0.0
    %821 = vmatprep.subr.mxu0 0.0
    %822 = vmatpush2.msra.mxu0 0.0
    %823 = vmatprep.subr.mxu0 0.0
    %824 = vmatpush2.msra.mxu0 0.0
    %825 = vmatprep.subr.mxu0 0.0
    %826 = vmatpush2.msra.mxu0 0.0
    %827 = vmatprep.subr.mxu0 0.0
    %828 = vmatpush2.msra.mxu0 0.0
    %829 = vmatprep.subr.mxu0 0.0
    %830 = vmatpush2.msra.mxu0 0.0
    %831 = vmatprep.subr.mxu0 0.0
    %832 = vmatpush2.msra.mxu0 0.0
    %833 = vmatprep.mubr.f32.mxu0 0.0
    %834 = vmatmul.mubr.f32.gmra.mxu0 %v767
    %v835 = vpop.f32.mrf.mxu0
    %v836 = vadd.f32 0.0, %v835
    %v837 = vpop.f32.mrf.mxu0
    %838 = vdwg.mxu0
    %839 = vrot.lane.b32.xlu0 %v239, 56
    %v840 = vpop.permute.xlu0 %839
    %v843 = vsel %vm245, %v762, 0
    %845 = vmatprep.subr.mxu0 0.0
    %846 = vmatpush1.msra.mxu0 0.0
    %847 = vmatprep.subr.mxu0 0.0
    %848 = vmatpush1.msra.mxu0 0.0
    %849 = vmatprep.subr.mxu0 0.0
    %850 = vmatpush1.msra.mxu0 0.0
    %851 = vmatprep.subr.mxu0 0.0
    %852 = vmatpush1.msra.mxu0 0.0
    %853 = vmatprep.subr.mxu0 0.0
    %854 = vmatpush1.msra.mxu0 0.0
    %855 = vmatprep.subr.mxu0 0.0
    %856 = vmatpush1.msra.mxu0 0.0
    %857 = vmatprep.subr.mxu0 0.0
    %858 = vmatpush1.msra.mxu0 0.0
    %859 = vmatprep.subr.mxu0 0.0
    %860 = vmatpush1.msra.mxu0 0.0
    %861 = vmatprep.subr.mxu0 0.0
    %862 = vmatpush1.msra.mxu0 0.0
    %863 = vmatprep.subr.mxu0 0.0
    %864 = vmatpush1.msra.mxu0 0.0
    %865 = vmatprep.subr.mxu0 0.0
    %866 = vmatpush1.msra.mxu0 0.0
    %867 = vmatprep.subr.mxu0 0.0
    %868 = vmatpush1.msra.mxu0 0.0
    %869 = vmatprep.subr.mxu0 0.0
    %870 = vmatpush1.msra.mxu0 0.0
    %871 = vmatprep.subr.mxu0 0.0
    %872 = vmatpush1.msra.mxu0 0.0
    %873 = vmatprep.subr.mxu0 0.0
    %874 = vmatpush1.msra.mxu0 0.0
    %875 = vmatprep.subr.mxu0 0.0
    %876 = vmatpush1.msra.mxu0 %v840
    %877 = vmatprep.subr.mxu0 0.0
    %878 = vmatpush2.msra.mxu0 0.0
    %879 = vmatprep.subr.mxu0 0.0
    %880 = vmatpush2.msra.mxu0 0.0
    %881 = vmatprep.subr.mxu0 0.0
    %882 = vmatpush2.msra.mxu0 0.0
    %883 = vmatprep.subr.mxu0 0.0
    %884 = vmatpush2.msra.mxu0 0.0
    %885 = vmatprep.subr.mxu0 0.0
    %886 = vmatpush2.msra.mxu0 0.0
    %887 = vmatprep.subr.mxu0 0.0
    %888 = vmatpush2.msra.mxu0 0.0
    %889 = vmatprep.subr.mxu0 0.0
    %890 = vmatpush2.msra.mxu0 0.0
    %891 = vmatprep.subr.mxu0 0.0
    %892 = vmatpush2.msra.mxu0 0.0
    %893 = vmatprep.subr.mxu0 0.0
    %894 = vmatpush2.msra.mxu0 0.0
    %895 = vmatprep.subr.mxu0 0.0
    %896 = vmatpush2.msra.mxu0 0.0
    %897 = vmatprep.subr.mxu0 0.0
    %898 = vmatpush2.msra.mxu0 0.0
    %899 = vmatprep.subr.mxu0 0.0
    %900 = vmatpush2.msra.mxu0 0.0
    %901 = vmatprep.subr.mxu0 0.0
    %902 = vmatpush2.msra.mxu0 0.0
    %903 = vmatprep.subr.mxu0 0.0
    %904 = vmatpush2.msra.mxu0 0.0
    %905 = vmatprep.subr.mxu0 0.0
    %906 = vmatpush2.msra.mxu0 0.0
    %907 = vmatprep.subr.mxu0 0.0
    %908 = vmatpush2.msra.mxu0 0.0
    %909 = vmatprep.mubr.f32.mxu0 0.0
    %910 = vmatmul.mubr.f32.gmra.mxu0 %v843
    %v911 = vpop.f32.mrf.mxu0
    %v912 = vadd.f32 0.0, %v911
    %v913 = vpop.f32.mrf.mxu0
    %914 = vdwg.mxu0
    %916 = vrot.lane.b32.xlu0 %v137, 32
    %v917 = vpop.permute.xlu0 %916
    %v920 = vsel %vm245, %v836, 0
    %v923 = vsel %vm245, %v912, 0
    %925 = vmatprep.subr.mxu0 0.0
    %926 = vmatpush1.msra.mxu0 0.0
    %927 = vmatprep.subr.mxu0 0.0
    %928 = vmatpush1.msra.mxu0 0.0
    %929 = vmatprep.subr.mxu0 0.0
    %930 = vmatpush1.msra.mxu0 0.0
    %931 = vmatprep.subr.mxu0 0.0
    %932 = vmatpush1.msra.mxu0 0.0
    %933 = vmatprep.subr.mxu0 0.0
    %934 = vmatpush1.msra.mxu0 0.0
    %935 = vmatprep.subr.mxu0 0.0
    %936 = vmatpush1.msra.mxu0 0.0
    %937 = vmatprep.subr.mxu0 0.0
    %938 = vmatpush1.msra.mxu0 0.0
    %939 = vmatprep.subr.mxu0 0.0
    %940 = vmatpush1.msra.mxu0 0.0
    %941 = vmatprep.subr.mxu0 0.0
    %942 = vmatpush1.msra.mxu0 0.0
    %943 = vmatprep.subr.mxu0 0.0
    %944 = vmatpush1.msra.mxu0 0.0
    %945 = vmatprep.subr.mxu0 0.0
    %946 = vmatpush1.msra.mxu0 0.0
    %947 = vmatprep.subr.mxu0 0.0
    %948 = vmatpush1.msra.mxu0 0.0
    %949 = vmatprep.subr.mxu0 0.0
    %950 = vmatpush1.msra.mxu0 0.0
    %951 = vmatprep.subr.mxu0 0.0
    %952 = vmatpush1.msra.mxu0 0.0
    %953 = vmatprep.subr.mxu0 0.0
    %954 = vmatpush1.msra.mxu0 0.0
    %955 = vmatprep.subr.mxu0 0.0
    %956 = vmatpush1.msra.mxu0 %v917
    %957 = vmatprep.subr.mxu0 0.0
    %958 = vmatpush2.msra.mxu0 0.0
    %959 = vmatprep.subr.mxu0 0.0
    %960 = vmatpush2.msra.mxu0 0.0
    %961 = vmatprep.subr.mxu0 0.0
    %962 = vmatpush2.msra.mxu0 0.0
    %963 = vmatprep.subr.mxu0 0.0
    %964 = vmatpush2.msra.mxu0 0.0
    %965 = vmatprep.subr.mxu0 0.0
    %966 = vmatpush2.msra.mxu0 0.0
    %967 = vmatprep.subr.mxu0 0.0
    %968 = vmatpush2.msra.mxu0 0.0
    %969 = vmatprep.subr.mxu0 0.0
    %970 = vmatpush2.msra.mxu0 0.0
    %971 = vmatprep.subr.mxu0 0.0
    %972 = vmatpush2.msra.mxu0 0.0
    %973 = vmatprep.subr.mxu0 0.0
    %974 = vmatpush2.msra.mxu0 0.0
    %975 = vmatprep.subr.mxu0 0.0
    %976 = vmatpush2.msra.mxu0 0.0
    %977 = vmatprep.subr.mxu0 0.0
    %978 = vmatpush2.msra.mxu0 0.0
    %979 = vmatprep.subr.mxu0 0.0
    %980 = vmatpush2.msra.mxu0 0.0
    %981 = vmatprep.subr.mxu0 0.0
    %982 = vmatpush2.msra.mxu0 0.0
    %983 = vmatprep.subr.mxu0 0.0
    %984 = vmatpush2.msra.mxu0 0.0
    %985 = vmatprep.subr.mxu0 0.0
    %986 = vmatpush2.msra.mxu0 0.0
    %987 = vmatprep.subr.mxu0 0.0
    %988 = vmatpush2.msra.mxu0 0.0
    %989 = vmatprep.mubr.f32.mxu0 0.0
    %990 = vmatmul.mubr.f32.gmra.mxu0 %v920
    %v991 = vpop.f32.mrf.mxu0
    %v992 = vadd.f32 0.0, %v991
    %v993 = vpop.f32.mrf.mxu0
    %994 = vmatprep.mubr.f32.mxu0 0.0
    %995 = vmatmul.mubr.f32.gmra.mxu0 %v923
    %v996 = vpop.f32.mrf.mxu0
    %v997 = vadd.f32 0.0, %v996
    %v998 = vpop.f32.mrf.mxu0
    %999 = vdwg.mxu0
    %1001 = vrot.lane.b32.xlu0 %v136, 32
    %v1002 = vpop.permute.xlu0 %1001
    %v1005 = vsel %vm245, %v502, 0
    %v1008 = vsel %vm245, %v578, 0
    %1010 = vmatprep.subr.mxu0 0.0
    %1011 = vmatpush1.msra.mxu0 0.0
    %1012 = vmatprep.subr.mxu0 0.0
    %1013 = vmatpush1.msra.mxu0 0.0
    %1014 = vmatprep.subr.mxu0 0.0
    %1015 = vmatpush1.msra.mxu0 0.0
    %1016 = vmatprep.subr.mxu0 0.0
    %1017 = vmatpush1.msra.mxu0 0.0
    %1018 = vmatprep.subr.mxu0 0.0
    %1019 = vmatpush1.msra.mxu0 0.0
    %1020 = vmatprep.subr.mxu0 0.0
    %1021 = vmatpush1.msra.mxu0 0.0
    %1022 = vmatprep.subr.mxu0 0.0
    %1023 = vmatpush1.msra.mxu0 0.0
    %1024 = vmatprep.subr.mxu0 0.0
    %1025 = vmatpush1.msra.mxu0 0.0
    %1026 = vmatprep.subr.mxu0 0.0
    %1027 = vmatpush1.msra.mxu0 0.0
    %1028 = vmatprep.subr.mxu0 0.0
    %1029 = vmatpush1.msra.mxu0 0.0
    %1030 = vmatprep.subr.mxu0 0.0
    %1031 = vmatpush1.msra.mxu0 0.0
    %1032 = vmatprep.subr.mxu0 0.0
    %1033 = vmatpush1.msra.mxu0 0.0
    %1034 = vmatprep.subr.mxu0 0.0
    %1035 = vmatpush1.msra.mxu0 0.0
    %1036 = vmatprep.subr.mxu0 0.0
    %1037 = vmatpush1.msra.mxu0 0.0
    %1038 = vmatprep.subr.mxu0 0.0
    %1039 = vmatpush1.msra.mxu0 0.0
    %1040 = vmatprep.subr.mxu0 0.0
    %1041 = vmatpush1.msra.mxu0 %v1002
    %1042 = vmatprep.subr.mxu0 0.0
    %1043 = vmatpush2.msra.mxu0 0.0
    %1044 = vmatprep.subr.mxu0 0.0
    %1045 = vmatpush2.msra.mxu0 0.0
    %1046 = vmatprep.subr.mxu0 0.0
    %1047 = vmatpush2.msra.mxu0 0.0
    %1048 = vmatprep.subr.mxu0 0.0
    %1049 = vmatpush2.msra.mxu0 0.0
    %1050 = vmatprep.subr.mxu0 0.0
    %1051 = vmatpush2.msra.mxu0 0.0
    %1052 = vmatprep.subr.mxu0 0.0
    %1053 = vmatpush2.msra.mxu0 0.0
    %1054 = vmatprep.subr.mxu0 0.0
    %1055 = vmatpush2.msra.mxu0 0.0
    %1056 = vmatprep.subr.mxu0 0.0
    %1057 = vmatpush2.msra.mxu0 0.0
    %1058 = vmatprep.subr.mxu0 0.0
    %1059 = vmatpush2.msra.mxu0 0.0
    %1060 = vmatprep.subr.mxu0 0.0
    %1061 = vmatpush2.msra.mxu0 0.0
    %1062 = vmatprep.subr.mxu0 0.0
    %1063 = vmatpush2.msra.mxu0 0.0
    %1064 = vmatprep.subr.mxu0 0.0
    %1065 = vmatpush2.msra.mxu0 0.0
    %1066 = vmatprep.subr.mxu0 0.0
    %1067 = vmatpush2.msra.mxu0 0.0
    %1068 = vmatprep.subr.mxu0 0.0
    %1069 = vmatpush2.msra.mxu0 0.0
    %1070 = vmatprep.subr.mxu0 0.0
    %1071 = vmatpush2.msra.mxu0 0.0
    %1072 = vmatprep.subr.mxu0 0.0
    %1073 = vmatpush2.msra.mxu0 0.0
    %1074 = vmatprep.mubr.f32.mxu0 0.0
    %1075 = vmatmul.mubr.f32.gmra.mxu0 %v1005
    %v1076 = vpop.f32.mrf.mxu0
    %v1077 = vadd.f32 %v992, %v1076
    %v1078 = vpop.f32.mrf.mxu0
    %1079 = vmatprep.mubr.f32.mxu0 0.0
    %1080 = vmatmul.mubr.f32.gmra.mxu0 %v1008
    %v1081 = vpop.f32.mrf.mxu0
    %v1082 = vadd.f32 %v997, %v1081
    %v1083 = vpop.f32.mrf.mxu0
    %1084 = vdwg.mxu0
    %1085 = vrot.lane.b32.xlu0 %v234, 112
    %v1086 = vpop.permute.xlu0 %1085
    %1087 = vrot.lane.b32.xlu0 %v234, 80
    %v1088 = vpop.permute.xlu0 %1087
    %v1089 = vsel %vm245, %v1086, 0
    %v1091 = vsel %vm245, %v1088, 0
    %1093 = vmatprep.subr.mxu0 0.0
    %1094 = vmatpush1.xpose.msra.mxu0 0.0
    %1095 = vmatprep.subr.mxu0 0.0
    %1096 = vmatpush1.xpose.msra.mxu0 0.0
    %1097 = vmatprep.subr.mxu0 0.0
    %1098 = vmatpush1.xpose.msra.mxu0 0.0
    %1099 = vmatprep.subr.mxu0 0.0
    %1100 = vmatpush1.xpose.msra.mxu0 0.0
    %1101 = vmatprep.subr.mxu0 0.0
    %1102 = vmatpush1.xpose.msra.mxu0 0.0
    %1103 = vmatprep.subr.mxu0 0.0
    %1104 = vmatpush1.xpose.msra.mxu0 0.0
    %1105 = vmatprep.subr.mxu0 0.0
    %1106 = vmatpush1.xpose.msra.mxu0 0.0
    %1107 = vmatprep.subr.mxu0 0.0
    %1108 = vmatpush1.xpose.msra.mxu0 0.0
    %1109 = vmatprep.subr.mxu0 0.0
    %1110 = vmatpush1.xpose.msra.mxu0 0.0
    %1111 = vmatprep.subr.mxu0 0.0
    %1112 = vmatpush1.xpose.msra.mxu0 0.0
    %1113 = vmatprep.subr.mxu0 0.0
    %1114 = vmatpush1.xpose.msra.mxu0 0.0
    %1115 = vmatprep.subr.mxu0 0.0
    %1116 = vmatpush1.xpose.msra.mxu0 0.0
    %1117 = vmatprep.subr.mxu0 0.0
    %1118 = vmatpush1.xpose.msra.mxu0 0.0
    %1119 = vmatprep.subr.mxu0 0.0
    %1120 = vmatpush1.xpose.msra.mxu0 0.0
    %1121 = vmatprep.subr.mxu0 0.0
    %1122 = vmatpush1.xpose.msra.mxu0 0.0
    %1123 = vmatprep.subr.mxu0 0.0
    %1124 = vmatpush1.xpose.msra.mxu0 %v1091
    %1125 = vmatprep.subr.mxu0 0.0
    %1126 = vmatpush2.xpose.msra.mxu0 0.0
    %1127 = vmatprep.subr.mxu0 0.0
    %1128 = vmatpush2.xpose.msra.mxu0 0.0
    %1129 = vmatprep.subr.mxu0 0.0
    %1130 = vmatpush2.xpose.msra.mxu0 0.0
    %1131 = vmatprep.subr.mxu0 0.0
    %1132 = vmatpush2.xpose.msra.mxu0 0.0
    %1133 = vmatprep.subr.mxu0 0.0
    %1134 = vmatpush2.xpose.msra.mxu0 0.0
    %1135 = vmatprep.subr.mxu0 0.0
    %1136 = vmatpush2.xpose.msra.mxu0 0.0
    %1137 = vmatprep.subr.mxu0 0.0
    %1138 = vmatpush2.xpose.msra.mxu0 0.0
    %1139 = vmatprep.subr.mxu0 0.0
    %1140 = vmatpush2.xpose.msra.mxu0 0.0
    %1141 = vmatprep.subr.mxu0 0.0
    %1142 = vmatpush2.xpose.msra.mxu0 0.0
    %1143 = vmatprep.subr.mxu0 0.0
    %1144 = vmatpush2.xpose.msra.mxu0 0.0
    %1145 = vmatprep.subr.mxu0 0.0
    %1146 = vmatpush2.xpose.msra.mxu0 0.0
    %1147 = vmatprep.subr.mxu0 0.0
    %1148 = vmatpush2.xpose.msra.mxu0 0.0
    %1149 = vmatprep.subr.mxu0 0.0
    %1150 = vmatpush2.xpose.msra.mxu0 0.0
    %1151 = vmatprep.subr.mxu0 0.0
    %1152 = vmatpush2.xpose.msra.mxu0 0.0
    %1153 = vmatprep.subr.mxu0 0.0
    %1154 = vmatpush2.xpose.msra.mxu0 0.0
    %1155 = vmatprep.subr.mxu0 0.0
    %1156 = vmatpush2.xpose.msra.mxu0 0.0
    %1157 = vmatprep.mubr.f32.mxu0 0.0
    %1158 = vmatmul.mubr.f32.gmra.mxu0 %v1089
    %v1159 = vpop.f32.mrf.mxu0
    %v1160 = vadd.f32 0.0, %v1159
    %v1161 = vpop.f32.mrf.mxu0
    %1162 = vdwg.mxu0
    %1163 = vrot.lane.b32.xlu0 %v239, 112
    %v1164 = vpop.permute.xlu0 %1163
    %1165 = vrot.lane.b32.xlu0 %v239, 80
    %v1166 = vpop.permute.xlu0 %1165
    %v1167 = vsel %vm245, %v1164, 0
    %v1169 = vsel %vm245, %v1166, 0
    %1171 = vmatprep.subr.mxu0 0.0
    %1172 = vmatpush1.xpose.msra.mxu0 0.0
    %1173 = vmatprep.subr.mxu0 0.0
    %1174 = vmatpush1.xpose.msra.mxu0 0.0
    %1175 = vmatprep.subr.mxu0 0.0
    %1176 = vmatpush1.xpose.msra.mxu0 0.0
    %1177 = vmatprep.subr.mxu0 0.0
    %1178 = vmatpush1.xpose.msra.mxu0 0.0
    %1179 = vmatprep.subr.mxu0 0.0
    %1180 = vmatpush1.xpose.msra.mxu0 0.0
    %1181 = vmatprep.subr.mxu0 0.0
    %1182 = vmatpush1.xpose.msra.mxu0 0.0
    %1183 = vmatprep.subr.mxu0 0.0
    %1184 = vmatpush1.xpose.msra.mxu0 0.0
    %1185 = vmatprep.subr.mxu0 0.0
    %1186 = vmatpush1.xpose.msra.mxu0 0.0
    %1187 = vmatprep.subr.mxu0 0.0
    %1188 = vmatpush1.xpose.msra.mxu0 0.0
    %1189 = vmatprep.subr.mxu0 0.0
    %1190 = vmatpush1.xpose.msra.mxu0 0.0
    %1191 = vmatprep.subr.mxu0 0.0
    %1192 = vmatpush1.xpose.msra.mxu0 0.0
    %1193 = vmatprep.subr.mxu0 0.0
    %1194 = vmatpush1.xpose.msra.mxu0 0.0
    %1195 = vmatprep.subr.mxu0 0.0
    %1196 = vmatpush1.xpose.msra.mxu0 0.0
    %1197 = vmatprep.subr.mxu0 0.0
    %1198 = vmatpush1.xpose.msra.mxu0 0.0
    %1199 = vmatprep.subr.mxu0 0.0
    %1200 = vmatpush1.xpose.msra.mxu0 0.0
    %1201 = vmatprep.subr.mxu0 0.0
    %1202 = vmatpush1.xpose.msra.mxu0 %v1169
    %1203 = vmatprep.subr.mxu0 0.0
    %1204 = vmatpush2.xpose.msra.mxu0 0.0
    %1205 = vmatprep.subr.mxu0 0.0
    %1206 = vmatpush2.xpose.msra.mxu0 0.0
    %1207 = vmatprep.subr.mxu0 0.0
    %1208 = vmatpush2.xpose.msra.mxu0 0.0
    %1209 = vmatprep.subr.mxu0 0.0
    %1210 = vmatpush2.xpose.msra.mxu0 0.0
    %1211 = vmatprep.subr.mxu0 0.0
    %1212 = vmatpush2.xpose.msra.mxu0 0.0
    %1213 = vmatprep.subr.mxu0 0.0
    %1214 = vmatpush2.xpose.msra.mxu0 0.0
    %1215 = vmatprep.subr.mxu0 0.0
    %1216 = vmatpush2.xpose.msra.mxu0 0.0
    %1217 = vmatprep.subr.mxu0 0.0
    %1218 = vmatpush2.xpose.msra.mxu0 0.0
    %1219 = vmatprep.subr.mxu0 0.0
    %1220 = vmatpush2.xpose.msra.mxu0 0.0
    %1221 = vmatprep.subr.mxu0 0.0
    %1222 = vmatpush2.xpose.msra.mxu0 0.0
    %1223 = vmatprep.subr.mxu0 0.0
    %1224 = vmatpush2.xpose.msra.mxu0 0.0
    %1225 = vmatprep.subr.mxu0 0.0
    %1226 = vmatpush2.xpose.msra.mxu0 0.0
    %1227 = vmatprep.subr.mxu0 0.0
    %1228 = vmatpush2.xpose.msra.mxu0 0.0
    %1229 = vmatprep.subr.mxu0 0.0
    %1230 = vmatpush2.xpose.msra.mxu0 0.0
    %1231 = vmatprep.subr.mxu0 0.0
    %1232 = vmatpush2.xpose.msra.mxu0 0.0
    %1233 = vmatprep.subr.mxu0 0.0
    %1234 = vmatpush2.xpose.msra.mxu0 0.0
    %1235 = vmatprep.mubr.f32.mxu0 0.0
    %1236 = vmatmul.mubr.f32.gmra.mxu0 %v1167
    %v1237 = vpop.f32.mrf.mxu0
    %v1238 = vadd.f32 0.0, %v1237
    %v1239 = vpop.f32.mrf.mxu0
    %1240 = vdwg.mxu0
    %v1241 = vmul.f32 %v1160, 0.35355338
    %v1242 = vmul.f32 %v1238, 0.35355338
    %v1243 = vadd.f32 %v1241, %v403
    %v1244 = vadd.f32 %v1242, %v403
    %v1245 = vsel %vm245, %v1243, -inf
    %1246 = vmax.xlane.f32.xlu0 %v1245
    %v1247 = vpop.xlane.xlu0 %1246
    %v1248 = vsel %vm245, %v1244, -inf
    %1249 = vmax.xlane.f32.xlu0 %v1248
    %v1250 = vpop.xlane.xlu0 %1249
    %v1251 = vsub.f32 %v1243, %v1247
    %v1252 = vsub.f32 %v1244, %v1250
    %v1253 = vmul.f32 %v1251, 1.442695
    %v1254 = vpow.pop %v1253
    %v1255 = vmul.f32 %v1252, 1.442695
    %v1256 = vpow.pop %v1255
    %v1257 = vsel %vm245, %v1254, 0.0
    %1258 = vadd.xlane.f32.xlu0 %v1257
    %v1259 = vpop.xlane.xlu0 %1258
    %v1260 = vsel %vm245, %v1256, 0.0
    %1261 = vadd.xlane.f32.xlu0 %v1260
    %v1262 = vpop.xlane.xlu0 %1261
    %v1263 = vrcp.pop %v1259
    %v1264 = vrcp.pop %v1262
    %v1265 = vmul.f32 %v1254, %v1263
    %v1266 = vmul.f32 %v1256, %v1264
    %1267 = vrot.lane.b32.xlu0 %v234, 48
    %v1268 = vpop.permute.xlu0 %1267
    %v1271 = vsel %vm245, %v1265, 0
    %1273 = vmatprep.subr.mxu0 0.0
    %1274 = vmatpush1.msra.mxu0 0.0
    %1275 = vmatprep.subr.mxu0 0.0
    %1276 = vmatpush1.msra.mxu0 0.0
    %1277 = vmatprep.subr.mxu0 0.0
    %1278 = vmatpush1.msra.mxu0 0.0
    %1279 = vmatprep.subr.mxu0 0.0
    %1280 = vmatpush1.msra.mxu0 0.0
    %1281 = vmatprep.subr.mxu0 0.0
    %1282 = vmatpush1.msra.mxu0 0.0
    %1283 = vmatprep.subr.mxu0 0.0
    %1284 = vmatpush1.msra.mxu0 0.0
    %1285 = vmatprep.subr.mxu0 0.0
    %1286 = vmatpush1.msra.mxu0 0.0
    %1287 = vmatprep.subr.mxu0 0.0
    %1288 = vmatpush1.msra.mxu0 0.0
    %1289 = vmatprep.subr.mxu0 0.0
    %1290 = vmatpush1.msra.mxu0 0.0
    %1291 = vmatprep.subr.mxu0 0.0
    %1292 = vmatpush1.msra.mxu0 0.0
    %1293 = vmatprep.subr.mxu0 0.0
    %1294 = vmatpush1.msra.mxu0 0.0
    %1295 = vmatprep.subr.mxu0 0.0
    %1296 = vmatpush1.msra.mxu0 0.0
    %1297 = vmatprep.subr.mxu0 0.0
    %1298 = vmatpush1.msra.mxu0 0.0
    %1299 = vmatprep.subr.mxu0 0.0
    %1300 = vmatpush1.msra.mxu0 0.0
    %1301 = vmatprep.subr.mxu0 0.0
    %1302 = vmatpush1.msra.mxu0 0.0
    %1303 = vmatprep.subr.mxu0 0.0
    %1304 = vmatpush1.msra.mxu0 %v1268
    %1305 = vmatprep.subr.mxu0 0.0
    %1306 = vmatpush2.msra.mxu0 0.0
    %1307 = vmatprep.subr.mxu0 0.0
    %1308 = vmatpush2.msra.mxu0 0.0
    %1309 = vmatprep.subr.mxu0 0.0
    %1310 = vmatpush2.msra.mxu0 0.0
    %1311 = vmatprep.subr.mxu0 0.0
    %1312 = vmatpush2.msra.mxu0 0.0
    %1313 = vmatprep.subr.mxu0 0.0
    %1314 = vmatpush2.msra.mxu0 0.0
    %1315 = vmatprep.subr.mxu0 0.0
    %1316 = vmatpush2.msra.mxu0 0.0
    %1317 = vmatprep.subr.mxu0 0.0
    %1318 = vmatpush2.msra.mxu0 0.0
    %1319 = vmatprep.subr.mxu0 0.0
    %1320 = vmatpush2.msra.mxu0 0.0
    %1321 = vmatprep.subr.mxu0 0.0
    %1322 = vmatpush2.msra.mxu0 0.0
    %1323 = vmatprep.subr.mxu0 0.0
    %1324 = vmatpush2.msra.mxu0 0.0
    %1325 = vmatprep.subr.mxu0 0.0
    %1326 = vmatpush2.msra.mxu0 0.0
    %1327 = vmatprep.subr.mxu0 0.0
    %1328 = vmatpush2.msra.mxu0 0.0
    %1329 = vmatprep.subr.mxu0 0.0
    %1330 = vmatpush2.msra.mxu0 0.0
    %1331 = vmatprep.subr.mxu0 0.0
    %1332 = vmatpush2.msra.mxu0 0.0
    %1333 = vmatprep.subr.mxu0 0.0
    %1334 = vmatpush2.msra.mxu0 0.0
    %1335 = vmatprep.subr.mxu0 0.0
    %1336 = vmatpush2.msra.mxu0 0.0
    %1337 = vmatprep.mubr.f32.mxu0 0.0
    %1338 = vmatmul.mubr.f32.gmra.mxu0 %v1271
    %v1339 = vpop.f32.mrf.mxu0
    %v1340 = vadd.f32 0.0, %v1339
    %v1341 = vpop.f32.mrf.mxu0
    %1342 = vdwg.mxu0
    %1343 = vrot.lane.b32.xlu0 %v239, 48
    %v1344 = vpop.permute.xlu0 %1343
    %v1347 = vsel %vm245, %v1266, 0
    %1349 = vmatprep.subr.mxu0 0.0
    %1350 = vmatpush1.msra.mxu0 0.0
    %1351 = vmatprep.subr.mxu0 0.0
    %1352 = vmatpush1.msra.mxu0 0.0
    %1353 = vmatprep.subr.mxu0 0.0
    %1354 = vmatpush1.msra.mxu0 0.0
    %1355 = vmatprep.subr.mxu0 0.0
    %1356 = vmatpush1.msra.mxu0 0.0
    %1357 = vmatprep.subr.mxu0 0.0
    %1358 = vmatpush1.msra.mxu0 0.0
    %1359 = vmatprep.subr.mxu0 0.0
    %1360 = vmatpush1.msra.mxu0 0.0
    %1361 = vmatprep.subr.mxu0 0.0
    %1362 = vmatpush1.msra.mxu0 0.0
    %1363 = vmatprep.subr.mxu0 0.0
    %1364 = vmatpush1.msra.mxu0 0.0
    %1365 = vmatprep.subr.mxu0 0.0
    %1366 = vmatpush1.msra.mxu0 0.0
    %1367 = vmatprep.subr.mxu0 0.0
    %1368 = vmatpush1.msra.mxu0 0.0
    %1369 = vmatprep.subr.mxu0 0.0
    %1370 = vmatpush1.msra.mxu0 0.0
    %1371 = vmatprep.subr.mxu0 0.0
    %1372 = vmatpush1.msra.mxu0 0.0
    %1373 = vmatprep.subr.mxu0 0.0
    %1374 = vmatpush1.msra.mxu0 0.0
    %1375 = vmatprep.subr.mxu0 0.0
    %1376 = vmatpush1.msra.mxu0 0.0
    %1377 = vmatprep.subr.mxu0 0.0
    %1378 = vmatpush1.msra.mxu0 0.0
    %1379 = vmatprep.subr.mxu0 0.0
    %1380 = vmatpush1.msra.mxu0 %v1344
    %1381 = vmatprep.subr.mxu0 0.0
    %1382 = vmatpush2.msra.mxu0 0.0
    %1383 = vmatprep.subr.mxu0 0.0
    %1384 = vmatpush2.msra.mxu0 0.0
    %1385 = vmatprep.subr.mxu0 0.0
    %1386 = vmatpush2.msra.mxu0 0.0
    %1387 = vmatprep.subr.mxu0 0.0
    %1388 = vmatpush2.msra.mxu0 0.0
    %1389 = vmatprep.subr.mxu0 0.0
    %1390 = vmatpush2.msra.mxu0 0.0
    %1391 = vmatprep.subr.mxu0 0.0
    %1392 = vmatpush2.msra.mxu0 0.0
    %1393 = vmatprep.subr.mxu0 0.0
    %1394 = vmatpush2.msra.mxu0 0.0
    %1395 = vmatprep.subr.mxu0 0.0
    %1396 = vmatpush2.msra.mxu0 0.0
    %1397 = vmatprep.subr.mxu0 0.0
    %1398 = vmatpush2.msra.mxu0 0.0
    %1399 = vmatprep.subr.mxu0 0.0
    %1400 = vmatpush2.msra.mxu0 0.0
    %1401 = vmatprep.subr.mxu0 0.0
    %1402 = vmatpush2.msra.mxu0 0.0
    %1403 = vmatprep.subr.mxu0 0.0
    %1404 = vmatpush2.msra.mxu0 0.0
    %1405 = vmatprep.subr.mxu0 0.0
    %1406 = vmatpush2.msra.mxu0 0.0
    %1407 = vmatprep.subr.mxu0 0.0
    %1408 = vmatpush2.msra.mxu0 0.0
    %1409 = vmatprep.subr.mxu0 0.0
    %1410 = vmatpush2.msra.mxu0 0.0
    %1411 = vmatprep.subr.mxu0 0.0
    %1412 = vmatpush2.msra.mxu0 0.0
    %1413 = vmatprep.mubr.f32.mxu0 0.0
    %1414 = vmatmul.mubr.f32.gmra.mxu0 %v1347
    %v1415 = vpop.f32.mrf.mxu0
    %v1416 = vadd.f32 0.0, %v1415
    %v1417 = vpop.f32.mrf.mxu0
    %1418 = vdwg.mxu0
    %1420 = vrot.lane.b32.xlu0 %v138, 32
    %v1421 = vpop.permute.xlu0 %1420
    %v1424 = vsel %vm245, %v1340, 0
    %v1427 = vsel %vm245, %v1416, 0
    %1429 = vmatprep.subr.mxu0 0.0
    %1430 = vmatpush1.msra.mxu0 0.0
    %1431 = vmatprep.subr.mxu0 0.0
    %1432 = vmatpush1.msra.mxu0 0.0
    %1433 = vmatprep.subr.mxu0 0.0
    %1434 = vmatpush1.msra.mxu0 0.0
    %1435 = vmatprep.subr.mxu0 0.0
    %1436 = vmatpush1.msra.mxu0 0.0
    %1437 = vmatprep.subr.mxu0 0.0
    %1438 = vmatpush1.msra.mxu0 0.0
    %1439 = vmatprep.subr.mxu0 0.0
    %1440 = vmatpush1.msra.mxu0 0.0
    %1441 = vmatprep.subr.mxu0 0.0
    %1442 = vmatpush1.msra.mxu0 0.0
    %1443 = vmatprep.subr.mxu0 0.0
    %1444 = vmatpush1.msra.mxu0 0.0
    %1445 = vmatprep.subr.mxu0 0.0
    %1446 = vmatpush1.msra.mxu0 0.0
    %1447 = vmatprep.subr.mxu0 0.0
    %1448 = vmatpush1.msra.mxu0 0.0
    %1449 = vmatprep.subr.mxu0 0.0
    %1450 = vmatpush1.msra.mxu0 0.0
    %1451 = vmatprep.subr.mxu0 0.0
    %1452 = vmatpush1.msra.mxu0 0.0
    %1453 = vmatprep.subr.mxu0 0.0
    %1454 = vmatpush1.msra.mxu0 0.0
    %1455 = vmatprep.subr.mxu0 0.0
    %1456 = vmatpush1.msra.mxu0 0.0
    %1457 = vmatprep.subr.mxu0 0.0
    %1458 = vmatpush1.msra.mxu0 0.0
    %1459 = vmatprep.subr.mxu0 0.0
    %1460 = vmatpush1.msra.mxu0 %v1421
    %1461 = vmatprep.subr.mxu0 0.0
    %1462 = vmatpush2.msra.mxu0 0.0
    %1463 = vmatprep.subr.mxu0 0.0
    %1464 = vmatpush2.msra.mxu0 0.0
    %1465 = vmatprep.subr.mxu0 0.0
    %1466 = vmatpush2.msra.mxu0 0.0
    %1467 = vmatprep.subr.mxu0 0.0
    %1468 = vmatpush2.msra.mxu0 0.0
    %1469 = vmatprep.subr.mxu0 0.0
    %1470 = vmatpush2.msra.mxu0 0.0
    %1471 = vmatprep.subr.mxu0 0.0
    %1472 = vmatpush2.msra.mxu0 0.0
    %1473 = vmatprep.subr.mxu0 0.0
    %1474 = vmatpush2.msra.mxu0 0.0
    %1475 = vmatprep.subr.mxu0 0.0
    %1476 = vmatpush2.msra.mxu0 0.0
    %1477 = vmatprep.subr.mxu0 0.0
    %1478 = vmatpush2.msra.mxu0 0.0
    %1479 = vmatprep.subr.mxu0 0.0
    %1480 = vmatpush2.msra.mxu0 0.0
    %1481 = vmatprep.subr.mxu0 0.0
    %1482 = vmatpush2.msra.mxu0 0.0
    %1483 = vmatprep.subr.mxu0 0.0
    %1484 = vmatpush2.msra.mxu0 0.0
    %1485 = vmatprep.subr.mxu0 0.0
    %1486 = vmatpush2.msra.mxu0 0.0
    %1487 = vmatprep.subr.mxu0 0.0
    %1488 = vmatpush2.msra.mxu0 0.0
    %1489 = vmatprep.subr.mxu0 0.0
    %1490 = vmatpush2.msra.mxu0 0.0
    %1491 = vmatprep.subr.mxu0 0.0
    %1492 = vmatpush2.msra.mxu0 0.0
    %1493 = vmatprep.mubr.f32.mxu0 0.0
    %1494 = vmatmul.mubr.f32.gmra.mxu0 %v1424
    %v1495 = vpop.f32.mrf.mxu0
    %v1496 = vadd.f32 0.0, %v1495
    %v1497 = vpop.f32.mrf.mxu0
    %1498 = vmatprep.mubr.f32.mxu0 0.0
    %1499 = vmatmul.mubr.f32.gmra.mxu0 %v1427
    %v1500 = vpop.f32.mrf.mxu0
    %v1501 = vadd.f32 0.0, %v1500
    %v1502 = vpop.f32.mrf.mxu0
    %1503 = vdwg.mxu0
    %v1504 = vadd.f32 %v1077, %v1496
    %v1505 = vadd.f32 %v1082, %v1501
    %1506 = vrot.lane.b32.xlu0 %v234, 104
    %v1507 = vpop.permute.xlu0 %1506
    %1508 = vrot.lane.b32.xlu0 %v234, 72
    %v1509 = vpop.permute.xlu0 %1508
    %v1510 = vsel %vm245, %v1507, 0
    %v1512 = vsel %vm245, %v1509, 0
    %1514 = vmatprep.subr.mxu0 0.0
    %1515 = vmatpush1.xpose.msra.mxu0 0.0
    %1516 = vmatprep.subr.mxu0 0.0
    %1517 = vmatpush1.xpose.msra.mxu0 0.0
    %1518 = vmatprep.subr.mxu0 0.0
    %1519 = vmatpush1.xpose.msra.mxu0 0.0
    %1520 = vmatprep.subr.mxu0 0.0
    %1521 = vmatpush1.xpose.msra.mxu0 0.0
    %1522 = vmatprep.subr.mxu0 0.0
    %1523 = vmatpush1.xpose.msra.mxu0 0.0
    %1524 = vmatprep.subr.mxu0 0.0
    %1525 = vmatpush1.xpose.msra.mxu0 0.0
    %1526 = vmatprep.subr.mxu0 0.0
    %1527 = vmatpush1.xpose.msra.mxu0 0.0
    %1528 = vmatprep.subr.mxu0 0.0
    %1529 = vmatpush1.xpose.msra.mxu0 0.0
    %1530 = vmatprep.subr.mxu0 0.0
    %1531 = vmatpush1.xpose.msra.mxu0 0.0
    %1532 = vmatprep.subr.mxu0 0.0
    %1533 = vmatpush1.xpose.msra.mxu0 0.0
    %1534 = vmatprep.subr.mxu0 0.0
    %1535 = vmatpush1.xpose.msra.mxu0 0.0
    %1536 = vmatprep.subr.mxu0 0.0
    %1537 = vmatpush1.xpose.msra.mxu0 0.0
    %1538 = vmatprep.subr.mxu0 0.0
    %1539 = vmatpush1.xpose.msra.mxu0 0.0
    %1540 = vmatprep.subr.mxu0 0.0
    %1541 = vmatpush1.xpose.msra.mxu0 0.0
    %1542 = vmatprep.subr.mxu0 0.0
    %1543 = vmatpush1.xpose.msra.mxu0 0.0
    %1544 = vmatprep.subr.mxu0 0.0
    %1545 = vmatpush1.xpose.msra.mxu0 %v1512
    %1546 = vmatprep.subr.mxu0 0.0
    %1547 = vmatpush2.xpose.msra.mxu0 0.0
    %1548 = vmatprep.subr.mxu0 0.0
    %1549 = vmatpush2.xpose.msra.mxu0 0.0
    %1550 = vmatprep.subr.mxu0 0.0
    %1551 = vmatpush2.xpose.msra.mxu0 0.0
    %1552 = vmatprep.subr.mxu0 0.0
    %1553 = vmatpush2.xpose.msra.mxu0 0.0
    %1554 = vmatprep.subr.mxu0 0.0
    %1555 = vmatpush2.xpose.msra.mxu0 0.0
    %1556 = vmatprep.subr.mxu0 0.0
    %1557 = vmatpush2.xpose.msra.mxu0 0.0
    %1558 = vmatprep.subr.mxu0 0.0
    %1559 = vmatpush2.xpose.msra.mxu0 0.0
    %1560 = vmatprep.subr.mxu0 0.0
    %1561 = vmatpush2.xpose.msra.mxu0 0.0
    %1562 = vmatprep.subr.mxu0 0.0
    %1563 = vmatpush2.xpose.msra.mxu0 0.0
    %1564 = vmatprep.subr.mxu0 0.0
    %1565 = vmatpush2.xpose.msra.mxu0 0.0
    %1566 = vmatprep.subr.mxu0 0.0
    %1567 = vmatpush2.xpose.msra.mxu0 0.0
    %1568 = vmatprep.subr.mxu0 0.0
    %1569 = vmatpush2.xpose.msra.mxu0 0.0
    %1570 = vmatprep.subr.mxu0 0.0
    %1571 = vmatpush2.xpose.msra.mxu0 0.0
    %1572 = vmatprep.subr.mxu0 0.0
    %1573 = vmatpush2.xpose.msra.mxu0 0.0
    %1574 = vmatprep.subr.mxu0 0.0
    %1575 = vmatpush2.xpose.msra.mxu0 0.0
    %1576 = vmatprep.subr.mxu0 0.0
    %1577 = vmatpush2.xpose.msra.mxu0 0.0
    %1578 = vmatprep.mubr.f32.mxu0 0.0
    %1579 = vmatmul.mubr.f32.gmra.mxu0 %v1510
    %v1580 = vpop.f32.mrf.mxu0
    %v1581 = vadd.f32 0.0, %v1580
    %v1582 = vpop.f32.mrf.mxu0
    %1583 = vdwg.mxu0
    %1584 = vrot.lane.b32.xlu0 %v239, 104
    %v1585 = vpop.permute.xlu0 %1584
    %1586 = vrot.lane.b32.xlu0 %v239, 72
    %v1587 = vpop.permute.xlu0 %1586
    %v1588 = vsel %vm245, %v1585, 0
    %v1590 = vsel %vm245, %v1587, 0
    %1592 = vmatprep.subr.mxu0 0.0
    %1593 = vmatpush1.xpose.msra.mxu0 0.0
    %1594 = vmatprep.subr.mxu0 0.0
    %1595 = vmatpush1.xpose.msra.mxu0 0.0
    %1596 = vmatprep.subr.mxu0 0.0
    %1597 = vmatpush1.xpose.msra.mxu0 0.0
    %1598 = vmatprep.subr.mxu0 0.0
    %1599 = vmatpush1.xpose.msra.mxu0 0.0
    %1600 = vmatprep.subr.mxu0 0.0
    %1601 = vmatpush1.xpose.msra.mxu0 0.0
    %1602 = vmatprep.subr.mxu0 0.0
    %1603 = vmatpush1.xpose.msra.mxu0 0.0
    %1604 = vmatprep.subr.mxu0 0.0
    %1605 = vmatpush1.xpose.msra.mxu0 0.0
    %1606 = vmatprep.subr.mxu0 0.0
    %1607 = vmatpush1.xpose.msra.mxu0 0.0
    %1608 = vmatprep.subr.mxu0 0.0
    %1609 = vmatpush1.xpose.msra.mxu0 0.0
    %1610 = vmatprep.subr.mxu0 0.0
    %1611 = vmatpush1.xpose.msra.mxu0 0.0
    %1612 = vmatprep.subr.mxu0 0.0
    %1613 = vmatpush1.xpose.msra.mxu0 0.0
    %1614 = vmatprep.subr.mxu0 0.0
    %1615 = vmatpush1.xpose.msra.mxu0 0.0
    %1616 = vmatprep.subr.mxu0 0.0
    %1617 = vmatpush1.xpose.msra.mxu0 0.0
    %1618 = vmatprep.subr.mxu0 0.0
    %1619 = vmatpush1.xpose.msra.mxu0 0.0
    %1620 = vmatprep.subr.mxu0 0.0
    %1621 = vmatpush1.xpose.msra.mxu0 0.0
    %1622 = vmatprep.subr.mxu0 0.0
    %1623 = vmatpush1.xpose.msra.mxu0 %v1590
    %1624 = vmatprep.subr.mxu0 0.0
    %1625 = vmatpush2.xpose.msra.mxu0 0.0
    %1626 = vmatprep.subr.mxu0 0.0
    %1627 = vmatpush2.xpose.msra.mxu0 0.0
    %1628 = vmatprep.subr.mxu0 0.0
    %1629 = vmatpush2.xpose.msra.mxu0 0.0
    %1630 = vmatprep.subr.mxu0 0.0
    %1631 = vmatpush2.xpose.msra.mxu0 0.0
    %1632 = vmatprep.subr.mxu0 0.0
    %1633 = vmatpush2.xpose.msra.mxu0 0.0
    %1634 = vmatprep.subr.mxu0 0.0
    %1635 = vmatpush2.xpose.msra.mxu0 0.0
    %1636 = vmatprep.subr.mxu0 0.0
    %1637 = vmatpush2.xpose.msra.mxu0 0.0
    %1638 = vmatprep.subr.mxu0 0.0
    %1639 = vmatpush2.xpose.msra.mxu0 0.0
    %1640 = vmatprep.subr.mxu0 0.0
    %1641 = vmatpush2.xpose.msra.mxu0 0.0
    %1642 = vmatprep.subr.mxu0 0.0
    %1643 = vmatpush2.xpose.msra.mxu0 0.0
    %1644 = vmatprep.subr.mxu0 0.0
    %1645 = vmatpush2.xpose.msra.mxu0 0.0
    %1646 = vmatprep.subr.mxu0 0.0
    %1647 = vmatpush2.xpose.msra.mxu0 0.0
    %1648 = vmatprep.subr.mxu0 0.0
    %1649 = vmatpush2.xpose.msra.mxu0 0.0
    %1650 = vmatprep.subr.mxu0 0.0
    %1651 = vmatpush2.xpose.msra.mxu0 0.0
    %1652 = vmatprep.subr.mxu0 0.0
    %1653 = vmatpush2.xpose.msra.mxu0 0.0
    %1654 = vmatprep.subr.mxu0 0.0
    %1655 = vmatpush2.xpose.msra.mxu0 0.0
    %1656 = vmatprep.mubr.f32.mxu0 0.0
    %1657 = vmatmul.mubr.f32.gmra.mxu0 %v1588
    %v1658 = vpop.f32.mrf.mxu0
    %v1659 = vadd.f32 0.0, %v1658
    %v1660 = vpop.f32.mrf.mxu0
    %1661 = vdwg.mxu0
    %v1662 = vmul.f32 %v1581, 0.35355338
    %v1663 = vmul.f32 %v1659, 0.35355338
    %v1664 = vadd.f32 %v1662, %v403
    %v1665 = vadd.f32 %v1663, %v403
    %v1666 = vsel %vm245, %v1664, -inf
    %1667 = vmax.xlane.f32.xlu0 %v1666
    %v1668 = vpop.xlane.xlu0 %1667
    %v1669 = vsel %vm245, %v1665, -inf
    %1670 = vmax.xlane.f32.xlu0 %v1669
    %v1671 = vpop.xlane.xlu0 %1670
    %v1672 = vsub.f32 %v1664, %v1668
    %v1673 = vsub.f32 %v1665, %v1671
    %v1674 = vmul.f32 %v1672, 1.442695
    %v1675 = vpow.pop %v1674
    %v1676 = vmul.f32 %v1673, 1.442695
    %v1677 = vpow.pop %v1676
    %v1678 = vsel %vm245, %v1675, 0.0
    %1679 = vadd.xlane.f32.xlu0 %v1678
    %v1680 = vpop.xlane.xlu0 %1679
    %v1681 = vsel %vm245, %v1677, 0.0
    %1682 = vadd.xlane.f32.xlu0 %v1681
    %v1683 = vpop.xlane.xlu0 %1682
    %v1684 = vrcp.pop %v1680
    %v1685 = vrcp.pop %v1683
    %v1686 = vmul.f32 %v1675, %v1684
    %v1687 = vmul.f32 %v1677, %v1685
    %1688 = vrot.lane.b32.xlu0 %v234, 40
    %v1689 = vpop.permute.xlu0 %1688
    %v1692 = vsel %vm245, %v1686, 0
    %1694 = vmatprep.subr.mxu0 0.0
    %1695 = vmatpush1.msra.mxu0 0.0
    %1696 = vmatprep.subr.mxu0 0.0
    %1697 = vmatpush1.msra.mxu0 0.0
    %1698 = vmatprep.subr.mxu0 0.0
    %1699 = vmatpush1.msra.mxu0 0.0
    %1700 = vmatprep.subr.mxu0 0.0
    %1701 = vmatpush1.msra.mxu0 0.0
    %1702 = vmatprep.subr.mxu0 0.0
    %1703 = vmatpush1.msra.mxu0 0.0
    %1704 = vmatprep.subr.mxu0 0.0
    %1705 = vmatpush1.msra.mxu0 0.0
    %1706 = vmatprep.subr.mxu0 0.0
    %1707 = vmatpush1.msra.mxu0 0.0
    %1708 = vmatprep.subr.mxu0 0.0
    %1709 = vmatpush1.msra.mxu0 0.0
    %1710 = vmatprep.subr.mxu0 0.0
    %1711 = vmatpush1.msra.mxu0 0.0
    %1712 = vmatprep.subr.mxu0 0.0
    %1713 = vmatpush1.msra.mxu0 0.0
    %1714 = vmatprep.subr.mxu0 0.0
    %1715 = vmatpush1.msra.mxu0 0.0
    %1716 = vmatprep.subr.mxu0 0.0
    %1717 = vmatpush1.msra.mxu0 0.0
    %1718 = vmatprep.subr.mxu0 0.0
    %1719 = vmatpush1.msra.mxu0 0.0
    %1720 = vmatprep.subr.mxu0 0.0
    %1721 = vmatpush1.msra.mxu0 0.0
    %1722 = vmatprep.subr.mxu0 0.0
    %1723 = vmatpush1.msra.mxu0 0.0
    %1724 = vmatprep.subr.mxu0 0.0
    %1725 = vmatpush1.msra.mxu0 %v1689
    %1726 = vmatprep.subr.mxu0 0.0
    %1727 = vmatpush2.msra.mxu0 0.0
    %1728 = vmatprep.subr.mxu0 0.0
    %1729 = vmatpush2.msra.mxu0 0.0
    %1730 = vmatprep.subr.mxu0 0.0
    %1731 = vmatpush2.msra.mxu0 0.0
    %1732 = vmatprep.subr.mxu0 0.0
    %1733 = vmatpush2.msra.mxu0 0.0
    %1734 = vmatprep.subr.mxu0 0.0
    %1735 = vmatpush2.msra.mxu0 0.0
    %1736 = vmatprep.subr.mxu0 0.0
    %1737 = vmatpush2.msra.mxu0 0.0
    %1738 = vmatprep.subr.mxu0 0.0
    %1739 = vmatpush2.msra.mxu0 0.0
    %1740 = vmatprep.subr.mxu0 0.0
    %1741 = vmatpush2.msra.mxu0 0.0
    %1742 = vmatprep.subr.mxu0 0.0
    %1743 = vmatpush2.msra.mxu0 0.0
    %1744 = vmatprep.subr.mxu0 0.0
    %1745 = vmatpush2.msra.mxu0 0.0
    %1746 = vmatprep.subr.mxu0 0.0
    %1747 = vmatpush2.msra.mxu0 0.0
    %1748 = vmatprep.subr.mxu0 0.0
    %1749 = vmatpush2.msra.mxu0 0.0
    %1750 = vmatprep.subr.mxu0 0.0
    %1751 = vmatpush2.msra.mxu0 0.0
    %1752 = vmatprep.subr.mxu0 0.0
    %1753 = vmatpush2.msra.mxu0 0.0
    %1754 = vmatprep.subr.mxu0 0.0
    %1755 = vmatpush2.msra.mxu0 0.0
    %1756 = vmatprep.subr.mxu0 0.0
    %1757 = vmatpush2.msra.mxu0 0.0
    %1758 = vmatprep.mubr.f32.mxu0 0.0
    %1759 = vmatmul.mubr.f32.gmra.mxu0 %v1692
    %v1760 = vpop.f32.mrf.mxu0
    %v1761 = vadd.f32 0.0, %v1760
    %v1762 = vpop.f32.mrf.mxu0
    %1763 = vdwg.mxu0
    %1764 = vrot.lane.b32.xlu0 %v239, 40
    %v1765 = vpop.permute.xlu0 %1764
    %v1768 = vsel %vm245, %v1687, 0
    %1770 = vmatprep.subr.mxu0 0.0
    %1771 = vmatpush1.msra.mxu0 0.0
    %1772 = vmatprep.subr.mxu0 0.0
    %1773 = vmatpush1.msra.mxu0 0.0
    %1774 = vmatprep.subr.mxu0 0.0
    %1775 = vmatpush1.msra.mxu0 0.0
    %1776 = vmatprep.subr.mxu0 0.0
    %1777 = vmatpush1.msra.mxu0 0.0
    %1778 = vmatprep.subr.mxu0 0.0
    %1779 = vmatpush1.msra.mxu0 0.0
    %1780 = vmatprep.subr.mxu0 0.0
    %1781 = vmatpush1.msra.mxu0 0.0
    %1782 = vmatprep.subr.mxu0 0.0
    %1783 = vmatpush1.msra.mxu0 0.0
    %1784 = vmatprep.subr.mxu0 0.0
    %1785 = vmatpush1.msra.mxu0 0.0
    %1786 = vmatprep.subr.mxu0 0.0
    %1787 = vmatpush1.msra.mxu0 0.0
    %1788 = vmatprep.subr.mxu0 0.0
    %1789 = vmatpush1.msra.mxu0 0.0
    %1790 = vmatprep.subr.mxu0 0.0
    %1791 = vmatpush1.msra.mxu0 0.0
    %1792 = vmatprep.subr.mxu0 0.0
    %1793 = vmatpush1.msra.mxu0 0.0
    %1794 = vmatprep.subr.mxu0 0.0
    %1795 = vmatpush1.msra.mxu0 0.0
    %1796 = vmatprep.subr.mxu0 0.0
    %1797 = vmatpush1.msra.mxu0 0.0
    %1798 = vmatprep.subr.mxu0 0.0
    %1799 = vmatpush1.msra.mxu0 0.0
    %1800 = vmatprep.subr.mxu0 0.0
    %1801 = vmatpush1.msra.mxu0 %v1765
    %1802 = vmatprep.subr.mxu0 0.0
    %1803 = vmatpush2.msra.mxu0 0.0
    %1804 = vmatprep.subr.mxu0 0.0
    %1805 = vmatpush2.msra.mxu0 0.0
    %1806 = vmatprep.subr.mxu0 0.0
    %1807 = vmatpush2.msra.mxu0 0.0
    %1808 = vmatprep.subr.mxu0 0.0
    %1809 = vmatpush2.msra.mxu0 0.0
    %1810 = vmatprep.subr.mxu0 0.0
    %1811 = vmatpush2.msra.mxu0 0.0
    %1812 = vmatprep.subr.mxu0 0.0
    %1813 = vmatpush2.msra.mxu0 0.0
    %1814 = vmatprep.subr.mxu0 0.0
    %1815 = vmatpush2.msra.mxu0 0.0
    %1816 = vmatprep.subr.mxu0 0.0
    %1817 = vmatpush2.msra.mxu0 0.0
    %1818 = vmatprep.subr.mxu0 0.0
    %1819 = vmatpush2.msra.mxu0 0.0
    %1820 = vmatprep.subr.mxu0 0.0
    %1821 = vmatpush2.msra.mxu0 0.0
    %1822 = vmatprep.subr.mxu0 0.0
    %1823 = vmatpush2.msra.mxu0 0.0
    %1824 = vmatprep.subr.mxu0 0.0
    %1825 = vmatpush2.msra.mxu0 0.0
    %1826 = vmatprep.subr.mxu0 0.0
    %1827 = vmatpush2.msra.mxu0 0.0
    %1828 = vmatprep.subr.mxu0 0.0
    %1829 = vmatpush2.msra.mxu0 0.0
    %1830 = vmatprep.subr.mxu0 0.0
    %1831 = vmatpush2.msra.mxu0 0.0
    %1832 = vmatprep.subr.mxu0 0.0
    %1833 = vmatpush2.msra.mxu0 0.0
    %1834 = vmatprep.mubr.f32.mxu0 0.0
    %1835 = vmatmul.mubr.f32.gmra.mxu0 %v1768
    %v1836 = vpop.f32.mrf.mxu0
    %v1837 = vadd.f32 0.0, %v1836
    %v1838 = vpop.f32.mrf.mxu0
    %1839 = vdwg.mxu0
    %1841 = vrot.lane.b32.xlu0 %v139, 32
    %v1842 = vpop.permute.xlu0 %1841
    %v1845 = vsel %vm245, %v1761, 0
    %v1848 = vsel %vm245, %v1837, 0
    %1850 = vmatprep.subr.mxu0 0.0
    %1851 = vmatpush1.msra.mxu0 0.0
    %1852 = vmatprep.subr.mxu0 0.0
    %1853 = vmatpush1.msra.mxu0 0.0
    %1854 = vmatprep.subr.mxu0 0.0
    %1855 = vmatpush1.msra.mxu0 0.0
    %1856 = vmatprep.subr.mxu0 0.0
    %1857 = vmatpush1.msra.mxu0 0.0
    %1858 = vmatprep.subr.mxu0 0.0
    %1859 = vmatpush1.msra.mxu0 0.0
    %1860 = vmatprep.subr.mxu0 0.0
    %1861 = vmatpush1.msra.mxu0 0.0
    %1862 = vmatprep.subr.mxu0 0.0
    %1863 = vmatpush1.msra.mxu0 0.0
    %1864 = vmatprep.subr.mxu0 0.0
    %1865 = vmatpush1.msra.mxu0 0.0
    %1866 = vmatprep.subr.mxu0 0.0
    %1867 = vmatpush1.msra.mxu0 0.0
    %1868 = vmatprep.subr.mxu0 0.0
    %1869 = vmatpush1.msra.mxu0 0.0
    %1870 = vmatprep.subr.mxu0 0.0
    %1871 = vmatpush1.msra.mxu0 0.0
    %1872 = vmatprep.subr.mxu0 0.0
    %1873 = vmatpush1.msra.mxu0 0.0
    %1874 = vmatprep.subr.mxu0 0.0
    %1875 = vmatpush1.msra.mxu0 0.0
    %1876 = vmatprep.subr.mxu0 0.0
    %1877 = vmatpush1.msra.mxu0 0.0
    %1878 = vmatprep.subr.mxu0 0.0
    %1879 = vmatpush1.msra.mxu0 0.0
    %1880 = vmatprep.subr.mxu0 0.0
    %1881 = vmatpush1.msra.mxu0 %v1842
    %1882 = vmatprep.subr.mxu0 0.0
    %1883 = vmatpush2.msra.mxu0 0.0
    %1884 = vmatprep.subr.mxu0 0.0
    %1885 = vmatpush2.msra.mxu0 0.0
    %1886 = vmatprep.subr.mxu0 0.0
    %1887 = vmatpush2.msra.mxu0 0.0
    %1888 = vmatprep.subr.mxu0 0.0
    %1889 = vmatpush2.msra.mxu0 0.0
    %1890 = vmatprep.subr.mxu0 0.0
    %1891 = vmatpush2.msra.mxu0 0.0
    %1892 = vmatprep.subr.mxu0 0.0
    %1893 = vmatpush2.msra.mxu0 0.0
    %1894 = vmatprep.subr.mxu0 0.0
    %1895 = vmatpush2.msra.mxu0 0.0
    %1896 = vmatprep.subr.mxu0 0.0
    %1897 = vmatpush2.msra.mxu0 0.0
    %1898 = vmatprep.subr.mxu0 0.0
    %1899 = vmatpush2.msra.mxu0 0.0
    %1900 = vmatprep.subr.mxu0 0.0
    %1901 = vmatpush2.msra.mxu0 0.0
    %1902 = vmatprep.subr.mxu0 0.0
    %1903 = vmatpush2.msra.mxu0 0.0
    %1904 = vmatprep.subr.mxu0 0.0
    %1905 = vmatpush2.msra.mxu0 0.0
    %1906 = vmatprep.subr.mxu0 0.0
    %1907 = vmatpush2.msra.mxu0 0.0
    %1908 = vmatprep.subr.mxu0 0.0
    %1909 = vmatpush2.msra.mxu0 0.0
    %1910 = vmatprep.subr.mxu0 0.0
    %1911 = vmatpush2.msra.mxu0 0.0
    %1912 = vmatprep.subr.mxu0 0.0
    %1913 = vmatpush2.msra.mxu0 0.0
    %1914 = vmatprep.mubr.f32.mxu0 0.0
    %1915 = vmatmul.mubr.f32.gmra.mxu0 %v1845
    %v1916 = vpop.f32.mrf.mxu0
    %v1917 = vadd.f32 0.0, %v1916
    %v1918 = vpop.f32.mrf.mxu0
    %1919 = vmatprep.mubr.f32.mxu0 0.0
    %1920 = vmatmul.mubr.f32.gmra.mxu0 %v1848
    %v1921 = vpop.f32.mrf.mxu0
    %v1922 = vadd.f32 0.0, %v1921
    %v1923 = vpop.f32.mrf.mxu0
    %1924 = vdwg.mxu0
    %v1925 = vadd.f32 %v1504, %v1917
    %v1926 = vadd.f32 %v1505, %v1922
    %1928 = vrot.lane.b32.xlu0 %v141, 32
    %v1929 = vpop.permute.xlu0 %1928
    %v1931 = vadd.f32 %v1925, %v1929
    %v1932 = vadd.f32 %v1926, %v1929
    %v1933 = vadd.f32 %v121, %v1931
    %v1934 = vadd.f32 %v126, %v1932
    %v1935 = vsel %vm160, %v1933, 0.0
    %1936 = vadd.xlane.f32.xlu0 %v1935
    %v1937 = vpop.xlane.xlu0 %1936
    %v1938 = vsel %vm160, %v1934, 0.0
    %1939 = vadd.xlane.f32.xlu0 %v1938
    %v1940 = vpop.xlane.xlu0 %1939
    %v1941 = vrcp.pop 32.0
    %v1942 = vmul.f32 %v1937, %v1941
    %v1943 = vmul.f32 %v1940, %v1941
    %v1944 = vsub.f32 %v1933, %v1942
    %v1945 = vsub.f32 %v1934, %v1943
    %v1946 = vmul.f32 %v1944, %v1944
    %v1947 = vmul.f32 %v1945, %v1945
    %v1948 = vsel %vm160, %v1946, 0.0
    %1949 = vadd.xlane.f32.xlu0 %v1948
    %v1950 = vpop.xlane.xlu0 %1949
    %v1951 = vsel %vm160, %v1947, 0.0
    %1952 = vadd.xlane.f32.xlu0 %v1951
    %v1953 = vpop.xlane.xlu0 %1952
    %v1954 = vmul.f32 %v1950, %v1941
    %v1955 = vmul.f32 %v1953, %v1941
    %v1956 = vadd.f32 %v1954, 1e-05
    %v1957 = vadd.f32 %v1955, 1e-05
    %v1958 = vrsqrt.pop %v1956
    %v1959 = vrsqrt.pop %v1957
    %v1960 = vmul.f32 %v1944, %v1958
    %v1961 = vmul.f32 %v1945, %v1959
    %v1962 = vmul.f32 %v1960, %v142
    %v1963 = vmul.f32 %v1961, %v142
    %1965 = vrot.lane.b32.xlu0 %v142, 96
    %v1966 = vpop.permute.xlu0 %1965
    %v1968 = vadd.f32 %v1962, %v1966
    %v1969 = vadd.f32 %v1963, %v1966
    %v1971 = vsel %vm160, %v1968, 0
    %v1974 = vsel %vm160, %v1969, 0
    %1976 = vmatprep.subr.mxu0 0.0
    %1977 = vmatpush1.msra.mxu0 0.0
    %1978 = vmatprep.subr.mxu0 0.0
    %1979 = vmatpush1.msra.mxu0 0.0
    %1980 = vmatprep.subr.mxu0 0.0
    %1981 = vmatpush1.msra.mxu0 0.0
    %1982 = vmatprep.subr.mxu0 0.0
    %1983 = vmatpush1.msra.mxu0 0.0
    %1984 = vmatprep.subr.mxu0 0.0
    %1985 = vmatpush1.msra.mxu0 0.0
    %1986 = vmatprep.subr.mxu0 0.0
    %1987 = vmatpush1.msra.mxu0 0.0
    %1988 = vmatprep.subr.mxu0 0.0
    %1989 = vmatpush1.msra.mxu0 0.0
    %1990 = vmatprep.subr.mxu0 0.0
    %1991 = vmatpush1.msra.mxu0 0.0
    %1992 = vmatprep.subr.mxu0 0.0
    %1993 = vmatpush1.msra.mxu0 0.0
    %1994 = vmatprep.subr.mxu0 0.0
    %1995 = vmatpush1.msra.mxu0 0.0
    %1996 = vmatprep.subr.mxu0 0.0
    %1997 = vmatpush1.msra.mxu0 0.0
    %1998 = vmatprep.subr.mxu0 0.0
    %1999 = vmatpush1.msra.mxu0 0.0
    %2000 = vmatprep.subr.mxu0 0.0
    %2001 = vmatpush1.msra.mxu0 %v135
    %2002 = vmatprep.subr.mxu0 0.0
    %2003 = vmatpush1.msra.mxu0 %v134
    %2004 = vmatprep.subr.mxu0 0.0
    %2005 = vmatpush1.msra.mxu0 %v133
    %2006 = vmatprep.subr.mxu0 0.0
    %2007 = vmatpush1.msra.mxu0 %v132
    %2008 = vmatprep.subr.mxu0 0.0
    %2009 = vmatpush2.msra.mxu0 0.0
    %2010 = vmatprep.subr.mxu0 0.0
    %2011 = vmatpush2.msra.mxu0 0.0
    %2012 = vmatprep.subr.mxu0 0.0
    %2013 = vmatpush2.msra.mxu0 0.0
    %2014 = vmatprep.subr.mxu0 0.0
    %2015 = vmatpush2.msra.mxu0 0.0
    %2016 = vmatprep.subr.mxu0 0.0
    %2017 = vmatpush2.msra.mxu0 0.0
    %2018 = vmatprep.subr.mxu0 0.0
    %2019 = vmatpush2.msra.mxu0 0.0
    %2020 = vmatprep.subr.mxu0 0.0
    %2021 = vmatpush2.msra.mxu0 0.0
    %2022 = vmatprep.subr.mxu0 0.0
    %2023 = vmatpush2.msra.mxu0 0.0
    %2024 = vmatprep.subr.mxu0 0.0
    %2025 = vmatpush2.msra.mxu0 0.0
    %2026 = vmatprep.subr.mxu0 0.0
    %2027 = vmatpush2.msra.mxu0 0.0
    %2028 = vmatprep.subr.mxu0 0.0
    %2029 = vmatpush2.msra.mxu0 0.0
    %2030 = vmatprep.subr.mxu0 0.0
    %2031 = vmatpush2.msra.mxu0 0.0
    %2032 = vmatprep.subr.mxu0 0.0
    %2033 = vmatpush2.msra.mxu0 0.0
    %2034 = vmatprep.subr.mxu0 0.0
    %2035 = vmatpush2.msra.mxu0 0.0
    %2036 = vmatprep.subr.mxu0 0.0
    %2037 = vmatpush2.msra.mxu0 0.0
    %2038 = vmatprep.subr.mxu0 0.0
    %2039 = vmatpush2.msra.mxu0 0.0
    %2040 = vmatprep.mubr.f32.mxu0 0.0
    %2041 = vmatmul.mubr.f32.gmra.mxu0 %v1971
    %v2042 = vpop.f32.mrf.mxu0
    %v2043 = vadd.f32 %v140, %v2042
    %v2044 = vpop.f32.mrf.mxu0
    %2045 = vmatprep.mubr.f32.mxu0 0.0
    %2046 = vmatmul.mubr.f32.gmra.mxu0 %v1974
    %v2047 = vpop.f32.mrf.mxu0
    %v2048 = vadd.f32 %v140, %v2047
    %v2049 = vpop.f32.mrf.mxu0
    %2050 = vdwg.mxu0
    %v2051 = vmax.f32 %v2043, 0.0
    %v2052 = vmax.f32 %v2048, 0.0
    %2053 = vmatprep.subr.mxu0 0.0
    %2054 = vmatpush1.msra.mxu0 %v159
    %2055 = vmatprep.subr.mxu0 0.0
    %2056 = vmatpush1.msra.mxu0 %v158
    %2057 = vmatprep.subr.mxu0 0.0
    %2058 = vmatpush1.msra.mxu0 %v157
    %2059 = vmatprep.subr.mxu0 0.0
    %2060 = vmatpush1.msra.mxu0 %v156
    %2061 = vmatprep.subr.mxu0 0.0
    %2062 = vmatpush1.msra.mxu0 %v155
    %2063 = vmatprep.subr.mxu0 0.0
    %2064 = vmatpush1.msra.mxu0 %v154
    %2065 = vmatprep.subr.mxu0 0.0
    %2066 = vmatpush1.msra.mxu0 %v153
    %2067 = vmatprep.subr.mxu0 0.0
    %2068 = vmatpush1.msra.mxu0 %v152
    %2069 = vmatprep.subr.mxu0 0.0
    %2070 = vmatpush1.msra.mxu0 %v151
    %2071 = vmatprep.subr.mxu0 0.0
    %2072 = vmatpush1.msra.mxu0 %v150
    %2073 = vmatprep.subr.mxu0 0.0
    %2074 = vmatpush1.msra.mxu0 %v149
    %2075 = vmatprep.subr.mxu0 0.0
    %2076 = vmatpush1.msra.mxu0 %v148
    %2077 = vmatprep.subr.mxu0 0.0
    %2078 = vmatpush1.msra.mxu0 %v147
    %2079 = vmatprep.subr.mxu0 0.0
    %2080 = vmatpush1.msra.mxu0 %v146
    %2081 = vmatprep.subr.mxu0 0.0
    %2082 = vmatpush1.msra.mxu0 %v145
    %2083 = vmatprep.subr.mxu0 0.0
    %2084 = vmatpush1.msra.mxu0 %v144
    %2085 = vmatprep.subr.mxu0 0.0
    %2086 = vmatpush2.msra.mxu0 0.0
    %2087 = vmatprep.subr.mxu0 0.0
    %2088 = vmatpush2.msra.mxu0 0.0
    %2089 = vmatprep.subr.mxu0 0.0
    %2090 = vmatpush2.msra.mxu0 0.0
    %2091 = vmatprep.subr.mxu0 0.0
    %2092 = vmatpush2.msra.mxu0 0.0
    %2093 = vmatprep.subr.mxu0 0.0
    %2094 = vmatpush2.msra.mxu0 0.0
    %2095 = vmatprep.subr.mxu0 0.0
    %2096 = vmatpush2.msra.mxu0 0.0
    %2097 = vmatprep.subr.mxu0 0.0
    %2098 = vmatpush2.msra.mxu0 0.0
    %2099 = vmatprep.subr.mxu0 0.0
    %2100 = vmatpush2.msra.mxu0 0.0
    %2101 = vmatprep.subr.mxu0 0.0
    %2102 = vmatpush2.msra.mxu0 0.0
    %2103 = vmatprep.subr.mxu0 0.0
    %2104 = vmatpush2.msra.mxu0 0.0
    %2105 = vmatprep.subr.mxu0 0.0
    %2106 = vmatpush2.msra.mxu0 0.0
    %2107 = vmatprep.subr.mxu0 0.0
    %2108 = vmatpush2.msra.mxu0 0.0
    %2109 = vmatprep.subr.mxu0 0.0
    %2110 = vmatpush2.msra.mxu0 0.0
    %2111 = vmatprep.subr.mxu0 0.0
    %2112 = vmatpush2.msra.mxu0 0.0
    %2113 = vmatprep.subr.mxu0 0.0
    %2114 = vmatpush2.msra.mxu0 0.0
    %2115 = vmatprep.subr.mxu0 0.0
    %2116 = vmatpush2.msra.mxu0 0.0
    %2117 = vmatprep.mubr.f32.mxu0 0.0
    %2118 = vmatmul.mubr.f32.gmra.mxu0 %v2051
    %v2119 = vpop.f32.mrf.mxu0
    %v2120 = vadd.f32 %v143, %v2119
    %v2121 = vpop.f32.mrf.mxu0
    %2122 = vmatprep.mubr.f32.mxu0 0.0
    %2123 = vmatmul.mubr.f32.gmra.mxu0 %v2052
    %v2124 = vpop.f32.mrf.mxu0
    %v2125 = vadd.f32 %v143, %v2124
    %v2126 = vpop.f32.mrf.mxu0
    %2127 = vdwg.mxu0
    %v2128 = vadd.f32 %v1968, %v2120
    %v2129 = vadd.f32 %v1969, %v2125
    %v2130 = vsel %vm160, %v2128, 0.0
    %2131 = vadd.xlane.f32.xlu0 %v2130
    %v2132 = vpop.xlane.xlu0 %2131
    %v2133 = vsel %vm160, %v2129, 0.0
    %2134 = vadd.xlane.f32.xlu0 %v2133
    %v2135 = vpop.xlane.xlu0 %2134
    %v2136 = vmul.f32 %v2132, %v1941
    %v2137 = vmul.f32 %v2135, %v1941
    %v2138 = vsub.f32 %v2128, %v2136
    %v2139 = vsub.f32 %v2129, %v2137
    %v2140 = vmul.f32 %v2138, %v2138
    %v2141 = vmul.f32 %v2139, %v2139
    %v2142 = vsel %vm160, %v2140, 0.0
    %2143 = vadd.xlane.f32.xlu0 %v2142
    %v2144 = vpop.xlane.xlu0 %2143
    %v2145 = vsel %vm160, %v2141, 0.0
    %2146 = vadd.xlane.f32.xlu0 %v2145
    %v2147 = vpop.xlane.xlu0 %2146
    %v2148 = vmul.f32 %v2144, %v1941
    %v2149 = vmul.f32 %v2147, %v1941
    %v2150 = vadd.f32 %v2148, 1e-05
    %v2151 = vadd.f32 %v2149, 1e-05
    %v2152 = vrsqrt.pop %v2150
    %v2153 = vrsqrt.pop %v2151
    %v2154 = vmul.f32 %v2138, %v2152
    %v2155 = vmul.f32 %v2139, %v2153
    %2156 = vrot.lane.b32.xlu0 %v142, 64
    %v2157 = vpop.permute.xlu0 %2156
    %v2159 = vmul.f32 %v2154, %v2157
    %v2160 = vmul.f32 %v2155, %v2157
    %2161 = vrot.lane.b32.xlu0 %v142, 32
    %v2162 = vpop.permute.xlu0 %2161
    %v2164 = vadd.f32 %v2159, %v2162
    %v2165 = vadd.f32 %v2160, %v2162
    %s2166 = scalar_lea.vmem %s3, 80
    %v2167 = vld [vmem:[%s2166] sm:$0xff]
    %v2168 = vld [vmem:[%s2166 + $0x10] sm:$0xff]
    %v2169 = vld [vmem:[%s2166 + $0x20] sm:$0xff]
    %v2170 = vld [vmem:[%s2166 + $0x30] sm:$0xff]
    %v2171 = vld [vmem:[%s2166 + $0x8] sm:$0xff]
    %v2172 = vld [vmem:[%s2166 + $0x18] sm:$0xff]
    %v2173 = vld [vmem:[%s2166 + $0x28] sm:$0xff]
    %v2174 = vld [vmem:[%s2166 + $0x38] sm:$0xff]
    %v2175 = vld [vmem:[%s2166 + $0x40] ss:$0 sm:$0xff]
    %v2176 = vld [vmem:[%s2166 + $0x41] ss:$0 sm:$0xff]
    %v2177 = vld [vmem:[%s2166 + $0x42] ss:$0 sm:$0xff]
    %v2178 = vld [vmem:[%s2166 + $0x43] ss:$0 sm:$0xff]
    %s2179 = scalar_lea.vmem %s4, 128
    %v2180 = vld [vmem:[%s2179] sm:$0xff]
    %v2181 = vld [vmem:[%s2179 + $0x8] sm:$0xff]
    %v2182 = vld [vmem:[%s2179 + $0x10] sm:$0xff]
    %v2183 = vld [vmem:[%s2179 + $0x18] sm:$0xff]
    %v2184 = vld [vmem:[%s2179 + $0x20] sm:$0xff]
    %v2185 = vld [vmem:[%s2179 + $0x28] sm:$0xff]
    %v2186 = vld [vmem:[%s2179 + $0x30] sm:$0xff]
    %v2187 = vld [vmem:[%s2179 + $0x38] sm:$0xff]
    %v2188 = vld [vmem:[%s2179 + $0x40] sm:$0xff]
    %v2189 = vld [vmem:[%s2179 + $0x48] sm:$0xff]
    %v2190 = vld [vmem:[%s2179 + $0x50] sm:$0xff]
    %v2191 = vld [vmem:[%s2179 + $0x58] sm:$0xff]
    %v2192 = vld [vmem:[%s2179 + $0x60] sm:$0xff]
    %v2193 = vld [vmem:[%s2179 + $0x68] sm:$0xff]
    %v2194 = vld [vmem:[%s2179 + $0x70] sm:$0xff]
    %v2195 = vld [vmem:[%s2179 + $0x78] sm:$0xff]
    %v2197 = vsel %vm160, %v2164, 0
    %v2200 = vsel %vm160, %v2165, 0
    %2202 = vmatprep.subr.mxu0 0.0
    %2203 = vmatpush1.msra.mxu0 0.0
    %2204 = vmatprep.subr.mxu0 0.0
    %2205 = vmatpush1.msra.mxu0 0.0
    %2206 = vmatprep.subr.mxu0 0.0
    %2207 = vmatpush1.msra.mxu0 0.0
    %2208 = vmatprep.subr.mxu0 0.0
    %2209 = vmatpush1.msra.mxu0 0.0
    %2210 = vmatprep.subr.mxu0 0.0
    %2211 = vmatpush1.msra.mxu0 0.0
    %2212 = vmatprep.subr.mxu0 0.0
    %2213 = vmatpush1.msra.mxu0 0.0
    %2214 = vmatprep.subr.mxu0 0.0
    %2215 = vmatpush1.msra.mxu0 0.0
    %2216 = vmatprep.subr.mxu0 0.0
    %2217 = vmatpush1.msra.mxu0 0.0
    %2218 = vmatprep.subr.mxu0 0.0
    %2219 = vmatpush1.msra.mxu0 0.0
    %2220 = vmatprep.subr.mxu0 0.0
    %2221 = vmatpush1.msra.mxu0 0.0
    %2222 = vmatprep.subr.mxu0 0.0
    %2223 = vmatpush1.msra.mxu0 0.0
    %2224 = vmatprep.subr.mxu0 0.0
    %2225 = vmatpush1.msra.mxu0 0.0
    %2226 = vmatprep.subr.mxu0 0.0
    %2227 = vmatpush1.msra.mxu0 %v2174
    %2228 = vmatprep.subr.mxu0 0.0
    %2229 = vmatpush1.msra.mxu0 %v2173
    %2230 = vmatprep.subr.mxu0 0.0
    %2231 = vmatpush1.msra.mxu0 %v2172
    %2232 = vmatprep.subr.mxu0 0.0
    %2233 = vmatpush1.msra.mxu0 %v2171
    %2234 = vmatprep.subr.mxu0 0.0
    %2235 = vmatpush2.msra.mxu0 0.0
    %2236 = vmatprep.subr.mxu0 0.0
    %2237 = vmatpush2.msra.mxu0 0.0
    %2238 = vmatprep.subr.mxu0 0.0
    %2239 = vmatpush2.msra.mxu0 0.0
    %2240 = vmatprep.subr.mxu0 0.0
    %2241 = vmatpush2.msra.mxu0 0.0
    %2242 = vmatprep.subr.mxu0 0.0
    %2243 = vmatpush2.msra.mxu0 0.0
    %2244 = vmatprep.subr.mxu0 0.0
    %2245 = vmatpush2.msra.mxu0 0.0
    %2246 = vmatprep.subr.mxu0 0.0
    %2247 = vmatpush2.msra.mxu0 0.0
    %2248 = vmatprep.subr.mxu0 0.0
    %2249 = vmatpush2.msra.mxu0 0.0
    %2250 = vmatprep.subr.mxu0 0.0
    %2251 = vmatpush2.msra.mxu0 0.0
    %2252 = vmatprep.subr.mxu0 0.0
    %2253 = vmatpush2.msra.mxu0 0.0
    %2254 = vmatprep.subr.mxu0 0.0
    %2255 = vmatpush2.msra.mxu0 0.0
    %2256 = vmatprep.subr.mxu0 0.0
    %2257 = vmatpush2.msra.mxu0 0.0
    %2258 = vmatprep.subr.mxu0 0.0
    %2259 = vmatpush2.msra.mxu0 0.0
    %2260 = vmatprep.subr.mxu0 0.0
    %2261 = vmatpush2.msra.mxu0 0.0
    %2262 = vmatprep.subr.mxu0 0.0
    %2263 = vmatpush2.msra.mxu0 0.0
    %2264 = vmatprep.subr.mxu0 0.0
    %2265 = vmatpush2.msra.mxu0 0.0
    %2266 = vmatprep.mubr.f32.mxu0 0.0
    %2267 = vmatmul.mubr.f32.gmra.mxu0 %v2197
    %v2268 = vpop.f32.mrf.mxu0
    %v2269 = vadd.f32 %v2176, %v2268
    %v2270 = vpop.f32.mrf.mxu0
    %2271 = vmatprep.mubr.f32.mxu0 0.0
    %2272 = vmatmul.mubr.f32.gmra.mxu0 %v2200
    %v2273 = vpop.f32.mrf.mxu0
    %v2274 = vadd.f32 %v2176, %v2273
    %v2275 = vpop.f32.mrf.mxu0
    %2276 = vdwg.mxu0
    %2278 = vrot.lane.b32.xlu0 %v2269, 96
    %v2279 = vpop.permute.xlu0 %2278
    %v2280 = vsel %vm245, %v2269, 0
    %v2282 = vsel %vm245, %v2279, 0
    %2284 = vmatprep.subr.mxu0 0.0
    %2285 = vmatpush1.xpose.msra.mxu0 0.0
    %2286 = vmatprep.subr.mxu0 0.0
    %2287 = vmatpush1.xpose.msra.mxu0 0.0
    %2288 = vmatprep.subr.mxu0 0.0
    %2289 = vmatpush1.xpose.msra.mxu0 0.0
    %2290 = vmatprep.subr.mxu0 0.0
    %2291 = vmatpush1.xpose.msra.mxu0 0.0
    %2292 = vmatprep.subr.mxu0 0.0
    %2293 = vmatpush1.xpose.msra.mxu0 0.0
    %2294 = vmatprep.subr.mxu0 0.0
    %2295 = vmatpush1.xpose.msra.mxu0 0.0
    %2296 = vmatprep.subr.mxu0 0.0
    %2297 = vmatpush1.xpose.msra.mxu0 0.0
    %2298 = vmatprep.subr.mxu0 0.0
    %2299 = vmatpush1.xpose.msra.mxu0 0.0
    %2300 = vmatprep.subr.mxu0 0.0
    %2301 = vmatpush1.xpose.msra.mxu0 0.0
    %2302 = vmatprep.subr.mxu0 0.0
    %2303 = vmatpush1.xpose.msra.mxu0 0.0
    %2304 = vmatprep.subr.mxu0 0.0
    %2305 = vmatpush1.xpose.msra.mxu0 0.0
    %2306 = vmatprep.subr.mxu0 0.0
    %2307 = vmatpush1.xpose.msra.mxu0 0.0
    %2308 = vmatprep.subr.mxu0 0.0
    %2309 = vmatpush1.xpose.msra.mxu0 0.0
    %2310 = vmatprep.subr.mxu0 0.0
    %2311 = vmatpush1.xpose.msra.mxu0 0.0
    %2312 = vmatprep.subr.mxu0 0.0
    %2313 = vmatpush1.xpose.msra.mxu0 0.0
    %2314 = vmatprep.subr.mxu0 0.0
    %2315 = vmatpush1.xpose.msra.mxu0 %v2282
    %2316 = vmatprep.subr.mxu0 0.0
    %2317 = vmatpush2.xpose.msra.mxu0 0.0
    %2318 = vmatprep.subr.mxu0 0.0
    %2319 = vmatpush2.xpose.msra.mxu0 0.0
    %2320 = vmatprep.subr.mxu0 0.0
    %2321 = vmatpush2.xpose.msra.mxu0 0.0
    %2322 = vmatprep.subr.mxu0 0.0
    %2323 = vmatpush2.xpose.msra.mxu0 0.0
    %2324 = vmatprep.subr.mxu0 0.0
    %2325 = vmatpush2.xpose.msra.mxu0 0.0
    %2326 = vmatprep.subr.mxu0 0.0
    %2327 = vmatpush2.xpose.msra.mxu0 0.0
    %2328 = vmatprep.subr.mxu0 0.0
    %2329 = vmatpush2.xpose.msra.mxu0 0.0
    %2330 = vmatprep.subr.mxu0 0.0
    %2331 = vmatpush2.xpose.msra.mxu0 0.0
    %2332 = vmatprep.subr.mxu0 0.0
    %2333 = vmatpush2.xpose.msra.mxu0 0.0
    %2334 = vmatprep.subr.mxu0 0.0
    %2335 = vmatpush2.xpose.msra.mxu0 0.0
    %2336 = vmatprep.subr.mxu0 0.0
    %2337 = vmatpush2.xpose.msra.mxu0 0.0
    %2338 = vmatprep.subr.mxu0 0.0
    %2339 = vmatpush2.xpose.msra.mxu0 0.0
    %2340 = vmatprep.subr.mxu0 0.0
    %2341 = vmatpush2.xpose.msra.mxu0 0.0
    %2342 = vmatprep.subr.mxu0 0.0
    %2343 = vmatpush2.xpose.msra.mxu0 0.0
    %2344 = vmatprep.subr.mxu0 0.0
    %2345 = vmatpush2.xpose.msra.mxu0 0.0
    %2346 = vmatprep.subr.mxu0 0.0
    %2347 = vmatpush2.xpose.msra.mxu0 0.0
    %2348 = vmatprep.mubr.f32.mxu0 0.0
    %2349 = vmatmul.mubr.f32.gmra.mxu0 %v2280
    %v2350 = vpop.f32.mrf.mxu0
    %v2351 = vadd.f32 0.0, %v2350
    %v2352 = vpop.f32.mrf.mxu0
    %2353 = vdwg.mxu0
    %2355 = vrot.lane.b32.xlu0 %v2274, 96
    %v2356 = vpop.permute.xlu0 %2355
    %v2357 = vsel %vm245, %v2274, 0
    %v2359 = vsel %vm245, %v2356, 0
    %2361 = vmatprep.subr.mxu0 0.0
    %2362 = vmatpush1.xpose.msra.mxu0 0.0
    %2363 = vmatprep.subr.mxu0 0.0
    %2364 = vmatpush1.xpose.msra.mxu0 0.0
    %2365 = vmatprep.subr.mxu0 0.0
    %2366 = vmatpush1.xpose.msra.mxu0 0.0
    %2367 = vmatprep.subr.mxu0 0.0
    %2368 = vmatpush1.xpose.msra.mxu0 0.0
    %2369 = vmatprep.subr.mxu0 0.0
    %2370 = vmatpush1.xpose.msra.mxu0 0.0
    %2371 = vmatprep.subr.mxu0 0.0
    %2372 = vmatpush1.xpose.msra.mxu0 0.0
    %2373 = vmatprep.subr.mxu0 0.0
    %2374 = vmatpush1.xpose.msra.mxu0 0.0
    %2375 = vmatprep.subr.mxu0 0.0
    %2376 = vmatpush1.xpose.msra.mxu0 0.0
    %2377 = vmatprep.subr.mxu0 0.0
    %2378 = vmatpush1.xpose.msra.mxu0 0.0
    %2379 = vmatprep.subr.mxu0 0.0
    %2380 = vmatpush1.xpose.msra.mxu0 0.0
    %2381 = vmatprep.subr.mxu0 0.0
    %2382 = vmatpush1.xpose.msra.mxu0 0.0
    %2383 = vmatprep.subr.mxu0 0.0
    %2384 = vmatpush1.xpose.msra.mxu0 0.0
    %2385 = vmatprep.subr.mxu0 0.0
    %2386 = vmatpush1.xpose.msra.mxu0 0.0
    %2387 = vmatprep.subr.mxu0 0.0
    %2388 = vmatpush1.xpose.msra.mxu0 0.0
    %2389 = vmatprep.subr.mxu0 0.0
    %2390 = vmatpush1.xpose.msra.mxu0 0.0
    %2391 = vmatprep.subr.mxu0 0.0
    %2392 = vmatpush1.xpose.msra.mxu0 %v2359
    %2393 = vmatprep.subr.mxu0 0.0
    %2394 = vmatpush2.xpose.msra.mxu0 0.0
    %2395 = vmatprep.subr.mxu0 0.0
    %2396 = vmatpush2.xpose.msra.mxu0 0.0
    %2397 = vmatprep.subr.mxu0 0.0
    %2398 = vmatpush2.xpose.msra.mxu0 0.0
    %2399 = vmatprep.subr.mxu0 0.0
    %2400 = vmatpush2.xpose.msra.mxu0 0.0
    %2401 = vmatprep.subr.mxu0 0.0
    %2402 = vmatpush2.xpose.msra.mxu0 0.0
    %2403 = vmatprep.subr.mxu0 0.0
    %2404 = vmatpush2.xpose.msra.mxu0 0.0
    %2405 = vmatprep.subr.mxu0 0.0
    %2406 = vmatpush2.xpose.msra.mxu0 0.0
    %2407 = vmatprep.subr.mxu0 0.0
    %2408 = vmatpush2.xpose.msra.mxu0 0.0
    %2409 = vmatprep.subr.mxu0 0.0
    %2410 = vmatpush2.xpose.msra.mxu0 0.0
    %2411 = vmatprep.subr.mxu0 0.0
    %2412 = vmatpush2.xpose.msra.mxu0 0.0
    %2413 = vmatprep.subr.mxu0 0.0
    %2414 = vmatpush2.xpose.msra.mxu0 0.0
    %2415 = vmatprep.subr.mxu0 0.0
    %2416 = vmatpush2.xpose.msra.mxu0 0.0
    %2417 = vmatprep.subr.mxu0 0.0
    %2418 = vmatpush2.xpose.msra.mxu0 0.0
    %2419 = vmatprep.subr.mxu0 0.0
    %2420 = vmatpush2.xpose.msra.mxu0 0.0
    %2421 = vmatprep.subr.mxu0 0.0
    %2422 = vmatpush2.xpose.msra.mxu0 0.0
    %2423 = vmatprep.subr.mxu0 0.0
    %2424 = vmatpush2.xpose.msra.mxu0 0.0
    %2425 = vmatprep.mubr.f32.mxu0 0.0
    %2426 = vmatmul.mubr.f32.gmra.mxu0 %v2357
    %v2427 = vpop.f32.mrf.mxu0
    %v2428 = vadd.f32 0.0, %v2427
    %v2429 = vpop.f32.mrf.mxu0
    %2430 = vdwg.mxu0
    %v2431 = vmul.f32 %v2351, 0.35355338
    %v2432 = vmul.f32 %v2428, 0.35355338
    %v2433 = vsel %vm245, %v2431, -inf
    %2434 = vmax.xlane.f32.xlu0 %v2433
    %v2435 = vpop.xlane.xlu0 %2434
    %v2436 = vsel %vm245, %v2432, -inf
    %2437 = vmax.xlane.f32.xlu0 %v2436
    %v2438 = vpop.xlane.xlu0 %2437
    %v2439 = vsub.f32 %v2431, %v2435
    %v2440 = vsub.f32 %v2432, %v2438
    %v2441 = vmul.f32 %v2439, 1.442695
    %v2442 = vpow.pop %v2441
    %v2443 = vmul.f32 %v2440, 1.442695
    %v2444 = vpow.pop %v2443
    %v2445 = vsel %vm245, %v2442, 0.0
    %2446 = vadd.xlane.f32.xlu0 %v2445
    %v2447 = vpop.xlane.xlu0 %2446
    %v2448 = vsel %vm245, %v2444, 0.0
    %2449 = vadd.xlane.f32.xlu0 %v2448
    %v2450 = vpop.xlane.xlu0 %2449
    %v2451 = vrcp.pop %v2447
    %v2452 = vrcp.pop %v2450
    %v2453 = vmul.f32 %v2442, %v2451
    %v2454 = vmul.f32 %v2444, %v2452
    %2455 = vrot.lane.b32.xlu0 %v2269, 64
    %v2456 = vpop.permute.xlu0 %2455
    %v2459 = vsel %vm245, %v2453, 0
    %2461 = vmatprep.subr.mxu0 0.0
    %2462 = vmatpush1.msra.mxu0 0.0
    %2463 = vmatprep.subr.mxu0 0.0
    %2464 = vmatpush1.msra.mxu0 0.0
    %2465 = vmatprep.subr.mxu0 0.0
    %2466 = vmatpush1.msra.mxu0 0.0
    %2467 = vmatprep.subr.mxu0 0.0
    %2468 = vmatpush1.msra.mxu0 0.0
    %2469 = vmatprep.subr.mxu0 0.0
    %2470 = vmatpush1.msra.mxu0 0.0
    %2471 = vmatprep.subr.mxu0 0.0
    %2472 = vmatpush1.msra.mxu0 0.0
    %2473 = vmatprep.subr.mxu0 0.0
    %2474 = vmatpush1.msra.mxu0 0.0
    %2475 = vmatprep.subr.mxu0 0.0
    %2476 = vmatpush1.msra.mxu0 0.0
    %2477 = vmatprep.subr.mxu0 0.0
    %2478 = vmatpush1.msra.mxu0 0.0
    %2479 = vmatprep.subr.mxu0 0.0
    %2480 = vmatpush1.msra.mxu0 0.0
    %2481 = vmatprep.subr.mxu0 0.0
    %2482 = vmatpush1.msra.mxu0 0.0
    %2483 = vmatprep.subr.mxu0 0.0
    %2484 = vmatpush1.msra.mxu0 0.0
    %2485 = vmatprep.subr.mxu0 0.0
    %2486 = vmatpush1.msra.mxu0 0.0
    %2487 = vmatprep.subr.mxu0 0.0
    %2488 = vmatpush1.msra.mxu0 0.0
    %2489 = vmatprep.subr.mxu0 0.0
    %2490 = vmatpush1.msra.mxu0 0.0
    %2491 = vmatprep.subr.mxu0 0.0
    %2492 = vmatpush1.msra.mxu0 %v2456
    %2493 = vmatprep.subr.mxu0 0.0
    %2494 = vmatpush2.msra.mxu0 0.0
    %2495 = vmatprep.subr.mxu0 0.0
    %2496 = vmatpush2.msra.mxu0 0.0
    %2497 = vmatprep.subr.mxu0 0.0
    %2498 = vmatpush2.msra.mxu0 0.0
    %2499 = vmatprep.subr.mxu0 0.0
    %2500 = vmatpush2.msra.mxu0 0.0
    %2501 = vmatprep.subr.mxu0 0.0
    %2502 = vmatpush2.msra.mxu0 0.0
    %2503 = vmatprep.subr.mxu0 0.0
    %2504 = vmatpush2.msra.mxu0 0.0
    %2505 = vmatprep.subr.mxu0 0.0
    %2506 = vmatpush2.msra.mxu0 0.0
    %2507 = vmatprep.subr.mxu0 0.0
    %2508 = vmatpush2.msra.mxu0 0.0
    %2509 = vmatprep.subr.mxu0 0.0
    %2510 = vmatpush2.msra.mxu0 0.0
    %2511 = vmatprep.subr.mxu0 0.0
    %2512 = vmatpush2.msra.mxu0 0.0
    %2513 = vmatprep.subr.mxu0 0.0
    %2514 = vmatpush2.msra.mxu0 0.0
    %2515 = vmatprep.subr.mxu0 0.0
    %2516 = vmatpush2.msra.mxu0 0.0
    %2517 = vmatprep.subr.mxu0 0.0
    %2518 = vmatpush2.msra.mxu0 0.0
    %2519 = vmatprep.subr.mxu0 0.0
    %2520 = vmatpush2.msra.mxu0 0.0
    %2521 = vmatprep.subr.mxu0 0.0
    %2522 = vmatpush2.msra.mxu0 0.0
    %2523 = vmatprep.subr.mxu0 0.0
    %2524 = vmatpush2.msra.mxu0 0.0
    %2525 = vmatprep.mubr.f32.mxu0 0.0
    %2526 = vmatmul.mubr.f32.gmra.mxu0 %v2459
    %v2527 = vpop.f32.mrf.mxu0
    %v2528 = vadd.f32 0.0, %v2527
    %v2529 = vpop.f32.mrf.mxu0
    %2530 = vdwg.mxu0
    %2531 = vrot.lane.b32.xlu0 %v2274, 64
    %v2532 = vpop.permute.xlu0 %2531
    %v2535 = vsel %vm245, %v2454, 0
    %2537 = vmatprep.subr.mxu0 0.0
    %2538 = vmatpush1.msra.mxu0 0.0
    %2539 = vmatprep.subr.mxu0 0.0
    %2540 = vmatpush1.msra.mxu0 0.0
    %2541 = vmatprep.subr.mxu0 0.0
    %2542 = vmatpush1.msra.mxu0 0.0
    %2543 = vmatprep.subr.mxu0 0.0
    %2544 = vmatpush1.msra.mxu0 0.0
    %2545 = vmatprep.subr.mxu0 0.0
    %2546 = vmatpush1.msra.mxu0 0.0
    %2547 = vmatprep.subr.mxu0 0.0
    %2548 = vmatpush1.msra.mxu0 0.0
    %2549 = vmatprep.subr.mxu0 0.0
    %2550 = vmatpush1.msra.mxu0 0.0
    %2551 = vmatprep.subr.mxu0 0.0
    %2552 = vmatpush1.msra.mxu0 0.0
    %2553 = vmatprep.subr.mxu0 0.0
    %2554 = vmatpush1.msra.mxu0 0.0
    %2555 = vmatprep.subr.mxu0 0.0
    %2556 = vmatpush1.msra.mxu0 0.0
    %2557 = vmatprep.subr.mxu0 0.0
    %2558 = vmatpush1.msra.mxu0 0.0
    %2559 = vmatprep.subr.mxu0 0.0
    %2560 = vmatpush1.msra.mxu0 0.0
    %2561 = vmatprep.subr.mxu0 0.0
    %2562 = vmatpush1.msra.mxu0 0.0
    %2563 = vmatprep.subr.mxu0 0.0
    %2564 = vmatpush1.msra.mxu0 0.0
    %2565 = vmatprep.subr.mxu0 0.0
    %2566 = vmatpush1.msra.mxu0 0.0
    %2567 = vmatprep.subr.mxu0 0.0
    %2568 = vmatpush1.msra.mxu0 %v2532
    %2569 = vmatprep.subr.mxu0 0.0
    %2570 = vmatpush2.msra.mxu0 0.0
    %2571 = vmatprep.subr.mxu0 0.0
    %2572 = vmatpush2.msra.mxu0 0.0
    %2573 = vmatprep.subr.mxu0 0.0
    %2574 = vmatpush2.msra.mxu0 0.0
    %2575 = vmatprep.subr.mxu0 0.0
    %2576 = vmatpush2.msra.mxu0 0.0
    %2577 = vmatprep.subr.mxu0 0.0
    %2578 = vmatpush2.msra.mxu0 0.0
    %2579 = vmatprep.subr.mxu0 0.0
    %2580 = vmatpush2.msra.mxu0 0.0
    %2581 = vmatprep.subr.mxu0 0.0
    %2582 = vmatpush2.msra.mxu0 0.0
    %2583 = vmatprep.subr.mxu0 0.0
    %2584 = vmatpush2.msra.mxu0 0.0
    %2585 = vmatprep.subr.mxu0 0.0
    %2586 = vmatpush2.msra.mxu0 0.0
    %2587 = vmatprep.subr.mxu0 0.0
    %2588 = vmatpush2.msra.mxu0 0.0
    %2589 = vmatprep.subr.mxu0 0.0
    %2590 = vmatpush2.msra.mxu0 0.0
    %2591 = vmatprep.subr.mxu0 0.0
    %2592 = vmatpush2.msra.mxu0 0.0
    %2593 = vmatprep.subr.mxu0 0.0
    %2594 = vmatpush2.msra.mxu0 0.0
    %2595 = vmatprep.subr.mxu0 0.0
    %2596 = vmatpush2.msra.mxu0 0.0
    %2597 = vmatprep.subr.mxu0 0.0
    %2598 = vmatpush2.msra.mxu0 0.0
    %2599 = vmatprep.subr.mxu0 0.0
    %2600 = vmatpush2.msra.mxu0 0.0
    %2601 = vmatprep.mubr.f32.mxu0 0.0
    %2602 = vmatmul.mubr.f32.gmra.mxu0 %v2535
    %v2603 = vpop.f32.mrf.mxu0
    %v2604 = vadd.f32 0.0, %v2603
    %v2605 = vpop.f32.mrf.mxu0
    %2606 = vdwg.mxu0
    %2607 = vrot.lane.b32.xlu0 %v2269, 120
    %v2608 = vpop.permute.xlu0 %2607
    %2609 = vrot.lane.b32.xlu0 %v2269, 88
    %v2610 = vpop.permute.xlu0 %2609
    %v2611 = vsel %vm245, %v2608, 0
    %v2613 = vsel %vm245, %v2610, 0
    %2615 = vmatprep.subr.mxu0 0.0
    %2616 = vmatpush1.xpose.msra.mxu0 0.0
    %2617 = vmatprep.subr.mxu0 0.0
    %2618 = vmatpush1.xpose.msra.mxu0 0.0
    %2619 = vmatprep.subr.mxu0 0.0
    %2620 = vmatpush1.xpose.msra.mxu0 0.0
    %2621 = vmatprep.subr.mxu0 0.0
    %2622 = vmatpush1.xpose.msra.mxu0 0.0
    %2623 = vmatprep.subr.mxu0 0.0
    %2624 = vmatpush1.xpose.msra.mxu0 0.0
    %2625 = vmatprep.subr.mxu0 0.0
    %2626 = vmatpush1.xpose.msra.mxu0 0.0
    %2627 = vmatprep.subr.mxu0 0.0
    %2628 = vmatpush1.xpose.msra.mxu0 0.0
    %2629 = vmatprep.subr.mxu0 0.0
    %2630 = vmatpush1.xpose.msra.mxu0 0.0
    %2631 = vmatprep.subr.mxu0 0.0
    %2632 = vmatpush1.xpose.msra.mxu0 0.0
    %2633 = vmatprep.subr.mxu0 0.0
    %2634 = vmatpush1.xpose.msra.mxu0 0.0
    %2635 = vmatprep.subr.mxu0 0.0
    %2636 = vmatpush1.xpose.msra.mxu0 0.0
    %2637 = vmatprep.subr.mxu0 0.0
    %2638 = vmatpush1.xpose.msra.mxu0 0.0
    %2639 = vmatprep.subr.mxu0 0.0
    %2640 = vmatpush1.xpose.msra.mxu0 0.0
    %2641 = vmatprep.subr.mxu0 0.0
    %2642 = vmatpush1.xpose.msra.mxu0 0.0
    %2643 = vmatprep.subr.mxu0 0.0
    %2644 = vmatpush1.xpose.msra.mxu0 0.0
    %2645 = vmatprep.subr.mxu0 0.0
    %2646 = vmatpush1.xpose.msra.mxu0 %v2613
    %2647 = vmatprep.subr.mxu0 0.0
    %2648 = vmatpush2.xpose.msra.mxu0 0.0
    %2649 = vmatprep.subr.mxu0 0.0
    %2650 = vmatpush2.xpose.msra.mxu0 0.0
    %2651 = vmatprep.subr.mxu0 0.0
    %2652 = vmatpush2.xpose.msra.mxu0 0.0
    %2653 = vmatprep.subr.mxu0 0.0
    %2654 = vmatpush2.xpose.msra.mxu0 0.0
    %2655 = vmatprep.subr.mxu0 0.0
    %2656 = vmatpush2.xpose.msra.mxu0 0.0
    %2657 = vmatprep.subr.mxu0 0.0
    %2658 = vmatpush2.xpose.msra.mxu0 0.0
    %2659 = vmatprep.subr.mxu0 0.0
    %2660 = vmatpush2.xpose.msra.mxu0 0.0
    %2661 = vmatprep.subr.mxu0 0.0
    %2662 = vmatpush2.xpose.msra.mxu0 0.0
    %2663 = vmatprep.subr.mxu0 0.0
    %2664 = vmatpush2.xpose.msra.mxu0 0.0
    %2665 = vmatprep.subr.mxu0 0.0
    %2666 = vmatpush2.xpose.msra.mxu0 0.0
    %2667 = vmatprep.subr.mxu0 0.0
    %2668 = vmatpush2.xpose.msra.mxu0 0.0
    %2669 = vmatprep.subr.mxu0 0.0
    %2670 = vmatpush2.xpose.msra.mxu0 0.0
    %2671 = vmatprep.subr.mxu0 0.0
    %2672 = vmatpush2.xpose.msra.mxu0 0.0
    %2673 = vmatprep.subr.mxu0 0.0
    %2674 = vmatpush2.xpose.msra.mxu0 0.0
    %2675 = vmatprep.subr.mxu0 0.0
    %2676 = vmatpush2.xpose.msra.mxu0 0.0
    %2677 = vmatprep.subr.mxu0 0.0
    %2678 = vmatpush2.xpose.msra.mxu0 0.0
    %2679 = vmatprep.mubr.f32.mxu0 0.0
    %2680 = vmatmul.mubr.f32.gmra.mxu0 %v2611
    %v2681 = vpop.f32.mrf.mxu0
    %v2682 = vadd.f32 0.0, %v2681
    %v2683 = vpop.f32.mrf.mxu0
    %2684 = vdwg.mxu0
    %2685 = vrot.lane.b32.xlu0 %v2274, 120
    %v2686 = vpop.permute.xlu0 %2685
    %2687 = vrot.lane.b32.xlu0 %v2274, 88
    %v2688 = vpop.permute.xlu0 %2687
    %v2689 = vsel %vm245, %v2686, 0
    %v2691 = vsel %vm245, %v2688, 0
    %2693 = vmatprep.subr.mxu0 0.0
    %2694 = vmatpush1.xpose.msra.mxu0 0.0
    %2695 = vmatprep.subr.mxu0 0.0
    %2696 = vmatpush1.xpose.msra.mxu0 0.0
    %2697 = vmatprep.subr.mxu0 0.0
    %2698 = vmatpush1.xpose.msra.mxu0 0.0
    %2699 = vmatprep.subr.mxu0 0.0
    %2700 = vmatpush1.xpose.msra.mxu0 0.0
    %2701 = vmatprep.subr.mxu0 0.0
    %2702 = vmatpush1.xpose.msra.mxu0 0.0
    %2703 = vmatprep.subr.mxu0 0.0
    %2704 = vmatpush1.xpose.msra.mxu0 0.0
    %2705 = vmatprep.subr.mxu0 0.0
    %2706 = vmatpush1.xpose.msra.mxu0 0.0
    %2707 = vmatprep.subr.mxu0 0.0
    %2708 = vmatpush1.xpose.msra.mxu0 0.0
    %2709 = vmatprep.subr.mxu0 0.0
    %2710 = vmatpush1.xpose.msra.mxu0 0.0
    %2711 = vmatprep.subr.mxu0 0.0
    %2712 = vmatpush1.xpose.msra.mxu0 0.0
    %2713 = vmatprep.subr.mxu0 0.0
    %2714 = vmatpush1.xpose.msra.mxu0 0.0
    %2715 = vmatprep.subr.mxu0 0.0
    %2716 = vmatpush1.xpose.msra.mxu0 0.0
    %2717 = vmatprep.subr.mxu0 0.0
    %2718 = vmatpush1.xpose.msra.mxu0 0.0
    %2719 = vmatprep.subr.mxu0 0.0
    %2720 = vmatpush1.xpose.msra.mxu0 0.0
    %2721 = vmatprep.subr.mxu0 0.0
    %2722 = vmatpush1.xpose.msra.mxu0 0.0
    %2723 = vmatprep.subr.mxu0 0.0
    %2724 = vmatpush1.xpose.msra.mxu0 %v2691
    %2725 = vmatprep.subr.mxu0 0.0
    %2726 = vmatpush2.xpose.msra.mxu0 0.0
    %2727 = vmatprep.subr.mxu0 0.0
    %2728 = vmatpush2.xpose.msra.mxu0 0.0
    %2729 = vmatprep.subr.mxu0 0.0
    %2730 = vmatpush2.xpose.msra.mxu0 0.0
    %2731 = vmatprep.subr.mxu0 0.0
    %2732 = vmatpush2.xpose.msra.mxu0 0.0
    %2733 = vmatprep.subr.mxu0 0.0
    %2734 = vmatpush2.xpose.msra.mxu0 0.0
    %2735 = vmatprep.subr.mxu0 0.0
    %2736 = vmatpush2.xpose.msra.mxu0 0.0
    %2737 = vmatprep.subr.mxu0 0.0
    %2738 = vmatpush2.xpose.msra.mxu0 0.0
    %2739 = vmatprep.subr.mxu0 0.0
    %2740 = vmatpush2.xpose.msra.mxu0 0.0
    %2741 = vmatprep.subr.mxu0 0.0
    %2742 = vmatpush2.xpose.msra.mxu0 0.0
    %2743 = vmatprep.subr.mxu0 0.0
    %2744 = vmatpush2.xpose.msra.mxu0 0.0
    %2745 = vmatprep.subr.mxu0 0.0
    %2746 = vmatpush2.xpose.msra.mxu0 0.0
    %2747 = vmatprep.subr.mxu0 0.0
    %2748 = vmatpush2.xpose.msra.mxu0 0.0
    %2749 = vmatprep.subr.mxu0 0.0
    %2750 = vmatpush2.xpose.msra.mxu0 0.0
    %2751 = vmatprep.subr.mxu0 0.0
    %2752 = vmatpush2.xpose.msra.mxu0 0.0
    %2753 = vmatprep.subr.mxu0 0.0
    %2754 = vmatpush2.xpose.msra.mxu0 0.0
    %2755 = vmatprep.subr.mxu0 0.0
    %2756 = vmatpush2.xpose.msra.mxu0 0.0
    %2757 = vmatprep.mubr.f32.mxu0 0.0
    %2758 = vmatmul.mubr.f32.gmra.mxu0 %v2689
    %v2759 = vpop.f32.mrf.mxu0
    %v2760 = vadd.f32 0.0, %v2759
    %v2761 = vpop.f32.mrf.mxu0
    %2762 = vdwg.mxu0
    %v2763 = vmul.f32 %v2682, 0.35355338
    %v2764 = vmul.f32 %v2760, 0.35355338
    %v2765 = vsel %vm245, %v2763, -inf
    %2766 = vmax.xlane.f32.xlu0 %v2765
    %v2767 = vpop.xlane.xlu0 %2766
    %v2768 = vsel %vm245, %v2764, -inf
    %2769 = vmax.xlane.f32.xlu0 %v2768
    %v2770 = vpop.xlane.xlu0 %2769
    %v2771 = vsub.f32 %v2763, %v2767
    %v2772 = vsub.f32 %v2764, %v2770
    %v2773 = vmul.f32 %v2771, 1.442695
    %v2774 = vpow.pop %v2773
    %v2775 = vmul.f32 %v2772, 1.442695
    %v2776 = vpow.pop %v2775
    %v2777 = vsel %vm245, %v2774, 0.0
    %2778 = vadd.xlane.f32.xlu0 %v2777
    %v2779 = vpop.xlane.xlu0 %2778
    %v2780 = vsel %vm245, %v2776, 0.0
    %2781 = vadd.xlane.f32.xlu0 %v2780
    %v2782 = vpop.xlane.xlu0 %2781
    %v2783 = vrcp.pop %v2779
    %v2784 = vrcp.pop %v2782
    %v2785 = vmul.f32 %v2774, %v2783
    %v2786 = vmul.f32 %v2776, %v2784
    %2787 = vrot.lane.b32.xlu0 %v2269, 56
    %v2788 = vpop.permute.xlu0 %2787
    %v2791 = vsel %vm245, %v2785, 0
    %2793 = vmatprep.subr.mxu0 0.0
    %2794 = vmatpush1.msra.mxu0 0.0
    %2795 = vmatprep.subr.mxu0 0.0
    %2796 = vmatpush1.msra.mxu0 0.0
    %2797 = vmatprep.subr.mxu0 0.0
    %2798 = vmatpush1.msra.mxu0 0.0
    %2799 = vmatprep.subr.mxu0 0.0
    %2800 = vmatpush1.msra.mxu0 0.0
    %2801 = vmatprep.subr.mxu0 0.0
    %2802 = vmatpush1.msra.mxu0 0.0
    %2803 = vmatprep.subr.mxu0 0.0
    %2804 = vmatpush1.msra.mxu0 0.0
    %2805 = vmatprep.subr.mxu0 0.0
    %2806 = vmatpush1.msra.mxu0 0.0
    %2807 = vmatprep.subr.mxu0 0.0
    %2808 = vmatpush1.msra.mxu0 0.0
    %2809 = vmatprep.subr.mxu0 0.0
    %2810 = vmatpush1.msra.mxu0 0.0
    %2811 = vmatprep.subr.mxu0 0.0
    %2812 = vmatpush1.msra.mxu0 0.0
    %2813 = vmatprep.subr.mxu0 0.0
    %2814 = vmatpush1.msra.mxu0 0.0
    %2815 = vmatprep.subr.mxu0 0.0
    %2816 = vmatpush1.msra.mxu0 0.0
    %2817 = vmatprep.subr.mxu0 0.0
    %2818 = vmatpush1.msra.mxu0 0.0
    %2819 = vmatprep.subr.mxu0 0.0
    %2820 = vmatpush1.msra.mxu0 0.0
    %2821 = vmatprep.subr.mxu0 0.0
    %2822 = vmatpush1.msra.mxu0 0.0
    %2823 = vmatprep.subr.mxu0 0.0
    %2824 = vmatpush1.msra.mxu0 %v2788
    %2825 = vmatprep.subr.mxu0 0.0
    %2826 = vmatpush2.msra.mxu0 0.0
    %2827 = vmatprep.subr.mxu0 0.0
    %2828 = vmatpush2.msra.mxu0 0.0
    %2829 = vmatprep.subr.mxu0 0.0
    %2830 = vmatpush2.msra.mxu0 0.0
    %2831 = vmatprep.subr.mxu0 0.0
    %2832 = vmatpush2.msra.mxu0 0.0
    %2833 = vmatprep.subr.mxu0 0.0
    %2834 = vmatpush2.msra.mxu0 0.0
    %2835 = vmatprep.subr.mxu0 0.0
    %2836 = vmatpush2.msra.mxu0 0.0
    %2837 = vmatprep.subr.mxu0 0.0
    %2838 = vmatpush2.msra.mxu0 0.0
    %2839 = vmatprep.subr.mxu0 0.0
    %2840 = vmatpush2.msra.mxu0 0.0
    %2841 = vmatprep.subr.mxu0 0.0
    %2842 = vmatpush2.msra.mxu0 0.0
    %2843 = vmatprep.subr.mxu0 0.0
    %2844 = vmatpush2.msra.mxu0 0.0
    %2845 = vmatprep.subr.mxu0 0.0
    %2846 = vmatpush2.msra.mxu0 0.0
    %2847 = vmatprep.subr.mxu0 0.0
    %2848 = vmatpush2.msra.mxu0 0.0
    %2849 = vmatprep.subr.mxu0 0.0
    %2850 = vmatpush2.msra.mxu0 0.0
    %2851 = vmatprep.subr.mxu0 0.0
    %2852 = vmatpush2.msra.mxu0 0.0
    %2853 = vmatprep.subr.mxu0 0.0
    %2854 = vmatpush2.msra.mxu0 0.0
    %2855 = vmatprep.subr.mxu0 0.0
    %2856 = vmatpush2.msra.mxu0 0.0
    %2857 = vmatprep.mubr.f32.mxu0 0.0
    %2858 = vmatmul.mubr.f32.gmra.mxu0 %v2791
    %v2859 = vpop.f32.mrf.mxu0
    %v2860 = vadd.f32 0.0, %v2859
    %v2861 = vpop.f32.mrf.mxu0
    %2862 = vdwg.mxu0
    %2863 = vrot.lane.b32.xlu0 %v2274, 56
    %v2864 = vpop.permute.xlu0 %2863
    %v2867 = vsel %vm245, %v2786, 0
    %2869 = vmatprep.subr.mxu0 0.0
    %2870 = vmatpush1.msra.mxu0 0.0
    %2871 = vmatprep.subr.mxu0 0.0
    %2872 = vmatpush1.msra.mxu0 0.0
    %2873 = vmatprep.subr.mxu0 0.0
    %2874 = vmatpush1.msra.mxu0 0.0
    %2875 = vmatprep.subr.mxu0 0.0
    %2876 = vmatpush1.msra.mxu0 0.0
    %2877 = vmatprep.subr.mxu0 0.0
    %2878 = vmatpush1.msra.mxu0 0.0
    %2879 = vmatprep.subr.mxu0 0.0
    %2880 = vmatpush1.msra.mxu0 0.0
    %2881 = vmatprep.subr.mxu0 0.0
    %2882 = vmatpush1.msra.mxu0 0.0
    %2883 = vmatprep.subr.mxu0 0.0
    %2884 = vmatpush1.msra.mxu0 0.0
    %2885 = vmatprep.subr.mxu0 0.0
    %2886 = vmatpush1.msra.mxu0 0.0
    %2887 = vmatprep.subr.mxu0 0.0
    %2888 = vmatpush1.msra.mxu0 0.0
    %2889 = vmatprep.subr.mxu0 0.0
    %2890 = vmatpush1.msra.mxu0 0.0
    %2891 = vmatprep.subr.mxu0 0.0
    %2892 = vmatpush1.msra.mxu0 0.0
    %2893 = vmatprep.subr.mxu0 0.0
    %2894 = vmatpush1.msra.mxu0 0.0
    %2895 = vmatprep.subr.mxu0 0.0
    %2896 = vmatpush1.msra.mxu0 0.0
    %2897 = vmatprep.subr.mxu0 0.0
    %2898 = vmatpush1.msra.mxu0 0.0
    %2899 = vmatprep.subr.mxu0 0.0
    %2900 = vmatpush1.msra.mxu0 %v2864
    %2901 = vmatprep.subr.mxu0 0.0
    %2902 = vmatpush2.msra.mxu0 0.0
    %2903 = vmatprep.subr.mxu0 0.0
    %2904 = vmatpush2.msra.mxu0 0.0
    %2905 = vmatprep.subr.mxu0 0.0
    %2906 = vmatpush2.msra.mxu0 0.0
    %2907 = vmatprep.subr.mxu0 0.0
    %2908 = vmatpush2.msra.mxu0 0.0
    %2909 = vmatprep.subr.mxu0 0.0
    %2910 = vmatpush2.msra.mxu0 0.0
    %2911 = vmatprep.subr.mxu0 0.0
    %2912 = vmatpush2.msra.mxu0 0.0
    %2913 = vmatprep.subr.mxu0 0.0
    %2914 = vmatpush2.msra.mxu0 0.0
    %2915 = vmatprep.subr.mxu0 0.0
    %2916 = vmatpush2.msra.mxu0 0.0
    %2917 = vmatprep.subr.mxu0 0.0
    %2918 = vmatpush2.msra.mxu0 0.0
    %2919 = vmatprep.subr.mxu0 0.0
    %2920 = vmatpush2.msra.mxu0 0.0
    %2921 = vmatprep.subr.mxu0 0.0
    %2922 = vmatpush2.msra.mxu0 0.0
    %2923 = vmatprep.subr.mxu0 0.0
    %2924 = vmatpush2.msra.mxu0 0.0
    %2925 = vmatprep.subr.mxu0 0.0
    %2926 = vmatpush2.msra.mxu0 0.0
    %2927 = vmatprep.subr.mxu0 0.0
    %2928 = vmatpush2.msra.mxu0 0.0
    %2929 = vmatprep.subr.mxu0 0.0
    %2930 = vmatpush2.msra.mxu0 0.0
    %2931 = vmatprep.subr.mxu0 0.0
    %2932 = vmatpush2.msra.mxu0 0.0
    %2933 = vmatprep.mubr.f32.mxu0 0.0
    %2934 = vmatmul.mubr.f32.gmra.mxu0 %v2867
    %v2935 = vpop.f32.mrf.mxu0
    %v2936 = vadd.f32 0.0, %v2935
    %v2937 = vpop.f32.mrf.mxu0
    %2938 = vdwg.mxu0
    %2940 = vrot.lane.b32.xlu0 %v2172, 32
    %v2941 = vpop.permute.xlu0 %2940
    %v2944 = vsel %vm245, %v2860, 0
    %v2947 = vsel %vm245, %v2936, 0
    %2949 = vmatprep.subr.mxu0 0.0
    %2950 = vmatpush1.msra.mxu0 0.0
    %2951 = vmatprep.subr.mxu0 0.0
    %2952 = vmatpush1.msra.mxu0 0.0
    %2953 = vmatprep.subr.mxu0 0.0
    %2954 = vmatpush1.msra.mxu0 0.0
    %2955 = vmatprep.subr.mxu0 0.0
    %2956 = vmatpush1.msra.mxu0 0.0
    %2957 = vmatprep.subr.mxu0 0.0
    %2958 = vmatpush1.msra.mxu0 0.0
    %2959 = vmatprep.subr.mxu0 0.0
    %2960 = vmatpush1.msra.mxu0 0.0
    %2961 = vmatprep.subr.mxu0 0.0
    %2962 = vmatpush1.msra.mxu0 0.0
    %2963 = vmatprep.subr.mxu0 0.0
    %2964 = vmatpush1.msra.mxu0 0.0
    %2965 = vmatprep.subr.mxu0 0.0
    %2966 = vmatpush1.msra.mxu0 0.0
    %2967 = vmatprep.subr.mxu0 0.0
    %2968 = vmatpush1.msra.mxu0 0.0
    %2969 = vmatprep.subr.mxu0 0.0
    %2970 = vmatpush1.msra.mxu0 0.0
    %2971 = vmatprep.subr.mxu0 0.0
    %2972 = vmatpush1.msra.mxu0 0.0
    %2973 = vmatprep.subr.mxu0 0.0
    %2974 = vmatpush1.msra.mxu0 0.0
    %2975 = vmatprep.subr.mxu0 0.0
    %2976 = vmatpush1.msra.mxu0 0.0
    %2977 = vmatprep.subr.mxu0 0.0
    %2978 = vmatpush1.msra.mxu0 0.0
    %2979 = vmatprep.subr.mxu0 0.0
    %2980 = vmatpush1.msra.mxu0 %v2941
    %2981 = vmatprep.subr.mxu0 0.0
    %2982 = vmatpush2.msra.mxu0 0.0
    %2983 = vmatprep.subr.mxu0 0.0
    %2984 = vmatpush2.msra.mxu0 0.0
    %2985 = vmatprep.subr.mxu0 0.0
    %2986 = vmatpush2.msra.mxu0 0.0
    %2987 = vmatprep.subr.mxu0 0.0
    %2988 = vmatpush2.msra.mxu0 0.0
    %2989 = vmatprep.subr.mxu0 0.0
    %2990 = vmatpush2.msra.mxu0 0.0
    %2991 = vmatprep.subr.mxu0 0.0
    %2992 = vmatpush2.msra.mxu0 0.0
    %2993 = vmatprep.subr.mxu0 0.0
    %2994 = vmatpush2.msra.mxu0 0.0
    %2995 = vmatprep.subr.mxu0 0.0
    %2996 = vmatpush2.msra.mxu0 0.0
    %2997 = vmatprep.subr.mxu0 0.0
    %2998 = vmatpush2.msra.mxu0 0.0
    %2999 = vmatprep.subr.mxu0 0.0
    %3000 = vmatpush2.msra.mxu0 0.0
    %3001 = vmatprep.subr.mxu0 0.0
    %3002 = vmatpush2.msra.mxu0 0.0
    %3003 = vmatprep.subr.mxu0 0.0
    %3004 = vmatpush2.msra.mxu0 0.0
    %3005 = vmatprep.subr.mxu0 0.0
    %3006 = vmatpush2.msra.mxu0 0.0
    %3007 = vmatprep.subr.mxu0 0.0
    %3008 = vmatpush2.msra.mxu0 0.0
    %3009 = vmatprep.subr.mxu0 0.0
    %3010 = vmatpush2.msra.mxu0 0.0
    %3011 = vmatprep.subr.mxu0 0.0
    %3012 = vmatpush2.msra.mxu0 0.0
    %3013 = vmatprep.mubr.f32.mxu0 0.0
    %3014 = vmatmul.mubr.f32.gmra.mxu0 %v2944
    %v3015 = vpop.f32.mrf.mxu0
    %v3016 = vadd.f32 0.0, %v3015
    %v3017 = vpop.f32.mrf.mxu0
    %3018 = vmatprep.mubr.f32.mxu0 0.0
    %3019 = vmatmul.mubr.f32.gmra.mxu0 %v2947
    %v3020 = vpop.f32.mrf.mxu0
    %v3021 = vadd.f32 0.0, %v3020
    %v3022 = vpop.f32.mrf.mxu0
    %3023 = vdwg.mxu0
    %3025 = vrot.lane.b32.xlu0 %v2171, 32
    %v3026 = vpop.permute.xlu0 %3025
    %v3029 = vsel %vm245, %v2528, 0
    %v3032 = vsel %vm245, %v2604, 0
    %3034 = vmatprep.subr.mxu0 0.0
    %3035 = vmatpush1.msra.mxu0 0.0
    %3036 = vmatprep.subr.mxu0 0.0
    %3037 = vmatpush1.msra.mxu0 0.0
    %3038 = vmatprep.subr.mxu0 0.0
    %3039 = vmatpush1.msra.mxu0 0.0
    %3040 = vmatprep.subr.mxu0 0.0
    %3041 = vmatpush1.msra.mxu0 0.0
    %3042 = vmatprep.subr.mxu0 0.0
    %3043 = vmatpush1.msra.mxu0 0.0
    %3044 = vmatprep.subr.mxu0 0.0
    %3045 = vmatpush1.msra.mxu0 0.0
    %3046 = vmatprep.subr.mxu0 0.0
    %3047 = vmatpush1.msra.mxu0 0.0
    %3048 = vmatprep.subr.mxu0 0.0
    %3049 = vmatpush1.msra.mxu0 0.0
    %3050 = vmatprep.subr.mxu0 0.0
    %3051 = vmatpush1.msra.mxu0 0.0
    %3052 = vmatprep.subr.mxu0 0.0
    %3053 = vmatpush1.msra.mxu0 0.0
    %3054 = vmatprep.subr.mxu0 0.0
    %3055 = vmatpush1.msra.mxu0 0.0
    %3056 = vmatprep.subr.mxu0 0.0
    %3057 = vmatpush1.msra.mxu0 0.0
    %3058 = vmatprep.subr.mxu0 0.0
    %3059 = vmatpush1.msra.mxu0 0.0
    %3060 = vmatprep.subr.mxu0 0.0
    %3061 = vmatpush1.msra.mxu0 0.0
    %3062 = vmatprep.subr.mxu0 0.0
    %3063 = vmatpush1.msra.mxu0 0.0
    %3064 = vmatprep.subr.mxu0 0.0
    %3065 = vmatpush1.msra.mxu0 %v3026
    %3066 = vmatprep.subr.mxu0 0.0
    %3067 = vmatpush2.msra.mxu0 0.0
    %3068 = vmatprep.subr.mxu0 0.0
    %3069 = vmatpush2.msra.mxu0 0.0
    %3070 = vmatprep.subr.mxu0 0.0
    %3071 = vmatpush2.msra.mxu0 0.0
    %3072 = vmatprep.subr.mxu0 0.0
    %3073 = vmatpush2.msra.mxu0 0.0
    %3074 = vmatprep.subr.mxu0 0.0
    %3075 = vmatpush2.msra.mxu0 0.0
    %3076 = vmatprep.subr.mxu0 0.0
    %3077 = vmatpush2.msra.mxu0 0.0
    %3078 = vmatprep.subr.mxu0 0.0
    %3079 = vmatpush2.msra.mxu0 0.0
    %3080 = vmatprep.subr.mxu0 0.0
    %3081 = vmatpush2.msra.mxu0 0.0
    %3082 = vmatprep.subr.mxu0 0.0
    %3083 = vmatpush2.msra.mxu0 0.0
    %3084 = vmatprep.subr.mxu0 0.0
    %3085 = vmatpush2.msra.mxu0 0.0
    %3086 = vmatprep.subr.mxu0 0.0
    %3087 = vmatpush2.msra.mxu0 0.0
    %3088 = vmatprep.subr.mxu0 0.0
    %3089 = vmatpush2.msra.mxu0 0.0
    %3090 = vmatprep.subr.mxu0 0.0
    %3091 = vmatpush2.msra.mxu0 0.0
    %3092 = vmatprep.subr.mxu0 0.0
    %3093 = vmatpush2.msra.mxu0 0.0
    %3094 = vmatprep.subr.mxu0 0.0
    %3095 = vmatpush2.msra.mxu0 0.0
    %3096 = vmatprep.subr.mxu0 0.0
    %3097 = vmatpush2.msra.mxu0 0.0
    %3098 = vmatprep.mubr.f32.mxu0 0.0
    %3099 = vmatmul.mubr.f32.gmra.mxu0 %v3029
    %v3100 = vpop.f32.mrf.mxu0
    %v3101 = vadd.f32 %v3016, %v3100
    %v3102 = vpop.f32.mrf.mxu0
    %3103 = vmatprep.mubr.f32.mxu0 0.0
    %3104 = vmatmul.mubr.f32.gmra.mxu0 %v3032
    %v3105 = vpop.f32.mrf.mxu0
    %v3106 = vadd.f32 %v3021, %v3105
    %v3107 = vpop.f32.mrf.mxu0
    %3108 = vdwg.mxu0
    %3109 = vrot.lane.b32.xlu0 %v2269, 112
    %v3110 = vpop.permute.xlu0 %3109
    %3111 = vrot.lane.b32.xlu0 %v2269, 80
    %v3112 = vpop.permute.xlu0 %3111
    %v3113 = vsel %vm245, %v3110, 0
    %v3115 = vsel %vm245, %v3112, 0
    %3117 = vmatprep.subr.mxu0 0.0
    %3118 = vmatpush1.xpose.msra.mxu0 0.0
    %3119 = vmatprep.subr.mxu0 0.0
    %3120 = vmatpush1.xpose.msra.mxu0 0.0
    %3121 = vmatprep.subr.mxu0 0.0
    %3122 = vmatpush1.xpose.msra.mxu0 0.0
    %3123 = vmatprep.subr.mxu0 0.0
    %3124 = vmatpush1.xpose.msra.mxu0 0.0
    %3125 = vmatprep.subr.mxu0 0.0
    %3126 = vmatpush1.xpose.msra.mxu0 0.0
    %3127 = vmatprep.subr.mxu0 0.0
    %3128 = vmatpush1.xpose.msra.mxu0 0.0
    %3129 = vmatprep.subr.mxu0 0.0
    %3130 = vmatpush1.xpose.msra.mxu0 0.0
    %3131 = vmatprep.subr.mxu0 0.0
    %3132 = vmatpush1.xpose.msra.mxu0 0.0
    %3133 = vmatprep.subr.mxu0 0.0
    %3134 = vmatpush1.xpose.msra.mxu0 0.0
    %3135 = vmatprep.subr.mxu0 0.0
    %3136 = vmatpush1.xpose.msra.mxu0 0.0
    %3137 = vmatprep.subr.mxu0 0.0
    %3138 = vmatpush1.xpose.msra.mxu0 0.0
    %3139 = vmatprep.subr.mxu0 0.0
    %3140 = vmatpush1.xpose.msra.mxu0 0.0
    %3141 = vmatprep.subr.mxu0 0.0
    %3142 = vmatpush1.xpose.msra.mxu0 0.0
    %3143 = vmatprep.subr.mxu0 0.0
    %3144 = vmatpush1.xpose.msra.mxu0 0.0
    %3145 = vmatprep.subr.mxu0 0.0
    %3146 = vmatpush1.xpose.msra.mxu0 0.0
    %3147 = vmatprep.subr.mxu0 0.0
    %3148 = vmatpush1.xpose.msra.mxu0 %v3115
    %3149 = vmatprep.subr.mxu0 0.0
    %3150 = vmatpush2.xpose.msra.mxu0 0.0
    %3151 = vmatprep.subr.mxu0 0.0
    %3152 = vmatpush2.xpose.msra.mxu0 0.0
    %3153 = vmatprep.subr.mxu0 0.0
    %3154 = vmatpush2.xpose.msra.mxu0 0.0
    %3155 = vmatprep.subr.mxu0 0.0
    %3156 = vmatpush2.xpose.msra.mxu0 0.0
    %3157 = vmatprep.subr.mxu0 0.0
    %3158 = vmatpush2.xpose.msra.mxu0 0.0
    %3159 = vmatprep.subr.mxu0 0.0
    %3160 = vmatpush2.xpose.msra.mxu0 0.0
    %3161 = vmatprep.subr.mxu0 0.0
    %3162 = vmatpush2.xpose.msra.mxu0 0.0
    %3163 = vmatprep.subr.mxu0 0.0
    %3164 = vmatpush2.xpose.msra.mxu0 0.0
    %3165 = vmatprep.subr.mxu0 0.0
    %3166 = vmatpush2.xpose.msra.mxu0 0.0
    %3167 = vmatprep.subr.mxu0 0.0
    %3168 = vmatpush2.xpose.msra.mxu0 0.0
    %3169 = vmatprep.subr.mxu0 0.0
    %3170 = vmatpush2.xpose.msra.mxu0 0.0
    %3171 = vmatprep.subr.mxu0 0.0
    %3172 = vmatpush2.xpose.msra.mxu0 0.0
    %3173 = vmatprep.subr.mxu0 0.0
    %3174 = vmatpush2.xpose.msra.mxu0 0.0
    %3175 = vmatprep.subr.mxu0 0.0
    %3176 = vmatpush2.xpose.msra.mxu0 0.0
    %3177 = vmatprep.subr.mxu0 0.0
    %3178 = vmatpush2.xpose.msra.mxu0 0.0
    %3179 = vmatprep.subr.mxu0 0.0
    %3180 = vmatpush2.xpose.msra.mxu0 0.0
    %3181 = vmatprep.mubr.f32.mxu0 0.0
    %3182 = vmatmul.mubr.f32.gmra.mxu0 %v3113
    %v3183 = vpop.f32.mrf.mxu0
    %v3184 = vadd.f32 0.0, %v3183
    %v3185 = vpop.f32.mrf.mxu0
    %3186 = vdwg.mxu0
    %3187 = vrot.lane.b32.xlu0 %v2274, 112
    %v3188 = vpop.permute.xlu0 %3187
    %3189 = vrot.lane.b32.xlu0 %v2274, 80
    %v3190 = vpop.permute.xlu0 %3189
    %v3191 = vsel %vm245, %v3188, 0
    %v3193 = vsel %vm245, %v3190, 0
    %3195 = vmatprep.subr.mxu0 0.0
    %3196 = vmatpush1.xpose.msra.mxu0 0.0
    %3197 = vmatprep.subr.mxu0 0.0
    %3198 = vmatpush1.xpose.msra.mxu0 0.0
    %3199 = vmatprep.subr.mxu0 0.0
    %3200 = vmatpush1.xpose.msra.mxu0 0.0
    %3201 = vmatprep.subr.mxu0 0.0
    %3202 = vmatpush1.xpose.msra.mxu0 0.0
    %3203 = vmatprep.subr.mxu0 0.0
    %3204 = vmatpush1.xpose.msra.mxu0 0.0
    %3205 = vmatprep.subr.mxu0 0.0
    %3206 = vmatpush1.xpose.msra.mxu0 0.0
    %3207 = vmatprep.subr.mxu0 0.0
    %3208 = vmatpush1.xpose.msra.mxu0 0.0
    %3209 = vmatprep.subr.mxu0 0.0
    %3210 = vmatpush1.xpose.msra.mxu0 0.0
    %3211 = vmatprep.subr.mxu0 0.0
    %3212 = vmatpush1.xpose.msra.mxu0 0.0
    %3213 = vmatprep.subr.mxu0 0.0
    %3214 = vmatpush1.xpose.msra.mxu0 0.0
    %3215 = vmatprep.subr.mxu0 0.0
    %3216 = vmatpush1.xpose.msra.mxu0 0.0
    %3217 = vmatprep.subr.mxu0 0.0
    %3218 = vmatpush1.xpose.msra.mxu0 0.0
    %3219 = vmatprep.subr.mxu0 0.0
    %3220 = vmatpush1.xpose.msra.mxu0 0.0
    %3221 = vmatprep.subr.mxu0 0.0
    %3222 = vmatpush1.xpose.msra.mxu0 0.0
    %3223 = vmatprep.subr.mxu0 0.0
    %3224 = vmatpush1.xpose.msra.mxu0 0.0
    %3225 = vmatprep.subr.mxu0 0.0
    %3226 = vmatpush1.xpose.msra.mxu0 %v3193
    %3227 = vmatprep.subr.mxu0 0.0
    %3228 = vmatpush2.xpose.msra.mxu0 0.0
    %3229 = vmatprep.subr.mxu0 0.0
    %3230 = vmatpush2.xpose.msra.mxu0 0.0
    %3231 = vmatprep.subr.mxu0 0.0
    %3232 = vmatpush2.xpose.msra.mxu0 0.0
    %3233 = vmatprep.subr.mxu0 0.0
    %3234 = vmatpush2.xpose.msra.mxu0 0.0
    %3235 = vmatprep.subr.mxu0 0.0
    %3236 = vmatpush2.xpose.msra.mxu0 0.0
    %3237 = vmatprep.subr.mxu0 0.0
    %3238 = vmatpush2.xpose.msra.mxu0 0.0
    %3239 = vmatprep.subr.mxu0 0.0
    %3240 = vmatpush2.xpose.msra.mxu0 0.0
    %3241 = vmatprep.subr.mxu0 0.0
    %3242 = vmatpush2.xpose.msra.mxu0 0.0
    %3243 = vmatprep.subr.mxu0 0.0
    %3244 = vmatpush2.xpose.msra.mxu0 0.0
    %3245 = vmatprep.subr.mxu0 0.0
    %3246 = vmatpush2.xpose.msra.mxu0 0.0
    %3247 = vmatprep.subr.mxu0 0.0
    %3248 = vmatpush2.xpose.msra.mxu0 0.0
    %3249 = vmatprep.subr.mxu0 0.0
    %3250 = vmatpush2.xpose.msra.mxu0 0.0
    %3251 = vmatprep.subr.mxu0 0.0
    %3252 = vmatpush2.xpose.msra.mxu0 0.0
    %3253 = vmatprep.subr.mxu0 0.0
    %3254 = vmatpush2.xpose.msra.mxu0 0.0
    %3255 = vmatprep.subr.mxu0 0.0
    %3256 = vmatpush2.xpose.msra.mxu0 0.0
    %3257 = vmatprep.subr.mxu0 0.0
    %3258 = vmatpush2.xpose.msra.mxu0 0.0
    %3259 = vmatprep.mubr.f32.mxu0 0.0
    %3260 = vmatmul.mubr.f32.gmra.mxu0 %v3191
    %v3261 = vpop.f32.mrf.mxu0
    %v3262 = vadd.f32 0.0, %v3261
    %v3263 = vpop.f32.mrf.mxu0
    %3264 = vdwg.mxu0
    %v3265 = vmul.f32 %v3184, 0.35355338
    %v3266 = vmul.f32 %v3262, 0.35355338
    %v3267 = vsel %vm245, %v3265, -inf
    %3268 = vmax.xlane.f32.xlu0 %v3267
    %v3269 = vpop.xlane.xlu0 %3268
    %v3270 = vsel %vm245, %v3266, -inf
    %3271 = vmax.xlane.f32.xlu0 %v3270
    %v3272 = vpop.xlane.xlu0 %3271
    %v3273 = vsub.f32 %v3265, %v3269
    %v3274 = vsub.f32 %v3266, %v3272
    %v3275 = vmul.f32 %v3273, 1.442695
    %v3276 = vpow.pop %v3275
    %v3277 = vmul.f32 %v3274, 1.442695
    %v3278 = vpow.pop %v3277
    %v3279 = vsel %vm245, %v3276, 0.0
    %3280 = vadd.xlane.f32.xlu0 %v3279
    %v3281 = vpop.xlane.xlu0 %3280
    %v3282 = vsel %vm245, %v3278, 0.0
    %3283 = vadd.xlane.f32.xlu0 %v3282
    %v3284 = vpop.xlane.xlu0 %3283
    %v3285 = vrcp.pop %v3281
    %v3286 = vrcp.pop %v3284
    %v3287 = vmul.f32 %v3276, %v3285
    %v3288 = vmul.f32 %v3278, %v3286
    %3289 = vrot.lane.b32.xlu0 %v2269, 48
    %v3290 = vpop.permute.xlu0 %3289
    %v3293 = vsel %vm245, %v3287, 0
    %3295 = vmatprep.subr.mxu0 0.0
    %3296 = vmatpush1.msra.mxu0 0.0
    %3297 = vmatprep.subr.mxu0 0.0
    %3298 = vmatpush1.msra.mxu0 0.0
    %3299 = vmatprep.subr.mxu0 0.0
    %3300 = vmatpush1.msra.mxu0 0.0
    %3301 = vmatprep.subr.mxu0 0.0
    %3302 = vmatpush1.msra.mxu0 0.0
    %3303 = vmatprep.subr.mxu0 0.0
    %3304 = vmatpush1.msra.mxu0 0.0
    %3305 = vmatprep.subr.mxu0 0.0
    %3306 = vmatpush1.msra.mxu0 0.0
    %3307 = vmatprep.subr.mxu0 0.0
    %3308 = vmatpush1.msra.mxu0 0.0
    %3309 = vmatprep.subr.mxu0 0.0
    %3310 = vmatpush1.msra.mxu0 0.0
    %3311 = vmatprep.subr.mxu0 0.0
    %3312 = vmatpush1.msra.mxu0 0.0
    %3313 = vmatprep.subr.mxu0 0.0
    %3314 = vmatpush1.msra.mxu0 0.0
    %3315 = vmatprep.subr.mxu0 0.0
    %3316 = vmatpush1.msra.mxu0 0.0
    %3317 = vmatprep.subr.mxu0 0.0
    %3318 = vmatpush1.msra.mxu0 0.0
    %3319 = vmatprep.subr.mxu0 0.0
    %3320 = vmatpush1.msra.mxu0 0.0
    %3321 = vmatprep.subr.mxu0 0.0
    %3322 = vmatpush1.msra.mxu0 0.0
    %3323 = vmatprep.subr.mxu0 0.0
    %3324 = vmatpush1.msra.mxu0 0.0
    %3325 = vmatprep.subr.mxu0 0.0
    %3326 = vmatpush1.msra.mxu0 %v3290
    %3327 = vmatprep.subr.mxu0 0.0
    %3328 = vmatpush2.msra.mxu0 0.0
    %3329 = vmatprep.subr.mxu0 0.0
    %3330 = vmatpush2.msra.mxu0 0.0
    %3331 = vmatprep.subr.mxu0 0.0
    %3332 = vmatpush2.msra.mxu0 0.0
    %3333 = vmatprep.subr.mxu0 0.0
    %3334 = vmatpush2.msra.mxu0 0.0
    %3335 = vmatprep.subr.mxu0 0.0
    %3336 = vmatpush2.msra.mxu0 0.0
    %3337 = vmatprep.subr.mxu0 0.0
    %3338 = vmatpush2.msra.mxu0 0.0
    %3339 = vmatprep.subr.mxu0 0.0
    %3340 = vmatpush2.msra.mxu0 0.0
    %3341 = vmatprep.subr.mxu0 0.0
    %3342 = vmatpush2.msra.mxu0 0.0
    %3343 = vmatprep.subr.mxu0 0.0
    %3344 = vmatpush2.msra.mxu0 0.0
    %3345 = vmatprep.subr.mxu0 0.0
    %3346 = vmatpush2.msra.mxu0 0.0
    %3347 = vmatprep.subr.mxu0 0.0
    %3348 = vmatpush2.msra.mxu0 0.0
    %3349 = vmatprep.subr.mxu0 0.0
    %3350 = vmatpush2.msra.mxu0 0.0
    %3351 = vmatprep.subr.mxu0 0.0
    %3352 = vmatpush2.msra.mxu0 0.0
    %3353 = vmatprep.subr.mxu0 0.0
    %3354 = vmatpush2.msra.mxu0 0.0
    %3355 = vmatprep.subr.mxu0 0.0
    %3356 = vmatpush2.msra.mxu0 0.0
    %3357 = vmatprep.subr.mxu0 0.0
    %3358 = vmatpush2.msra.mxu0 0.0
    %3359 = vmatprep.mubr.f32.mxu0 0.0
    %3360 = vmatmul.mubr.f32.gmra.mxu0 %v3293
    %v3361 = vpop.f32.mrf.mxu0
    %v3362 = vadd.f32 0.0, %v3361
    %v3363 = vpop.f32.mrf.mxu0
    %3364 = vdwg.mxu0
    %3365 = vrot.lane.b32.xlu0 %v2274, 48
    %v3366 = vpop.permute.xlu0 %3365
    %v3369 = vsel %vm245, %v3288, 0
    %3371 = vmatprep.subr.mxu0 0.0
    %3372 = vmatpush1.msra.mxu0 0.0
    %3373 = vmatprep.subr.mxu0 0.0
    %3374 = vmatpush1.msra.mxu0 0.0
    %3375 = vmatprep.subr.mxu0 0.0
    %3376 = vmatpush1.msra.mxu0 0.0
    %3377 = vmatprep.subr.mxu0 0.0
    %3378 = vmatpush1.msra.mxu0 0.0
    %3379 = vmatprep.subr.mxu0 0.0
    %3380 = vmatpush1.msra.mxu0 0.0
    %3381 = vmatprep.subr.mxu0 0.0
    %3382 = vmatpush1.msra.mxu0 0.0
    %3383 = vmatprep.subr.mxu0 0.0
    %3384 = vmatpush1.msra.mxu0 0.0
    %3385 = vmatprep.subr.mxu0 0.0
    %3386 = vmatpush1.msra.mxu0 0.0
    %3387 = vmatprep.subr.mxu0 0.0
    %3388 = vmatpush1.msra.mxu0 0.0
    %3389 = vmatprep.subr.mxu0 0.0
    %3390 = vmatpush1.msra.mxu0 0.0
    %3391 = vmatprep.subr.mxu0 0.0
    %3392 = vmatpush1.msra.mxu0 0.0
    %3393 = vmatprep.subr.mxu0 0.0
    %3394 = vmatpush1.msra.mxu0 0.0
    %3395 = vmatprep.subr.mxu0 0.0
    %3396 = vmatpush1.msra.mxu0 0.0
    %3397 = vmatprep.subr.mxu0 0.0
    %3398 = vmatpush1.msra.mxu0 0.0
    %3399 = vmatprep.subr.mxu0 0.0
    %3400 = vmatpush1.msra.mxu0 0.0
    %3401 = vmatprep.subr.mxu0 0.0
    %3402 = vmatpush1.msra.mxu0 %v3366
    %3403 = vmatprep.subr.mxu0 0.0
    %3404 = vmatpush2.msra.mxu0 0.0
    %3405 = vmatprep.subr.mxu0 0.0
    %3406 = vmatpush2.msra.mxu0 0.0
    %3407 = vmatprep.subr.mxu0 0.0
    %3408 = vmatpush2.msra.mxu0 0.0
    %3409 = vmatprep.subr.mxu0 0.0
    %3410 = vmatpush2.msra.mxu0 0.0
    %3411 = vmatprep.subr.mxu0 0.0
    %3412 = vmatpush2.msra.mxu0 0.0
    %3413 = vmatprep.subr.mxu0 0.0
    %3414 = vmatpush2.msra.mxu0 0.0
    %3415 = vmatprep.subr.mxu0 0.0
    %3416 = vmatpush2.msra.mxu0 0.0
    %3417 = vmatprep.subr.mxu0 0.0
    %3418 = vmatpush2.msra.mxu0 0.0
    %3419 = vmatprep.subr.mxu0 0.0
    %3420 = vmatpush2.msra.mxu0 0.0
    %3421 = vmatprep.subr.mxu0 0.0
    %3422 = vmatpush2.msra.mxu0 0.0
    %3423 = vmatprep.subr.mxu0 0.0
    %3424 = vmatpush2.msra.mxu0 0.0
    %3425 = vmatprep.subr.mxu0 0.0
    %3426 = vmatpush2.msra.mxu0 0.0
    %3427 = vmatprep.subr.mxu0 0.0
    %3428 = vmatpush2.msra.mxu0 0.0
    %3429 = vmatprep.subr.mxu0 0.0
    %3430 = vmatpush2.msra.mxu0 0.0
    %3431 = vmatprep.subr.mxu0 0.0
    %3432 = vmatpush2.msra.mxu0 0.0
    %3433 = vmatprep.subr.mxu0 0.0
    %3434 = vmatpush2.msra.mxu0 0.0
    %3435 = vmatprep.mubr.f32.mxu0 0.0
    %3436 = vmatmul.mubr.f32.gmra.mxu0 %v3369
    %v3437 = vpop.f32.mrf.mxu0
    %v3438 = vadd.f32 0.0, %v3437
    %v3439 = vpop.f32.mrf.mxu0
    %3440 = vdwg.mxu0
    %3442 = vrot.lane.b32.xlu0 %v2173, 32
    %v3443 = vpop.permute.xlu0 %3442
    %v3446 = vsel %vm245, %v3362, 0
    %v3449 = vsel %vm245, %v3438, 0
    %3451 = vmatprep.subr.mxu0 0.0
    %3452 = vmatpush1.msra.mxu0 0.0
    %3453 = vmatprep.subr.mxu0 0.0
    %3454 = vmatpush1.msra.mxu0 0.0
    %3455 = vmatprep.subr.mxu0 0.0
    %3456 = vmatpush1.msra.mxu0 0.0
    %3457 = vmatprep.subr.mxu0 0.0
    %3458 = vmatpush1.msra.mxu0 0.0
    %3459 = vmatprep.subr.mxu0 0.0
    %3460 = vmatpush1.msra.mxu0 0.0
    %3461 = vmatprep.subr.mxu0 0.0
    %3462 = vmatpush1.msra.mxu0 0.0
    %3463 = vmatprep.subr.mxu0 0.0
    %3464 = vmatpush1.msra.mxu0 0.0
    %3465 = vmatprep.subr.mxu0 0.0
    %3466 = vmatpush1.msra.mxu0 0.0
    %3467 = vmatprep.subr.mxu0 0.0
    %3468 = vmatpush1.msra.mxu0 0.0
    %3469 = vmatprep.subr.mxu0 0.0
    %3470 = vmatpush1.msra.mxu0 0.0
    %3471 = vmatprep.subr.mxu0 0.0
    %3472 = vmatpush1.msra.mxu0 0.0
    %3473 = vmatprep.subr.mxu0 0.0
    %3474 = vmatpush1.msra.mxu0 0.0
    %3475 = vmatprep.subr.mxu0 0.0
    %3476 = vmatpush1.msra.mxu0 0.0
    %3477 = vmatprep.subr.mxu0 0.0
    %3478 = vmatpush1.msra.mxu0 0.0
    %3479 = vmatprep.subr.mxu0 0.0
    %3480 = vmatpush1.msra.mxu0 0.0
    %3481 = vmatprep.subr.mxu0 0.0
    %3482 = vmatpush1.msra.mxu0 %v3443
    %3483 = vmatprep.subr.mxu0 0.0
    %3484 = vmatpush2.msra.mxu0 0.0
    %3485 = vmatprep.subr.mxu0 0.0
    %3486 = vmatpush2.msra.mxu0 0.0
    %3487 = vmatprep.subr.mxu0 0.0
    %3488 = vmatpush2.msra.mxu0 0.0
    %3489 = vmatprep.subr.mxu0 0.0
    %3490 = vmatpush2.msra.mxu0 0.0
    %3491 = vmatprep.subr.mxu0 0.0
    %3492 = vmatpush2.msra.mxu0 0.0
    %3493 = vmatprep.subr.mxu0 0.0
    %3494 = vmatpush2.msra.mxu0 0.0
    %3495 = vmatprep.subr.mxu0 0.0
    %3496 = vmatpush2.msra.mxu0 0.0
    %3497 = vmatprep.subr.mxu0 0.0
    %3498 = vmatpush2.msra.mxu0 0.0
    %3499 = vmatprep.subr.mxu0 0.0
    %3500 = vmatpush2.msra.mxu0 0.0
    %3501 = vmatprep.subr.mxu0 0.0
    %3502 = vmatpush2.msra.mxu0 0.0
    %3503 = vmatprep.subr.mxu0 0.0
    %3504 = vmatpush2.msra.mxu0 0.0
    %3505 = vmatprep.subr.mxu0 0.0
    %3506 = vmatpush2.msra.mxu0 0.0
    %3507 = vmatprep.subr.mxu0 0.0
    %3508 = vmatpush2.msra.mxu0 0.0
    %3509 = vmatprep.subr.mxu0 0.0
    %3510 = vmatpush2.msra.mxu0 0.0
    %3511 = vmatprep.subr.mxu0 0.0
    %3512 = vmatpush2.msra.mxu0 0.0
    %3513 = vmatprep.subr.mxu0 0.0
    %3514 = vmatpush2.msra.mxu0 0.0
    %3515 = vmatprep.mubr.f32.mxu0 0.0
    %3516 = vmatmul.mubr.f32.gmra.mxu0 %v3446
    %v3517 = vpop.f32.mrf.mxu0
    %v3518 = vadd.f32 0.0, %v3517
    %v3519 = vpop.f32.mrf.mxu0
    %3520 = vmatprep.mubr.f32.mxu0 0.0
    %3521 = vmatmul.mubr.f32.gmra.mxu0 %v3449
    %v3522 = vpop.f32.mrf.mxu0
    %v3523 = vadd.f32 0.0, %v3522
    %v3524 = vpop.f32.mrf.mxu0
    %3525 = vdwg.mxu0
    %v3526 = vadd.f32 %v3101, %v3518
    %v3527 = vadd.f32 %v3106, %v3523
    %3528 = vrot.lane.b32.xlu0 %v2269, 104
    %v3529 = vpop.permute.xlu0 %3528
    %3530 = vrot.lane.b32.xlu0 %v2269, 72
    %v3531 = vpop.permute.xlu0 %3530
    %v3532 = vsel %vm245, %v3529, 0
    %v3534 = vsel %vm245, %v3531, 0
    %3536 = vmatprep.subr.mxu0 0.0
    %3537 = vmatpush1.xpose.msra.mxu0 0.0
    %3538 = vmatprep.subr.mxu0 0.0
    %3539 = vmatpush1.xpose.msra.mxu0 0.0
    %3540 = vmatprep.subr.mxu0 0.0
    %3541 = vmatpush1.xpose.msra.mxu0 0.0
    %3542 = vmatprep.subr.mxu0 0.0
    %3543 = vmatpush1.xpose.msra.mxu0 0.0
    %3544 = vmatprep.subr.mxu0 0.0
    %3545 = vmatpush1.xpose.msra.mxu0 0.0
    %3546 = vmatprep.subr.mxu0 0.0
    %3547 = vmatpush1.xpose.msra.mxu0 0.0
    %3548 = vmatprep.subr.mxu0 0.0
    %3549 = vmatpush1.xpose.msra.mxu0 0.0
    %3550 = vmatprep.subr.mxu0 0.0
    %3551 = vmatpush1.xpose.msra.mxu0 0.0
    %3552 = vmatprep.subr.mxu0 0.0
    %3553 = vmatpush1.xpose.msra.mxu0 0.0
    %3554 = vmatprep.subr.mxu0 0.0
    %3555 = vmatpush1.xpose.msra.mxu0 0.0
    %3556 = vmatprep.subr.mxu0 0.0
    %3557 = vmatpush1.xpose.msra.mxu0 0.0
    %3558 = vmatprep.subr.mxu0 0.0
    %3559 = vmatpush1.xpose.msra.mxu0 0.0
    %3560 = vmatprep.subr.mxu0 0.0
    %3561 = vmatpush1.xpose.msra.mxu0 0.0
    %3562 = vmatprep.subr.mxu0 0.0
    %3563 = vmatpush1.xpose.msra.mxu0 0.0
    %3564 = vmatprep.subr.mxu0 0.0
    %3565 = vmatpush1.xpose.msra.mxu0 0.0
    %3566 = vmatprep.subr.mxu0 0.0
    %3567 = vmatpush1.xpose.msra.mxu0 %v3534
    %3568 = vmatprep.subr.mxu0 0.0
    %3569 = vmatpush2.xpose.msra.mxu0 0.0
    %3570 = vmatprep.subr.mxu0 0.0
    %3571 = vmatpush2.xpose.msra.mxu0 0.0
    %3572 = vmatprep.subr.mxu0 0.0
    %3573 = vmatpush2.xpose.msra.mxu0 0.0
    %3574 = vmatprep.subr.mxu0 0.0
    %3575 = vmatpush2.xpose.msra.mxu0 0.0
    %3576 = vmatprep.subr.mxu0 0.0
    %3577 = vmatpush2.xpose.msra.mxu0 0.0
    %3578 = vmatprep.subr.mxu0 0.0
    %3579 = vmatpush2.xpose.msra.mxu0 0.0
    %3580 = vmatprep.subr.mxu0 0.0
    %3581 = vmatpush2.xpose.msra.mxu0 0.0
    %3582 = vmatprep.subr.mxu0 0.0
    %3583 = vmatpush2.xpose.msra.mxu0 0.0
    %3584 = vmatprep.subr.mxu0 0.0
    %3585 = vmatpush2.xpose.msra.mxu0 0.0
    %3586 = vmatprep.subr.mxu0 0.0
    %3587 = vmatpush2.xpose.msra.mxu0 0.0
    %3588 = vmatprep.subr.mxu0 0.0
    %3589 = vmatpush2.xpose.msra.mxu0 0.0
    %3590 = vmatprep.subr.mxu0 0.0
    %3591 = vmatpush2.xpose.msra.mxu0 0.0
    %3592 = vmatprep.subr.mxu0 0.0
    %3593 = vmatpush2.xpose.msra.mxu0 0.0
    %3594 = vmatprep.subr.mxu0 0.0
    %3595 = vmatpush2.xpose.msra.mxu0 0.0
    %3596 = vmatprep.subr.mxu0 0.0
    %3597 = vmatpush2.xpose.msra.mxu0 0.0
    %3598 = vmatprep.subr.mxu0 0.0
    %3599 = vmatpush2.xpose.msra.mxu0 0.0
    %3600 = vmatprep.mubr.f32.mxu0 0.0
    %3601 = vmatmul.mubr.f32.gmra.mxu0 %v3532
    %v3602 = vpop.f32.mrf.mxu0
    %v3603 = vadd.f32 0.0, %v3602
    %v3604 = vpop.f32.mrf.mxu0
    %3605 = vdwg.mxu0
    %3606 = vrot.lane.b32.xlu0 %v2274, 104
    %v3607 = vpop.permute.xlu0 %3606
    %3608 = vrot.lane.b32.xlu0 %v2274, 72
    %v3609 = vpop.permute.xlu0 %3608
    %v3610 = vsel %vm245, %v3607, 0
    %v3612 = vsel %vm245, %v3609, 0
    %3614 = vmatprep.subr.mxu0 0.0
    %3615 = vmatpush1.xpose.msra.mxu0 0.0
    %3616 = vmatprep.subr.mxu0 0.0
    %3617 = vmatpush1.xpose.msra.mxu0 0.0
    %3618 = vmatprep.subr.mxu0 0.0
    %3619 = vmatpush1.xpose.msra.mxu0 0.0
    %3620 = vmatprep.subr.mxu0 0.0
    %3621 = vmatpush1.xpose.msra.mxu0 0.0
    %3622 = vmatprep.subr.mxu0 0.0
    %3623 = vmatpush1.xpose.msra.mxu0 0.0
    %3624 = vmatprep.subr.mxu0 0.0
    %3625 = vmatpush1.xpose.msra.mxu0 0.0
    %3626 = vmatprep.subr.mxu0 0.0
    %3627 = vmatpush1.xpose.msra.mxu0 0.0
    %3628 = vmatprep.subr.mxu0 0.0
    %3629 = vmatpush1.xpose.msra.mxu0 0.0
    %3630 = vmatprep.subr.mxu0 0.0
    %3631 = vmatpush1.xpose.msra.mxu0 0.0
    %3632 = vmatprep.subr.mxu0 0.0
    %3633 = vmatpush1.xpose.msra.mxu0 0.0
    %3634 = vmatprep.subr.mxu0 0.0
    %3635 = vmatpush1.xpose.msra.mxu0 0.0
    %3636 = vmatprep.subr.mxu0 0.0
    %3637 = vmatpush1.xpose.msra.mxu0 0.0
    %3638 = vmatprep.subr.mxu0 0.0
    %3639 = vmatpush1.xpose.msra.mxu0 0.0
    %3640 = vmatprep.subr.mxu0 0.0
    %3641 = vmatpush1.xpose.msra.mxu0 0.0
    %3642 = vmatprep.subr.mxu0 0.0
    %3643 = vmatpush1.xpose.msra.mxu0 0.0
    %3644 = vmatprep.subr.mxu0 0.0
    %3645 = vmatpush1.xpose.msra.mxu0 %v3612
    %3646 = vmatprep.subr.mxu0 0.0
    %3647 = vmatpush2.xpose.msra.mxu0 0.0
    %3648 = vmatprep.subr.mxu0 0.0
    %3649 = vmatpush2.xpose.msra.mxu0 0.0
    %3650 = vmatprep.subr.mxu0 0.0
    %3651 = vmatpush2.xpose.msra.mxu0 0.0
    %3652 = vmatprep.subr.mxu0 0.0
    %3653 = vmatpush2.xpose.msra.mxu0 0.0
    %3654 = vmatprep.subr.mxu0 0.0
    %3655 = vmatpush2.xpose.msra.mxu0 0.0
    %3656 = vmatprep.subr.mxu0 0.0
    %3657 = vmatpush2.xpose.msra.mxu0 0.0
    %3658 = vmatprep.subr.mxu0 0.0
    %3659 = vmatpush2.xpose.msra.mxu0 0.0
    %3660 = vmatprep.subr.mxu0 0.0
    %3661 = vmatpush2.xpose.msra.mxu0 0.0
    %3662 = vmatprep.subr.mxu0 0.0
    %3663 = vmatpush2.xpose.msra.mxu0 0.0
    %3664 = vmatprep.subr.mxu0 0.0
    %3665 = vmatpush2.xpose.msra.mxu0 0.0
    %3666 = vmatprep.subr.mxu0 0.0
    %3667 = vmatpush2.xpose.msra.mxu0 0.0
    %3668 = vmatprep.subr.mxu0 0.0
    %3669 = vmatpush2.xpose.msra.mxu0 0.0
    %3670 = vmatprep.subr.mxu0 0.0
    %3671 = vmatpush2.xpose.msra.mxu0 0.0
    %3672 = vmatprep.subr.mxu0 0.0
    %3673 = vmatpush2.xpose.msra.mxu0 0.0
    %3674 = vmatprep.subr.mxu0 0.0
    %3675 = vmatpush2.xpose.msra.mxu0 0.0
    %3676 = vmatprep.subr.mxu0 0.0
    %3677 = vmatpush2.xpose.msra.mxu0 0.0
    %3678 = vmatprep.mubr.f32.mxu0 0.0
    %3679 = vmatmul.mubr.f32.gmra.mxu0 %v3610
    %v3680 = vpop.f32.mrf.mxu0
    %v3681 = vadd.f32 0.0, %v3680
    %v3682 = vpop.f32.mrf.mxu0
    %3683 = vdwg.mxu0
    %v3684 = vmul.f32 %v3603, 0.35355338
    %v3685 = vmul.f32 %v3681, 0.35355338
    %v3686 = vsel %vm245, %v3684, -inf
    %3687 = vmax.xlane.f32.xlu0 %v3686
    %v3688 = vpop.xlane.xlu0 %3687
    %v3689 = vsel %vm245, %v3685, -inf
    %3690 = vmax.xlane.f32.xlu0 %v3689
    %v3691 = vpop.xlane.xlu0 %3690
    %v3692 = vsub.f32 %v3684, %v3688
    %v3693 = vsub.f32 %v3685, %v3691
    %v3694 = vmul.f32 %v3692, 1.442695
    %v3695 = vpow.pop %v3694
    %v3696 = vmul.f32 %v3693, 1.442695
    %v3697 = vpow.pop %v3696
    %v3698 = vsel %vm245, %v3695, 0.0
    %3699 = vadd.xlane.f32.xlu0 %v3698
    %v3700 = vpop.xlane.xlu0 %3699
    %v3701 = vsel %vm245, %v3697, 0.0
    %3702 = vadd.xlane.f32.xlu0 %v3701
    %v3703 = vpop.xlane.xlu0 %3702
    %v3704 = vrcp.pop %v3700
    %v3705 = vrcp.pop %v3703
    %v3706 = vmul.f32 %v3695, %v3704
    %v3707 = vmul.f32 %v3697, %v3705
    %3708 = vrot.lane.b32.xlu0 %v2269, 40
    %v3709 = vpop.permute.xlu0 %3708
    %v3712 = vsel %vm245, %v3706, 0
    %3714 = vmatprep.subr.mxu0 0.0
    %3715 = vmatpush1.msra.mxu0 0.0
    %3716 = vmatprep.subr.mxu0 0.0
    %3717 = vmatpush1.msra.mxu0 0.0
    %3718 = vmatprep.subr.mxu0 0.0
    %3719 = vmatpush1.msra.mxu0 0.0
    %3720 = vmatprep.subr.mxu0 0.0
    %3721 = vmatpush1.msra.mxu0 0.0
    %3722 = vmatprep.subr.mxu0 0.0
    %3723 = vmatpush1.msra.mxu0 0.0
    %3724 = vmatprep.subr.mxu0 0.0
    %3725 = vmatpush1.msra.mxu0 0.0
    %3726 = vmatprep.subr.mxu0 0.0
    %3727 = vmatpush1.msra.mxu0 0.0
    %3728 = vmatprep.subr.mxu0 0.0
    %3729 = vmatpush1.msra.mxu0 0.0
    %3730 = vmatprep.subr.mxu0 0.0
    %3731 = vmatpush1.msra.mxu0 0.0
    %3732 = vmatprep.subr.mxu0 0.0
    %3733 = vmatpush1.msra.mxu0 0.0
    %3734 = vmatprep.subr.mxu0 0.0
    %3735 = vmatpush1.msra.mxu0 0.0
    %3736 = vmatprep.subr.mxu0 0.0
    %3737 = vmatpush1.msra.mxu0 0.0
    %3738 = vmatprep.subr.mxu0 0.0
    %3739 = vmatpush1.msra.mxu0 0.0
    %3740 = vmatprep.subr.mxu0 0.0
    %3741 = vmatpush1.msra.mxu0 0.0
    %3742 = vmatprep.subr.mxu0 0.0
    %3743 = vmatpush1.msra.mxu0 0.0
    %3744 = vmatprep.subr.mxu0 0.0
    %3745 = vmatpush1.msra.mxu0 %v3709
    %3746 = vmatprep.subr.mxu0 0.0
    %3747 = vmatpush2.msra.mxu0 0.0
    %3748 = vmatprep.subr.mxu0 0.0
    %3749 = vmatpush2.msra.mxu0 0.0
    %3750 = vmatprep.subr.mxu0 0.0
    %3751 = vmatpush2.msra.mxu0 0.0
    %3752 = vmatprep.subr.mxu0 0.0
    %3753 = vmatpush2.msra.mxu0 0.0
    %3754 = vmatprep.subr.mxu0 0.0
    %3755 = vmatpush2.msra.mxu0 0.0
    %3756 = vmatprep.subr.mxu0 0.0
    %3757 = vmatpush2.msra.mxu0 0.0
    %3758 = vmatprep.subr.mxu0 0.0
    %3759 = vmatpush2.msra.mxu0 0.0
    %3760 = vmatprep.subr.mxu0 0.0
    %3761 = vmatpush2.msra.mxu0 0.0
    %3762 = vmatprep.subr.mxu0 0.0
    %3763 = vmatpush2.msra.mxu0 0.0
    %3764 = vmatprep.subr.mxu0 0.0
    %3765 = vmatpush2.msra.mxu0 0.0
    %3766 = vmatprep.subr.mxu0 0.0
    %3767 = vmatpush2.msra.mxu0 0.0
    %3768 = vmatprep.subr.mxu0 0.0
    %3769 = vmatpush2.msra.mxu0 0.0
    %3770 = vmatprep.subr.mxu0 0.0
    %3771 = vmatpush2.msra.mxu0 0.0
    %3772 = vmatprep.subr.mxu0 0.0
    %3773 = vmatpush2.msra.mxu0 0.0
    %3774 = vmatprep.subr.mxu0 0.0
    %3775 = vmatpush2.msra.mxu0 0.0
    %3776 = vmatprep.subr.mxu0 0.0
    %3777 = vmatpush2.msra.mxu0 0.0
    %3778 = vmatprep.mubr.f32.mxu0 0.0
    %3779 = vmatmul.mubr.f32.gmra.mxu0 %v3712
    %v3780 = vpop.f32.mrf.mxu0
    %v3781 = vadd.f32 0.0, %v3780
    %v3782 = vpop.f32.mrf.mxu0
    %3783 = vdwg.mxu0
    %3784 = vrot.lane.b32.xlu0 %v2274, 40
    %v3785 = vpop.permute.xlu0 %3784
    %v3788 = vsel %vm245, %v3707, 0
    %3790 = vmatprep.subr.mxu0 0.0
    %3791 = vmatpush1.msra.mxu0 0.0
    %3792 = vmatprep.subr.mxu0 0.0
    %3793 = vmatpush1.msra.mxu0 0.0
    %3794 = vmatprep.subr.mxu0 0.0
    %3795 = vmatpush1.msra.mxu0 0.0
    %3796 = vmatprep.subr.mxu0 0.0
    %3797 = vmatpush1.msra.mxu0 0.0
    %3798 = vmatprep.subr.mxu0 0.0
    %3799 = vmatpush1.msra.mxu0 0.0
    %3800 = vmatprep.subr.mxu0 0.0
    %3801 = vmatpush1.msra.mxu0 0.0
    %3802 = vmatprep.subr.mxu0 0.0
    %3803 = vmatpush1.msra.mxu0 0.0
    %3804 = vmatprep.subr.mxu0 0.0
    %3805 = vmatpush1.msra.mxu0 0.0
    %3806 = vmatprep.subr.mxu0 0.0
    %3807 = vmatpush1.msra.mxu0 0.0
    %3808 = vmatprep.subr.mxu0 0.0
    %3809 = vmatpush1.msra.mxu0 0.0
    %3810 = vmatprep.subr.mxu0 0.0
    %3811 = vmatpush1.msra.mxu0 0.0
    %3812 = vmatprep.subr.mxu0 0.0
    %3813 = vmatpush1.msra.mxu0 0.0
    %3814 = vmatprep.subr.mxu0 0.0
    %3815 = vmatpush1.msra.mxu0 0.0
    %3816 = vmatprep.subr.mxu0 0.0
    %3817 = vmatpush1.msra.mxu0 0.0
    %3818 = vmatprep.subr.mxu0 0.0
    %3819 = vmatpush1.msra.mxu0 0.0
    %3820 = vmatprep.subr.mxu0 0.0
    %3821 = vmatpush1.msra.mxu0 %v3785
    %3822 = vmatprep.subr.mxu0 0.0
    %3823 = vmatpush2.msra.mxu0 0.0
    %3824 = vmatprep.subr.mxu0 0.0
    %3825 = vmatpush2.msra.mxu0 0.0
    %3826 = vmatprep.subr.mxu0 0.0
    %3827 = vmatpush2.msra.mxu0 0.0
    %3828 = vmatprep.subr.mxu0 0.0
    %3829 = vmatpush2.msra.mxu0 0.0
    %3830 = vmatprep.subr.mxu0 0.0
    %3831 = vmatpush2.msra.mxu0 0.0
    %3832 = vmatprep.subr.mxu0 0.0
    %3833 = vmatpush2.msra.mxu0 0.0
    %3834 = vmatprep.subr.mxu0 0.0
    %3835 = vmatpush2.msra.mxu0 0.0
    %3836 = vmatprep.subr.mxu0 0.0
    %3837 = vmatpush2.msra.mxu0 0.0
    %3838 = vmatprep.subr.mxu0 0.0
    %3839 = vmatpush2.msra.mxu0 0.0
    %3840 = vmatprep.subr.mxu0 0.0
    %3841 = vmatpush2.msra.mxu0 0.0
    %3842 = vmatprep.subr.mxu0 0.0
    %3843 = vmatpush2.msra.mxu0 0.0
    %3844 = vmatprep.subr.mxu0 0.0
    %3845 = vmatpush2.msra.mxu0 0.0
    %3846 = vmatprep.subr.mxu0 0.0
    %3847 = vmatpush2.msra.mxu0 0.0
    %3848 = vmatprep.subr.mxu0 0.0
    %3849 = vmatpush2.msra.mxu0 0.0
    %3850 = vmatprep.subr.mxu0 0.0
    %3851 = vmatpush2.msra.mxu0 0.0
    %3852 = vmatprep.subr.mxu0 0.0
    %3853 = vmatpush2.msra.mxu0 0.0
    %3854 = vmatprep.mubr.f32.mxu0 0.0
    %3855 = vmatmul.mubr.f32.gmra.mxu0 %v3788
    %v3856 = vpop.f32.mrf.mxu0
    %v3857 = vadd.f32 0.0, %v3856
    %v3858 = vpop.f32.mrf.mxu0
    %3859 = vdwg.mxu0
    %3861 = vrot.lane.b32.xlu0 %v2174, 32
    %v3862 = vpop.permute.xlu0 %3861
    %v3865 = vsel %vm245, %v3781, 0
    %v3868 = vsel %vm245, %v3857, 0
    %3870 = vmatprep.subr.mxu0 0.0
    %3871 = vmatpush1.msra.mxu0 0.0
    %3872 = vmatprep.subr.mxu0 0.0
    %3873 = vmatpush1.msra.mxu0 0.0
    %3874 = vmatprep.subr.mxu0 0.0
    %3875 = vmatpush1.msra.mxu0 0.0
    %3876 = vmatprep.subr.mxu0 0.0
    %3877 = vmatpush1.msra.mxu0 0.0
    %3878 = vmatprep.subr.mxu0 0.0
    %3879 = vmatpush1.msra.mxu0 0.0
    %3880 = vmatprep.subr.mxu0 0.0
    %3881 = vmatpush1.msra.mxu0 0.0
    %3882 = vmatprep.subr.mxu0 0.0
    %3883 = vmatpush1.msra.mxu0 0.0
    %3884 = vmatprep.subr.mxu0 0.0
    %3885 = vmatpush1.msra.mxu0 0.0
    %3886 = vmatprep.subr.mxu0 0.0
    %3887 = vmatpush1.msra.mxu0 0.0
    %3888 = vmatprep.subr.mxu0 0.0
    %3889 = vmatpush1.msra.mxu0 0.0
    %3890 = vmatprep.subr.mxu0 0.0
    %3891 = vmatpush1.msra.mxu0 0.0
    %3892 = vmatprep.subr.mxu0 0.0
    %3893 = vmatpush1.msra.mxu0 0.0
    %3894 = vmatprep.subr.mxu0 0.0
    %3895 = vmatpush1.msra.mxu0 0.0
    %3896 = vmatprep.subr.mxu0 0.0
    %3897 = vmatpush1.msra.mxu0 0.0
    %3898 = vmatprep.subr.mxu0 0.0
    %3899 = vmatpush1.msra.mxu0 0.0
    %3900 = vmatprep.subr.mxu0 0.0
    %3901 = vmatpush1.msra.mxu0 %v3862
    %3902 = vmatprep.subr.mxu0 0.0
    %3903 = vmatpush2.msra.mxu0 0.0
    %3904 = vmatprep.subr.mxu0 0.0
    %3905 = vmatpush2.msra.mxu0 0.0
    %3906 = vmatprep.subr.mxu0 0.0
    %3907 = vmatpush2.msra.mxu0 0.0
    %3908 = vmatprep.subr.mxu0 0.0
    %3909 = vmatpush2.msra.mxu0 0.0
    %3910 = vmatprep.subr.mxu0 0.0
    %3911 = vmatpush2.msra.mxu0 0.0
    %3912 = vmatprep.subr.mxu0 0.0
    %3913 = vmatpush2.msra.mxu0 0.0
    %3914 = vmatprep.subr.mxu0 0.0
    %3915 = vmatpush2.msra.mxu0 0.0
    %3916 = vmatprep.subr.mxu0 0.0
    %3917 = vmatpush2.msra.mxu0 0.0
    %3918 = vmatprep.subr.mxu0 0.0
    %3919 = vmatpush2.msra.mxu0 0.0
    %3920 = vmatprep.subr.mxu0 0.0
    %3921 = vmatpush2.msra.mxu0 0.0
    %3922 = vmatprep.subr.mxu0 0.0
    %3923 = vmatpush2.msra.mxu0 0.0
    %3924 = vmatprep.subr.mxu0 0.0
    %3925 = vmatpush2.msra.mxu0 0.0
    %3926 = vmatprep.subr.mxu0 0.0
    %3927 = vmatpush2.msra.mxu0 0.0
    %3928 = vmatprep.subr.mxu0 0.0
    %3929 = vmatpush2.msra.mxu0 0.0
    %3930 = vmatprep.subr.mxu0 0.0
    %3931 = vmatpush2.msra.mxu0 0.0
    %3932 = vmatprep.subr.mxu0 0.0
    %3933 = vmatpush2.msra.mxu0 0.0
    %3934 = vmatprep.mubr.f32.mxu0 0.0
    %3935 = vmatmul.mubr.f32.gmra.mxu0 %v3865
    %v3936 = vpop.f32.mrf.mxu0
    %v3937 = vadd.f32 0.0, %v3936
    %v3938 = vpop.f32.mrf.mxu0
    %3939 = vmatprep.mubr.f32.mxu0 0.0
    %3940 = vmatmul.mubr.f32.gmra.mxu0 %v3868
    %v3941 = vpop.f32.mrf.mxu0
    %v3942 = vadd.f32 0.0, %v3941
    %v3943 = vpop.f32.mrf.mxu0
    %3944 = vdwg.mxu0
    %v3945 = vadd.f32 %v3526, %v3937
    %v3946 = vadd.f32 %v3527, %v3942
    %3948 = vrot.lane.b32.xlu0 %v2176, 32
    %v3949 = vpop.permute.xlu0 %3948
    %v3951 = vadd.f32 %v3945, %v3949
    %v3952 = vadd.f32 %v3946, %v3949
    %v3953 = vadd.f32 %v2164, %v3951
    %v3954 = vadd.f32 %v2165, %v3952
    %v3955 = vsel %vm160, %v3953, 0.0
    %3956 = vadd.xlane.f32.xlu0 %v3955
    %v3957 = vpop.xlane.xlu0 %3956
    %v3958 = vsel %vm160, %v3954, 0.0
    %3959 = vadd.xlane.f32.xlu0 %v3958
    %v3960 = vpop.xlane.xlu0 %3959
    %v3961 = vmul.f32 %v3957, %v1941
    %v3962 = vmul.f32 %v3960, %v1941
    %v3963 = vsub.f32 %v3953, %v3961
    %v3964 = vsub.f32 %v3954, %v3962
    %v3965 = vmul.f32 %v3963, %v3963
    %v3966 = vmul.f32 %v3964, %v3964
    %v3967 = vsel %vm160, %v3965, 0.0
    %3968 = vadd.xlane.f32.xlu0 %v3967
    %v3969 = vpop.xlane.xlu0 %3968
    %v3970 = vsel %vm160, %v3966, 0.0
    %3971 = vadd.xlane.f32.xlu0 %v3970
    %v3972 = vpop.xlane.xlu0 %3971
    %v3973 = vmul.f32 %v3969, %v1941
    %v3974 = vmul.f32 %v3972, %v1941
    %v3975 = vadd.f32 %v3973, 1e-05
    %v3976 = vadd.f32 %v3974, 1e-05
    %v3977 = vrsqrt.pop %v3975
    %v3978 = vrsqrt.pop %v3976
    %v3979 = vmul.f32 %v3963, %v3977
    %v3980 = vmul.f32 %v3964, %v3978
    %v3981 = vmul.f32 %v3979, %v2177
    %v3982 = vmul.f32 %v3980, %v2177
    %3984 = vrot.lane.b32.xlu0 %v2177, 96
    %v3985 = vpop.permute.xlu0 %3984
    %v3987 = vadd.f32 %v3981, %v3985
    %v3988 = vadd.f32 %v3982, %v3985
    %v3990 = vsel %vm160, %v3987, 0
    %v3993 = vsel %vm160, %v3988, 0
    %3995 = vmatprep.subr.mxu0 0.0
    %3996 = vmatpush1.msra.mxu0 0.0
    %3997 = vmatprep.subr.mxu0 0.0
    %3998 = vmatpush1.msra.mxu0 0.0
    %3999 = vmatprep.subr.mxu0 0.0
    %4000 = vmatpush1.msra.mxu0 0.0
    %4001 = vmatprep.subr.mxu0 0.0
    %4002 = vmatpush1.msra.mxu0 0.0
    %4003 = vmatprep.subr.mxu0 0.0
    %4004 = vmatpush1.msra.mxu0 0.0
    %4005 = vmatprep.subr.mxu0 0.0
    %4006 = vmatpush1.msra.mxu0 0.0
    %4007 = vmatprep.subr.mxu0 0.0
    %4008 = vmatpush1.msra.mxu0 0.0
    %4009 = vmatprep.subr.mxu0 0.0
    %4010 = vmatpush1.msra.mxu0 0.0
    %4011 = vmatprep.subr.mxu0 0.0
    %4012 = vmatpush1.msra.mxu0 0.0
    %4013 = vmatprep.subr.mxu0 0.0
    %4014 = vmatpush1.msra.mxu0 0.0
    %4015 = vmatprep.subr.mxu0 0.0
    %4016 = vmatpush1.msra.mxu0 0.0
    %4017 = vmatprep.subr.mxu0 0.0
    %4018 = vmatpush1.msra.mxu0 0.0
    %4019 = vmatprep.subr.mxu0 0.0
    %4020 = vmatpush1.msra.mxu0 %v2170
    %4021 = vmatprep.subr.mxu0 0.0
    %4022 = vmatpush1.msra.mxu0 %v2169
    %4023 = vmatprep.subr.mxu0 0.0
    %4024 = vmatpush1.msra.mxu0 %v2168
    %4025 = vmatprep.subr.mxu0 0.0
    %4026 = vmatpush1.msra.mxu0 %v2167
    %4027 = vmatprep.subr.mxu0 0.0
    %4028 = vmatpush2.msra.mxu0 0.0
    %4029 = vmatprep.subr.mxu0 0.0
    %4030 = vmatpush2.msra.mxu0 0.0
    %4031 = vmatprep.subr.mxu0 0.0
    %4032 = vmatpush2.msra.mxu0 0.0
    %4033 = vmatprep.subr.mxu0 0.0
    %4034 = vmatpush2.msra.mxu0 0.0
    %4035 = vmatprep.subr.mxu0 0.0
    %4036 = vmatpush2.msra.mxu0 0.0
    %4037 = vmatprep.subr.mxu0 0.0
    %4038 = vmatpush2.msra.mxu0 0.0
    %4039 = vmatprep.subr.mxu0 0.0
    %4040 = vmatpush2.msra.mxu0 0.0
    %4041 = vmatprep.subr.mxu0 0.0
    %4042 = vmatpush2.msra.mxu0 0.0
    %4043 = vmatprep.subr.mxu0 0.0
    %4044 = vmatpush2.msra.mxu0 0.0
    %4045 = vmatprep.subr.mxu0 0.0
    %4046 = vmatpush2.msra.mxu0 0.0
    %4047 = vmatprep.subr.mxu0 0.0
    %4048 = vmatpush2.msra.mxu0 0.0
    %4049 = vmatprep.subr.mxu0 0.0
    %4050 = vmatpush2.msra.mxu0 0.0
    %4051 = vmatprep.subr.mxu0 0.0
    %4052 = vmatpush2.msra.mxu0 0.0
    %4053 = vmatprep.subr.mxu0 0.0
    %4054 = vmatpush2.msra.mxu0 0.0
    %4055 = vmatprep.subr.mxu0 0.0
    %4056 = vmatpush2.msra.mxu0 0.0
    %4057 = vmatprep.subr.mxu0 0.0
    %4058 = vmatpush2.msra.mxu0 0.0
    %4059 = vmatprep.mubr.f32.mxu0 0.0
    %4060 = vmatmul.mubr.f32.gmra.mxu0 %v3990
    %v4061 = vpop.f32.mrf.mxu0
    %v4062 = vadd.f32 %v2175, %v4061
    %v4063 = vpop.f32.mrf.mxu0
    %4064 = vmatprep.mubr.f32.mxu0 0.0
    %4065 = vmatmul.mubr.f32.gmra.mxu0 %v3993
    %v4066 = vpop.f32.mrf.mxu0
    %v4067 = vadd.f32 %v2175, %v4066
    %v4068 = vpop.f32.mrf.mxu0
    %4069 = vdwg.mxu0
    %v4070 = vmax.f32 %v4062, 0.0
    %v4071 = vmax.f32 %v4067, 0.0
    %4072 = vmatprep.subr.mxu0 0.0
    %4073 = vmatpush1.msra.mxu0 %v2195
    %4074 = vmatprep.subr.mxu0 0.0
    %4075 = vmatpush1.msra.mxu0 %v2194
    %4076 = vmatprep.subr.mxu0 0.0
    %4077 = vmatpush1.msra.mxu0 %v2193
    %4078 = vmatprep.subr.mxu0 0.0
    %4079 = vmatpush1.msra.mxu0 %v2192
    %4080 = vmatprep.subr.mxu0 0.0
    %4081 = vmatpush1.msra.mxu0 %v2191
    %4082 = vmatprep.subr.mxu0 0.0
    %4083 = vmatpush1.msra.mxu0 %v2190
    %4084 = vmatprep.subr.mxu0 0.0
    %4085 = vmatpush1.msra.mxu0 %v2189
    %4086 = vmatprep.subr.mxu0 0.0
    %4087 = vmatpush1.msra.mxu0 %v2188
    %4088 = vmatprep.subr.mxu0 0.0
    %4089 = vmatpush1.msra.mxu0 %v2187
    %4090 = vmatprep.subr.mxu0 0.0
    %4091 = vmatpush1.msra.mxu0 %v2186
    %4092 = vmatprep.subr.mxu0 0.0
    %4093 = vmatpush1.msra.mxu0 %v2185
    %4094 = vmatprep.subr.mxu0 0.0
    %4095 = vmatpush1.msra.mxu0 %v2184
    %4096 = vmatprep.subr.mxu0 0.0
    %4097 = vmatpush1.msra.mxu0 %v2183
    %4098 = vmatprep.subr.mxu0 0.0
    %4099 = vmatpush1.msra.mxu0 %v2182
    %4100 = vmatprep.subr.mxu0 0.0
    %4101 = vmatpush1.msra.mxu0 %v2181
    %4102 = vmatprep.subr.mxu0 0.0
    %4103 = vmatpush1.msra.mxu0 %v2180
    %4104 = vmatprep.subr.mxu0 0.0
    %4105 = vmatpush2.msra.mxu0 0.0
    %4106 = vmatprep.subr.mxu0 0.0
    %4107 = vmatpush2.msra.mxu0 0.0
    %4108 = vmatprep.subr.mxu0 0.0
    %4109 = vmatpush2.msra.mxu0 0.0
    %4110 = vmatprep.subr.mxu0 0.0
    %4111 = vmatpush2.msra.mxu0 0.0
    %4112 = vmatprep.subr.mxu0 0.0
    %4113 = vmatpush2.msra.mxu0 0.0
    %4114 = vmatprep.subr.mxu0 0.0
    %4115 = vmatpush2.msra.mxu0 0.0
    %4116 = vmatprep.subr.mxu0 0.0
    %4117 = vmatpush2.msra.mxu0 0.0
    %4118 = vmatprep.subr.mxu0 0.0
    %4119 = vmatpush2.msra.mxu0 0.0
    %4120 = vmatprep.subr.mxu0 0.0
    %4121 = vmatpush2.msra.mxu0 0.0
    %4122 = vmatprep.subr.mxu0 0.0
    %4123 = vmatpush2.msra.mxu0 0.0
    %4124 = vmatprep.subr.mxu0 0.0
    %4125 = vmatpush2.msra.mxu0 0.0
    %4126 = vmatprep.subr.mxu0 0.0
    %4127 = vmatpush2.msra.mxu0 0.0
    %4128 = vmatprep.subr.mxu0 0.0
    %4129 = vmatpush2.msra.mxu0 0.0
    %4130 = vmatprep.subr.mxu0 0.0
    %4131 = vmatpush2.msra.mxu0 0.0
    %4132 = vmatprep.subr.mxu0 0.0
    %4133 = vmatpush2.msra.mxu0 0.0
    %4134 = vmatprep.subr.mxu0 0.0
    %4135 = vmatpush2.msra.mxu0 0.0
    %4136 = vmatprep.mubr.f32.mxu0 0.0
    %4137 = vmatmul.mubr.f32.gmra.mxu0 %v4070
    %v4138 = vpop.f32.mrf.mxu0
    %v4139 = vadd.f32 %v2178, %v4138
    %v4140 = vpop.f32.mrf.mxu0
    %4141 = vmatprep.mubr.f32.mxu0 0.0
    %4142 = vmatmul.mubr.f32.gmra.mxu0 %v4071
    %v4143 = vpop.f32.mrf.mxu0
    %v4144 = vadd.f32 %v2178, %v4143
    %v4145 = vpop.f32.mrf.mxu0
    %4146 = vdwg.mxu0
    %v4147 = vadd.f32 %v3987, %v4139
    %v4148 = vadd.f32 %v3988, %v4144
    %v4149 = vsel %vm160, %v4147, 0.0
    %4150 = vadd.xlane.f32.xlu0 %v4149
    %v4151 = vpop.xlane.xlu0 %4150
    %v4152 = vsel %vm160, %v4148, 0.0
    %4153 = vadd.xlane.f32.xlu0 %v4152
    %v4154 = vpop.xlane.xlu0 %4153
    %v4155 = vmul.f32 %v4151, %v1941
    %v4156 = vmul.f32 %v4154, %v1941
    %v4157 = vsub.f32 %v4147, %v4155
    %v4158 = vsub.f32 %v4148, %v4156
    %v4159 = vmul.f32 %v4157, %v4157
    %v4160 = vmul.f32 %v4158, %v4158
    %v4161 = vsel %vm160, %v4159, 0.0
    %4162 = vadd.xlane.f32.xlu0 %v4161
    %v4163 = vpop.xlane.xlu0 %4162
    %v4164 = vsel %vm160, %v4160, 0.0
    %4165 = vadd.xlane.f32.xlu0 %v4164
    %v4166 = vpop.xlane.xlu0 %4165
    %v4167 = vmul.f32 %v4163, %v1941
    %v4168 = vmul.f32 %v4166, %v1941
    %v4169 = vadd.f32 %v4167, 1e-05
    %v4170 = vadd.f32 %v4168, 1e-05
    %v4171 = vrsqrt.pop %v4169
    %v4172 = vrsqrt.pop %v4170
    %v4173 = vmul.f32 %v4157, %v4171
    %v4174 = vmul.f32 %v4158, %v4172
    %4175 = vrot.lane.b32.xlu0 %v2177, 64
    %v4176 = vpop.permute.xlu0 %4175
    %v4178 = vmul.f32 %v4173, %v4176
    %v4179 = vmul.f32 %v4174, %v4176
    %4180 = vrot.lane.b32.xlu0 %v2177, 32
    %v4181 = vpop.permute.xlu0 %4180
    %v4183 = vadd.f32 %v4178, %v4181
    %v4184 = vadd.f32 %v4179, %v4181
    %4185 = vst.msk [vmem:[#allocation2] sm:$0xff] %vm160, %v4183
    %4186 = vst.msk [vmem:[#allocation2 + $0x8] sm:$0xff] %vm160, %v4184
    // Predicated region
    $region22: #{transformer_encoder.1} parent=1 // pred_check
      _
    $region23: #{transformer_encoder.1} parent=1 // pred_check_branch
      %4188 = sbr.rel (0) target = $region25
    $region24: #{transformer_encoder.1} parent=1 // pred_region
      %s4190 = ssub.s32 256, 256
      %4191 = vsyncadd [#allocation3], %s4190
      %s4192 = sshll.u32 [#allocation2], 4
      %s4193 = int_to_ptr.vmem [resolvable:$true] %s4192
      %4198 = dma.vmem_to_hbm [thread:$0]  %s4193, 256, %s5, [#allocation3], 128, 128, 8
    $region25: #{transformer_encoder.1} parent=1 // pred_fallthru
      _
    // Predicated region
    $region26: #{transformer_encoder.1} parent=1 // pred_check
      _
    $region27: #{transformer_encoder.1} parent=1 // pred_check_branch
      %4200 = sbr.rel (0) target = $region29
    $region28: #{transformer_encoder.1} parent=1 // pred_region
      %4201 = dma.done [#allocation3], 256
    $region29: #{transformer_encoder.1} parent=1 // pred_fallthru
      _
    %4202 = vsyncpa [#allocation3], 1

</llo_original>
